<compile_context>
chip_gen: v5e
topology: v5e:2x2
jax: 0.10.0
libtpu: 0.0.40
codegen_flags: <defaults>
</compile_context>

<pallas_src>
import jax
import jax.numpy as jnp
from jax.experimental import pallas as pl
from jax.experimental.pallas import tpu as pltpu

HIDDEN1 = 512        # width of the first hidden layer (per net)
NEG_SLOPE = 0.01     # PyTorch nn.LeakyReLU default negative_slope


def _leaky_relu(x):
    return jnp.where(x > 0, x, NEG_SLOPE * x)


def critic_kernel(sa_ref, w1_ref, b1_ref,
                  w2_ref, b2_ref, w3_ref, b3_ref, w4_ref, b4_ref,
                  w5_ref, b5_ref,
                  q_ref, h_scratch):
    j = pl.program_id(1)   # which critic net (0 or 1)

    # Fused layer 1 of BOTH nets, computed once per batch tile (at j == 0)
    # into VMEM scratch; net j's half is reused at j == 1 while net-2's tail
    # weights were prefetched behind net-1's tail compute.
    @pl.when(j == 0)
    def _():
        sa = sa_ref[...].astype(jnp.bfloat16)
        h = jnp.dot(sa, w1_ref[...], preferred_element_type=jnp.float32)
        h = _leaky_relu(h + b1_ref[...])           # (TB, 1024) f32 on the VPU
        h_scratch[0] = h[:, :HIDDEN1]
        h_scratch[1] = h[:, HIDDEN1:]

    x = h_scratch[j]                               # (TB, 512) f32
    x = _leaky_relu(jnp.dot(x.astype(jnp.bfloat16), w2_ref[0],
                            preferred_element_type=jnp.float32) + b2_ref[0])
    x = _leaky_relu(jnp.dot(x.astype(jnp.bfloat16), w3_ref[0],
                            preferred_element_type=jnp.float32) + b3_ref[0])
    x = _leaky_relu(jnp.dot(x.astype(jnp.bfloat16), w4_ref[0],
                            preferred_element_type=jnp.float32) + b4_ref[0])

    # Final 256 -> 1: VPU multiply + lane reduction (skip a 1-lane MXU pass).
    w5 = w5_ref[0].astype(jnp.float32)             # (1, 256)
    q = jnp.sum(x * w5, axis=-1, keepdims=True) + b5_ref[0]   # (TB, 1)

    # Output block stays resident across the net axis; fill column j, the
    # writeback DMA happens once per batch tile after both nets are done.
    @pl.when(j == 0)
    def _():
        q_ref[:, 0:1] = q

    @pl.when(j == 1)
    def _():
        q_ref[:, 1:2] = q


def init_mlp_params(key, dims):
    """Deterministic PyTorch-style init: U(-1/sqrt(fan_in), 1/sqrt(fan_in))."""
    params = []
    for i in range(len(dims) - 1):
        key, kw, kb = jax.random.split(key, 3)
        fan_in = dims[i]
        bound = 1.0 / float(fan_in) ** 0.5
        w = jax.random.uniform(kw, (dims[i], dims[i + 1]), jnp.float32,
                               minval=-bound, maxval=bound)
        b = jax.random.uniform(kb, (1, dims[i + 1]), jnp.float32,
                               minval=-bound, maxval=bound)
        params += [w, b]
    return params, key


def pack_critic_params(net1_params, net2_params, weight_dtype=jnp.bfloat16):
    """Pack the two nets' f32 params into the kernel-friendly layout.

    Returns (10 arrays):
      w1  (S+A, 1024) bf16   fused layer-1 weight of both nets
      b1  (1, 1024)   f32
      w2s (2,512,512) bf16   b2s (2,1,512) f32
      w3s (2,512,512) bf16   b3s (2,1,512) f32
      w4s (2,512,256) bf16   b4s (2,1,256) f32
      w5s (2,1,256)   bf16   b5s (2,1,1)   f32
    """
    w1 = jnp.concatenate([net1_params[0], net2_params[0]], axis=1)
    w1 = w1.astype(weight_dtype)
    b1 = jnp.concatenate([net1_params[1], net2_params[1]], axis=1)
    b1 = b1.astype(jnp.float32)

    def stack(idx, transpose=False, dtype=weight_dtype):
        a, b = net1_params[idx], net2_params[idx]
        if transpose:
            a, b = a.T, b.T
        return jnp.stack([a, b], axis=0).astype(dtype)

    return [
        w1, b1,
        stack(2), stack(3, dtype=jnp.float32),                  # layer 2
        stack(4), stack(5, dtype=jnp.float32),                  # layer 3
        stack(6), stack(7, dtype=jnp.float32),                  # layer 4
        stack(8, transpose=True), stack(9, dtype=jnp.float32),  # layer 5
    ]


def _pick_batch_tile(B):
    """Batch tile per chip generation (larger tiles on v6e/v7x; 2 TCs on v7x)."""
    kind = ""
    try:
        kind = jax.devices()[0].device_kind.lower()
    except Exception:
        pass
    big = 256 if "v5" in kind else 512      # v5e is MXU-bound already at 256
    if B > big:
        return big
    if "v7" in kind and B > 16:
        # v7x has 2 TensorCores: give the "parallel" batch axis >= 2 steps.
        tb = ((-(-B // 2) + 7) // 8) * 8    # round_up(ceil(B/2), 8)
        if 8 <= tb < B:
            return tb
    return B                                 # block == full array dims is legal


def critic_forward(state, action, packed_params):
    """Returns (q1, q2), each (B, 1) float32."""
    state = state.astype(jnp.float32)
    action = action.astype(jnp.float32)
    B = state.shape[0]
    sa = jnp.concatenate([state, action], axis=1)   # one K-pass for layer 1
    SA = sa.shape[1]

    TB = _pick_batch_tile(B)
    grid = (pl.cdiv(B, TB), 2)   # (batch tiles [parallel], critic net [arbitrary])

    def bcast_spec(p):           # shared / fused weights: VMEM-resident
        return pl.BlockSpec(p.shape, lambda i, j: (0,) * p.ndim)

    def net_spec(p):             # per-net stacked weights: prefetched along j
        return pl.BlockSpec((1,) + p.shape[1:], lambda i, j: (j, 0, 0))

    w1, b1 = packed_params[0], packed_params[1]
    in_specs = [pl.BlockSpec((TB, SA), lambda i, j: (i, 0)),
                bcast_spec(w1), bcast_spec(b1)]
    in_specs += [net_spec(p) for p in packed_params[2:]]
    out_spec = pl.BlockSpec((TB, 2), lambda i, j: (i, 0))

    q = pl.pallas_call(
        critic_kernel,
        out_shape=jax.ShapeDtypeStruct((B, 2), jnp.float32),
        grid=grid,
        in_specs=in_specs,
        out_specs=out_spec,
        scratch_shapes=[pltpu.VMEM((2, TB, HIDDEN1), jnp.float32)],
        compiler_params=pltpu.CompilerParams(
            dimension_semantics=("parallel", "arbitrary"),
            vmem_limit_bytes=32 * 1024 * 1024,
        ),
    )(sa, *packed_params)

    # TODO(synk): for repeated inference with frozen weights, pin the packed
    # bf16 weights in VMEM across calls (cross-pallas_call future, P10) instead
    # of re-DMAing ~2.6 MiB per invocation.
    return q[:, 0:1], q[:, 1:2]


def critic_reference(state, action, packed_params):
    """Pure-JAX reference computing exactly the same (bf16-weight) math."""
    sa = jnp.concatenate([state.astype(jnp.float32),
                          action.astype(jnp.float32)], axis=1)
    w1, b1 = packed_params[0], packed_params[1]
    h = _leaky_relu(jnp.dot(sa.astype(jnp.bfloat16), w1,
                            preferred_element_type=jnp.float32) + b1)

    def tail(x, j):
        w2, b2, w3, b3, w4, b4, w5, b5 = [p[j] for p in packed_params[2:]]
        x = _leaky_relu(jnp.dot(x.astype(jnp.bfloat16), w2,
                                preferred_element_type=jnp.float32) + b2)
        x = _leaky_relu(jnp.dot(x.astype(jnp.bfloat16), w3,
                                preferred_element_type=jnp.float32) + b3)
        x = _leaky_relu(jnp.dot(x.astype(jnp.bfloat16), w4,
                                preferred_element_type=jnp.float32) + b4)
        return jnp.sum(x * w5.astype(jnp.float32), axis=-1, keepdims=True) + b5

    return tail(h[:, :HIDDEN1], 0), tail(h[:, HIDDEN1:], 1)


if __name__ == "__main__":
    # Small, deterministic example shapes consistent with the module.
    batch = 2
    state_dim = 8
    action_dim = 4

    key = jax.random.PRNGKey(0)
    key, ks, ka = jax.random.split(key, 3)
    state = jax.random.normal(ks, (batch, state_dim), jnp.float32)
    action = jax.random.normal(ka, (batch, action_dim), jnp.float32)

    dims = [state_dim + action_dim, 512, 512, 512, 256, 1]
    net1_params, key = init_mlp_params(key, dims)
    net2_params, key = init_mlp_params(key, dims)
    packed = pack_critic_params(net1_params, net2_params)

    q1, q2 = critic_forward(state, action, packed)
    jax.block_until_ready((q1, q2))

    r1, r2 = critic_reference(state, action, packed)
    assert q1.shape == (batch, 1) and q2.shape == (batch, 1)
    assert jnp.allclose(q1, r1, atol=2e-3, rtol=2e-3)
    assert jnp.allclose(q2, r2, atol=2e-3, rtol=2e-3)

    # Ragged multi-tile batch: exercises the pipelined net axis, batch tiling
    # and masked writeback of the final partial tile.
    key, ksb, kab = jax.random.split(key, 3)
    big_b = 600
    sb = jax.random.normal(ksb, (big_b, state_dim), jnp.float32)
    ab = jax.random.normal(kab, (big_b, action_dim), jnp.float32)
    Q1, Q2 = critic_forward(sb, ab, packed)
    jax.block_until_ready((Q1, Q2))
    R1, R2 = critic_reference(sb, ab, packed)
    assert Q1.shape == (big_b, 1) and Q2.shape == (big_b, 1)
    assert jnp.allclose(Q1, R1, atol=2e-3, rtol=2e-3)
    assert jnp.allclose(Q2, R2, atol=2e-3, rtol=2e-3)

    print("KERNEL_OK")
</pallas_src>

<mosaic_0001>
module attributes {stable_mosaic.version = 11 : i64} {
  func.func @critic_kernel(%arg0: i32, %arg1: i32, %arg2: memref<2x12xf32, #tpu.memory_space<vmem>>, %arg3: memref<12x1024xbf16, #tpu.memory_space<vmem>>, %arg4: memref<1x1024xf32, #tpu.memory_space<vmem>>, %arg5: memref<1x512x512xbf16, #tpu.memory_space<vmem>>, %arg6: memref<1x1x512xf32, #tpu.memory_space<vmem>>, %arg7: memref<1x512x512xbf16, #tpu.memory_space<vmem>>, %arg8: memref<1x1x512xf32, #tpu.memory_space<vmem>>, %arg9: memref<1x512x256xbf16, #tpu.memory_space<vmem>>, %arg10: memref<1x1x256xf32, #tpu.memory_space<vmem>>, %arg11: memref<1x1x256xbf16, #tpu.memory_space<vmem>>, %arg12: memref<1x1x1xf32, #tpu.memory_space<vmem>>, %arg13: memref<2x2xf32, #tpu.memory_space<vmem>>, %arg14: memref<2x2x512xf32, #tpu.memory_space<vmem>>) attributes {dimension_semantics = [#tpu.dimension_semantics<parallel>, #tpu.dimension_semantics<arbitrary>], iteration_bounds = array<i64: 1, 2>, scalar_prefetch = 0 : i64, scratch_operands = 1 : i64, tpu.core_type = #tpu.core_type<tc>, window_params = [{transform_indices = @transform_0, window_bounds = array<i64: 2, 12>}, {pipeline_mode = #tpu.pipeline_mode<synchronous>, transform_indices = @transform_1, window_bounds = array<i64: 12, 1024>}, {pipeline_mode = #tpu.pipeline_mode<synchronous>, transform_indices = @transform_2, window_bounds = array<i64: 1, 1024>}, {transform_indices = @transform_3, window_bounds = array<i64: 1, 512, 512>}, {transform_indices = @transform_4, window_bounds = array<i64: 1, 1, 512>}, {transform_indices = @transform_5, window_bounds = array<i64: 1, 512, 512>}, {transform_indices = @transform_6, window_bounds = array<i64: 1, 1, 512>}, {transform_indices = @transform_7, window_bounds = array<i64: 1, 512, 256>}, {transform_indices = @transform_8, window_bounds = array<i64: 1, 1, 256>}, {transform_indices = @transform_9, window_bounds = array<i64: 1, 1, 256>}, {transform_indices = @transform_10, window_bounds = array<i64: 1, 1, 1>}, {transform_indices = @transform_11, window_bounds = array<i64: 2, 2>}]} {
    %c0_i32 = arith.constant 0 : i32
    %0 = arith.cmpi eq, %arg1, %c0_i32 : i32
    %1 = arith.extui %0 : i1 to i32
    %c0_i32_0 = arith.constant 0 : i32
    %2 = arith.cmpi ne, %1, %c0_i32_0 : i32
    scf.if %2 {
      %c0_38 = arith.constant 0 : index
      %c0_39 = arith.constant 0 : index
      %62 = vector.load %arg2[%c0_38, %c0_39] : memref<2x12xf32, #tpu.memory_space<vmem>>, vector<2x12xf32>
      %63 = arith.truncf %62 : vector<2x12xf32> to vector<2x12xbf16>
      %c0_40 = arith.constant 0 : index
      %c0_41 = arith.constant 0 : index
      %64 = vector.load %arg3[%c0_40, %c0_41] : memref<12x1024xbf16, #tpu.memory_space<vmem>>, vector<12x1024xbf16>
      %cst_42 = arith.constant dense<0.000000e+00> : vector<2x1024xf32>
      %65 = tpu.matmul %63, %64, %cst_42 {dimension_numbers = #tpu.dot_dimension_numbers<[1], [0], [0], [1], [0, 0, 1, 1], [], []>} : vector<2x12xbf16>, vector<12x1024xbf16>, vector<2x1024xf32> -> vector<2x1024xf32>
      %c0_43 = arith.constant 0 : index
      %c0_44 = arith.constant 0 : index
      %66 = vector.load %arg4[%c0_43, %c0_44] : memref<1x1024xf32, #tpu.memory_space<vmem>>, vector<1x1024xf32>
      %67 = vector.broadcast %66 : vector<1x1024xf32> to vector<2x1024xf32>
      %68 = arith.addf %65, %67 : vector<2x1024xf32>
      %cst_45 = arith.constant 0.000000e+00 : f32
      %69 = vector.broadcast %cst_45 : f32 to vector<2x1024xf32>
      %70 = arith.cmpf ogt, %68, %69 : vector<2x1024xf32>
      %cst_46 = arith.constant 0.00999999977 : f32
      %71 = vector.broadcast %cst_46 : f32 to vector<2x1024xf32>
      %72 = arith.mulf %71, %68 : vector<2x1024xf32>
      %73 = arith.select %70, %68, %72 : vector<2x1024xi1>, vector<2x1024xf32>
      %74 = vector.extract_strided_slice %73 {offsets = [0, 0], sizes = [2, 512], strides = [1, 1]} : vector<2x1024xf32> to vector<2x512xf32>
      %c0_47 = arith.constant 0 : index
      %c0_48 = arith.constant 0 : index
      %c0_49 = arith.constant 0 : index
      %75 = vector.load %arg14[%c0_47, %c0_48, %c0_49] : memref<2x2x512xf32, #tpu.memory_space<vmem>>, vector<1x2x512xf32>
      %76 = vector.shape_cast %75 : vector<1x2x512xf32> to vector<2x512xf32>
      %77 = vector.shape_cast %74 : vector<2x512xf32> to vector<1x2x512xf32>
      tpu.vector_store %arg14[%c0_47, %c0_48, %c0_49], %77 {strides = array<i32>} : memref<2x2x512xf32, #tpu.memory_space<vmem>>, vector<1x2x512xf32>,
      %78 = vector.extract_strided_slice %73 {offsets = [0, 512], sizes = [2, 512], strides = [1, 1]} : vector<2x1024xf32> to vector<2x512xf32>
      %c1 = arith.constant 1 : index
      %c0_50 = arith.constant 0 : index
      %c0_51 = arith.constant 0 : index
      %79 = vector.load %arg14[%c1, %c0_50, %c0_51] : memref<2x2x512xf32, #tpu.memory_space<vmem>>, vector<1x2x512xf32>
      %80 = vector.shape_cast %79 : vector<1x2x512xf32> to vector<2x512xf32>
      %81 = vector.shape_cast %78 : vector<2x512xf32> to vector<1x2x512xf32>
      tpu.vector_store %arg14[%c1, %c0_50, %c0_51], %81 {strides = array<i32>} : memref<2x2x512xf32, #tpu.memory_space<vmem>>, vector<1x2x512xf32>,
    } else {
    }
    %3 = arith.index_cast %arg1 : i32 to index
    %c0 = arith.constant 0 : index
    %c0_1 = arith.constant 0 : index
    %4 = vector.load %arg14[%3, %c0, %c0_1] : memref<2x2x512xf32, #tpu.memory_space<vmem>>, vector<1x2x512xf32>
    %5 = vector.shape_cast %4 : vector<1x2x512xf32> to vector<2x512xf32>
    %6 = arith.truncf %5 : vector<2x512xf32> to vector<2x512xbf16>
    %c0_2 = arith.constant 0 : index
    %c0_3 = arith.constant 0 : index
    %c0_4 = arith.constant 0 : index
    %7 = vector.load %arg5[%c0_2, %c0_3, %c0_4] : memref<1x512x512xbf16, #tpu.memory_space<vmem>>, vector<1x512x512xbf16>
    %8 = vector.shape_cast %7 : vector<1x512x512xbf16> to vector<512x512xbf16>
    %cst = arith.constant dense<0.000000e+00> : vector<2x512xf32>
    %9 = tpu.matmul %6, %8, %cst {dimension_numbers = #tpu.dot_dimension_numbers<[1], [0], [0], [1], [0, 0, 1, 1], [], []>} : vector<2x512xbf16>, vector<512x512xbf16>, vector<2x512xf32> -> vector<2x512xf32>
    %c0_5 = arith.constant 0 : index
    %c0_6 = arith.constant 0 : index
    %c0_7 = arith.constant 0 : index
    %10 = vector.load %arg6[%c0_5, %c0_6, %c0_7] : memref<1x1x512xf32, #tpu.memory_space<vmem>>, vector<1x1x512xf32>
    %11 = vector.shape_cast %10 : vector<1x1x512xf32> to vector<1x512xf32>
    %12 = vector.broadcast %11 : vector<1x512xf32> to vector<2x512xf32>
    %13 = arith.addf %9, %12 : vector<2x512xf32>
    %cst_8 = arith.constant 0.000000e+00 : f32
    %14 = vector.broadcast %cst_8 : f32 to vector<2x512xf32>
    %15 = arith.cmpf ogt, %13, %14 : vector<2x512xf32>
    %cst_9 = arith.constant 0.00999999977 : f32
    %16 = vector.broadcast %cst_9 : f32 to vector<2x512xf32>
    %17 = arith.mulf %16, %13 : vector<2x512xf32>
    %18 = arith.select %15, %13, %17 : vector<2x512xi1>, vector<2x512xf32>
    %19 = arith.truncf %18 : vector<2x512xf32> to vector<2x512xbf16>
    %c0_10 = arith.constant 0 : index
    %c0_11 = arith.constant 0 : index
    %c0_12 = arith.constant 0 : index
    %20 = vector.load %arg7[%c0_10, %c0_11, %c0_12] : memref<1x512x512xbf16, #tpu.memory_space<vmem>>, vector<1x512x512xbf16>
    %21 = vector.shape_cast %20 : vector<1x512x512xbf16> to vector<512x512xbf16>
    %cst_13 = arith.constant dense<0.000000e+00> : vector<2x512xf32>
    %22 = tpu.matmul %19, %21, %cst_13 {dimension_numbers = #tpu.dot_dimension_numbers<[1], [0], [0], [1], [0, 0, 1, 1], [], []>} : vector<2x512xbf16>, vector<512x512xbf16>, vector<2x512xf32> -> vector<2x512xf32>
    %c0_14 = arith.constant 0 : index
    %c0_15 = arith.constant 0 : index
    %c0_16 = arith.constant 0 : index
    %23 = vector.load %arg8[%c0_14, %c0_15, %c0_16] : memref<1x1x512xf32, #tpu.memory_space<vmem>>, vector<1x1x512xf32>
    %24 = vector.shape_cast %23 : vector<1x1x512xf32> to vector<1x512xf32>
    %25 = vector.broadcast %24 : vector<1x512xf32> to vector<2x512xf32>
    %26 = arith.addf %22, %25 : vector<2x512xf32>
    %cst_17 = arith.constant 0.000000e+00 : f32
    %27 = vector.broadcast %cst_17 : f32 to vector<2x512xf32>
    %28 = arith.cmpf ogt, %26, %27 : vector<2x512xf32>
    %cst_18 = arith.constant 0.00999999977 : f32
    %29 = vector.broadcast %cst_18 : f32 to vector<2x512xf32>
    %30 = arith.mulf %29, %26 : vector<2x512xf32>
    %31 = arith.select %28, %26, %30 : vector<2x512xi1>, vector<2x512xf32>
    %32 = arith.truncf %31 : vector<2x512xf32> to vector<2x512xbf16>
    %c0_19 = arith.constant 0 : index
    %c0_20 = arith.constant 0 : index
    %c0_21 = arith.constant 0 : index
    %33 = vector.load %arg9[%c0_19, %c0_20, %c0_21] : memref<1x512x256xbf16, #tpu.memory_space<vmem>>, vector<1x512x256xbf16>
    %34 = vector.shape_cast %33 : vector<1x512x256xbf16> to vector<512x256xbf16>
    %cst_22 = arith.constant dense<0.000000e+00> : vector<2x256xf32>
    %35 = tpu.matmul %32, %34, %cst_22 {dimension_numbers = #tpu.dot_dimension_numbers<[1], [0], [0], [1], [0, 0, 1, 1], [], []>} : vector<2x512xbf16>, vector<512x256xbf16>, vector<2x256xf32> -> vector<2x256xf32>
    %c0_23 = arith.constant 0 : index
    %c0_24 = arith.constant 0 : index
    %c0_25 = arith.constant 0 : index
    %36 = vector.load %arg10[%c0_23, %c0_24, %c0_25] : memref<1x1x256xf32, #tpu.memory_space<vmem>>, vector<1x1x256xf32>
    %37 = vector.shape_cast %36 : vector<1x1x256xf32> to vector<1x256xf32>
    %38 = vector.broadcast %37 : vector<1x256xf32> to vector<2x256xf32>
    %39 = arith.addf %35, %38 : vector<2x256xf32>
    %cst_26 = arith.constant 0.000000e+00 : f32
    %40 = vector.broadcast %cst_26 : f32 to vector<2x256xf32>
    %41 = arith.cmpf ogt, %39, %40 : vector<2x256xf32>
    %cst_27 = arith.constant 0.00999999977 : f32
    %42 = vector.broadcast %cst_27 : f32 to vector<2x256xf32>
    %43 = arith.mulf %42, %39 : vector<2x256xf32>
    %44 = arith.select %41, %39, %43 : vector<2x256xi1>, vector<2x256xf32>
    %c0_28 = arith.constant 0 : index
    %c0_29 = arith.constant 0 : index
    %c0_30 = arith.constant 0 : index
    %45 = vector.load %arg11[%c0_28, %c0_29, %c0_30] : memref<1x1x256xbf16, #tpu.memory_space<vmem>>, vector<1x1x256xbf16>
    %46 = vector.shape_cast %45 : vector<1x1x256xbf16> to vector<1x256xbf16>
    %47 = arith.extf %46 : vector<1x256xbf16> to vector<1x256xf32>
    %48 = vector.broadcast %47 : vector<1x256xf32> to vector<2x256xf32>
    %49 = arith.mulf %44, %48 : vector<2x256xf32>
    %cst_31 = arith.constant dense<0.000000e+00> : vector<2xf32>
    %50 = vector.multi_reduction <add>, %49, %cst_31 [1] : vector<2x256xf32> to vector<2xf32>
    %51 = vector.shape_cast %50 : vector<2xf32> to vector<2x1xf32>
    %c0_32 = arith.constant 0 : index
    %c0_33 = arith.constant 0 : index
    %c0_34 = arith.constant 0 : index
    %52 = vector.load %arg12[%c0_32, %c0_33, %c0_34] : memref<1x1x1xf32, #tpu.memory_space<vmem>>, vector<1x1x1xf32>
    %53 = vector.shape_cast %52 : vector<1x1x1xf32> to vector<1x1xf32>
    %54 = vector.broadcast %53 : vector<1x1xf32> to vector<2x1xf32>
    %55 = arith.addf %51, %54 : vector<2x1xf32>
    %c0_i32_35 = arith.constant 0 : i32
    %56 = arith.cmpi eq, %arg1, %c0_i32_35 : i32
    %57 = arith.extui %56 : i1 to i32
    %c0_i32_36 = arith.constant 0 : i32
    %58 = arith.cmpi ne, %57, %c0_i32_36 : i32
    scf.if %58 {
      %c0_38 = arith.constant 0 : index
      %c0_39 = arith.constant 0 : index
      %62 = vector.load %arg13[%c0_38, %c0_39] : memref<2x2xf32, #tpu.memory_space<vmem>>, vector<2x1xf32>
      tpu.vector_store %arg13[%c0_38, %c0_39], %55 {strides = array<i32>} : memref<2x2xf32, #tpu.memory_space<vmem>>, vector<2x1xf32>,
    } else {
    }
    %c1_i32 = arith.constant 1 : i32
    %59 = arith.cmpi eq, %arg1, %c1_i32 : i32
    %60 = arith.extui %59 : i1 to i32
    %c0_i32_37 = arith.constant 0 : i32
    %61 = arith.cmpi ne, %60, %c0_i32_37 : i32
    scf.if %61 {
      %c0_38 = arith.constant 0 : index
      %c1 = arith.constant 1 : index
      %62 = vector.load %arg13[%c0_38, %c1] : memref<2x2xf32, #tpu.memory_space<vmem>>, vector<2x1xf32>
      tpu.vector_store %arg13[%c0_38, %c1], %55 {strides = array<i32>} : memref<2x2xf32, #tpu.memory_space<vmem>>, vector<2x1xf32>,
    } else {
    }
    return
  }
  func.func @transform_0(%arg0: i32, %arg1: i32) -> (i32, i32) {
    %c0_i32 = arith.constant 0 : i32
    %c0_i32_0 = arith.constant 0 : i32
    return %arg0, %c0_i32 : i32, i32
  }
  func.func @transform_1(%arg0: i32, %arg1: i32) -> (i32, i32) {
    %c0_i32 = arith.constant 0 : i32
    %c0_i32_0 = arith.constant 0 : i32
    %c0_i32_1 = arith.constant 0 : i32
    return %c0_i32, %c0_i32_0 : i32, i32
  }
  func.func @transform_2(%arg0: i32, %arg1: i32) -> (i32, i32) {
    %c0_i32 = arith.constant 0 : i32
    %c0_i32_0 = arith.constant 0 : i32
    %c0_i32_1 = arith.constant 0 : i32
    return %c0_i32, %c0_i32_0 : i32, i32
  }
  func.func @transform_3(%arg0: i32, %arg1: i32) -> (i32, i32, i32) {
    %c0_i32 = arith.constant 0 : i32
    %c0_i32_0 = arith.constant 0 : i32
    %c0_i32_1 = arith.constant 0 : i32
    return %arg1, %c0_i32, %c0_i32_0 : i32, i32, i32
  }
  func.func @transform_4(%arg0: i32, %arg1: i32) -> (i32, i32, i32) {
    %c0_i32 = arith.constant 0 : i32
    %c0_i32_0 = arith.constant 0 : i32
    %c0_i32_1 = arith.constant 0 : i32
    return %arg1, %c0_i32, %c0_i32_0 : i32, i32, i32
  }
  func.func @transform_5(%arg0: i32, %arg1: i32) -> (i32, i32, i32) {
    %c0_i32 = arith.constant 0 : i32
    %c0_i32_0 = arith.constant 0 : i32
    %c0_i32_1 = arith.constant 0 : i32
    return %arg1, %c0_i32, %c0_i32_0 : i32, i32, i32
  }
  func.func @transform_6(%arg0: i32, %arg1: i32) -> (i32, i32, i32) {
    %c0_i32 = arith.constant 0 : i32
    %c0_i32_0 = arith.constant 0 : i32
    %c0_i32_1 = arith.constant 0 : i32
    return %arg1, %c0_i32, %c0_i32_0 : i32, i32, i32
  }
  func.func @transform_7(%arg0: i32, %arg1: i32) -> (i32, i32, i32) {
    %c0_i32 = arith.constant 0 : i32
    %c0_i32_0 = arith.constant 0 : i32
    %c0_i32_1 = arith.constant 0 : i32
    return %arg1, %c0_i32, %c0_i32_0 : i32, i32, i32
  }
  func.func @transform_8(%arg0: i32, %arg1: i32) -> (i32, i32, i32) {
    %c0_i32 = arith.constant 0 : i32
    %c0_i32_0 = arith.constant 0 : i32
    %c0_i32_1 = arith.constant 0 : i32
    return %arg1, %c0_i32, %c0_i32_0 : i32, i32, i32
  }
  func.func @transform_9(%arg0: i32, %arg1: i32) -> (i32, i32, i32) {
    %c0_i32 = arith.constant 0 : i32
    %c0_i32_0 = arith.constant 0 : i32
    %c0_i32_1 = arith.constant 0 : i32
    return %arg1, %c0_i32, %c0_i32_0 : i32, i32, i32
  }
  func.func @transform_10(%arg0: i32, %arg1: i32) -> (i32, i32, i32) {
    %c0_i32 = arith.constant 0 : i32
    %c0_i32_0 = arith.constant 0 : i32
    %c0_i32_1 = arith.constant 0 : i32
    return %arg1, %c0_i32, %c0_i32_0 : i32, i32, i32
  }
  func.func @transform_11(%arg0: i32, %arg1: i32) -> (i32, i32) {
    %c0_i32 = arith.constant 0 : i32
    %c0_i32_0 = arith.constant 0 : i32
    return %arg0, %c0_i32 : i32, i32
  }
}

</mosaic_0001>

<llo_original>
// kernel: tpu_custom_call.1
$region0: #{tpu_custom_call.1}
  #allocation0 [shape = 'u32[]', space=smem, size = 0x4, offset = 0x4, fixed_abs, tag = 'smem constant byte address 0x4 - core index']
  #allocation1 [shape = 'u32[72,128]{1,0:T(1,128)}', space=vmem, size = 0x9000, scoped, tag = 'internal scratch']
  #allocation2 [shape = 'f32[2,2,512]{2,1,0:T(2,128)}', space=vmem, size = 0x2000, scoped, tag = 'scratch operand']
  %s0 = inlined_call_operand.vmem [shape: f32[2,12], index: 0, kind: input, shape index: {}]
  %s1 = inlined_call_operand.hbm [shape: bf16[12,1024], index: 1, kind: input, shape index: {}]
  %s2 = inlined_call_operand.hbm [shape: f32[1,1024], index: 2, kind: input, shape index: {}]
  %s3 = inlined_call_operand.hbm [shape: bf16[2,512,512], index: 3, kind: input, shape index: {}]
  %s4 = inlined_call_operand.hbm [shape: f32[2,1,512], index: 4, kind: input, shape index: {}]
  %s5 = inlined_call_operand.hbm [shape: bf16[2,512,512], index: 5, kind: input, shape index: {}]
  %s6 = inlined_call_operand.hbm [shape: f32[2,1,512], index: 6, kind: input, shape index: {}]
  %s7 = inlined_call_operand.hbm [shape: bf16[2,512,256], index: 7, kind: input, shape index: {}]
  %s8 = inlined_call_operand.vmem [shape: f32[2,1,256], index: 8, kind: input, shape index: {}]
  %s9 = inlined_call_operand.vmem [shape: bf16[2,1,256], index: 9, kind: input, shape index: {}]
  %s10 = inlined_call_operand.vmem [shape: f32[2,1,1], index: 10, kind: input, shape index: {}]
  %s11 = inlined_call_operand.hbm [shape: f32[2,2], index: 11, kind: output, shape index: {}]
  %s12 = sld [smem:[#allocation0]]
  $region117: #{tpu_custom_call.1} parent=0
    _
  %s14 = ssub.s32 1, %s12
  %s15 = scalar_select 0, %s14, %s12
  $region1: #{tpu_custom_call.1} parent=0
    #allocation3 [shape = 'u8[32768]{0}', space=vmem, size = 0x8000, scoped, tag = 'input window, operand 1, single buffered']
    #allocation4 [shape = 's32[2]{0}', space=sflag, size = 0x8, scoped, tag = 'scoped memory for tpu_custom_call.1']
    #allocation5 [shape = 's32[2]{0}', space=sflag, size = 0x8, scoped, tag = 'scoped memory for tpu_custom_call.1']
    #allocation6 [shape = 'u8[4096]{0}', space=vmem, size = 0x1000, scoped, tag = 'input window, operand 2, single buffered']
    #allocation7 [shape = 's32[1]{0}', space=sflag, size = 0x4, scoped, tag = 'scoped memory for tpu_custom_call.1']
    #allocation8 [shape = 'u8[1048576]{0}', space=vmem, size = 0x100000, scoped, tag = 'input window, operand 3']
    #allocation9 [shape = 'u8[4096]{0}', space=vmem, size = 0x1000, scoped, tag = 'input window, operand 4']
    #allocation10 [shape = 'u8[1048576]{0}', space=vmem, size = 0x100000, scoped, tag = 'input window, operand 5']
    #allocation11 [shape = 'u8[4096]{0}', space=vmem, size = 0x1000, scoped, tag = 'input window, operand 6']
    #allocation12 [shape = 'u8[524288]{0}', space=vmem, size = 0x80000, scoped, tag = 'input window, operand 7']
    #allocation13 [shape = 'u8[1024]{0}', space=vmem, size = 0x400, scoped, tag = 'output window, operand 0, single buffered']
    %16 = vsyncpa [#allocation4], 0
    %17 = vsyncpa [#allocation7], 0
    %18 = vsyncpa [#allocation5], 0
    loop: start=0, step=1, limit=4
    $region2: #{tpu_custom_call.1} parent=1 // loop_pre_header
      _
    $region3: #{tpu_custom_call.1} parent=1 // loop_header
      %s20 = sphi 0, %s24
      %p21 = scmp.ge.s32.totalorder %s20, 4
      %s27 = sphi 0, %s39
      %s28 = sphi 0, %s35
      %s29 = sphi 0, %s27
      %s30 = sphi 0, %s28
      %s31 = sphi 0, %s29
      %s32 = sphi 0, %s30
      %s42 = sphi 0, %s44
      %s45 = sphi 0, %s42
      %s46 = sphi 0, %s45
      %s62 = sphi 0, %s46
      %s66 = sphi 0, %s66
      %s68 = sphi 0, %s66
      %s69 = sphi 0, %s68
      %s83 = sphi 0, %s69
      %s87 = sphi 0, %s87
      %s89 = sphi 0, %s87
      %s90 = sphi 0, %s89
      %s104 = sphi 0, %s90
      %s110 = sphi 0, %s112
      %s113 = sphi 0, %s110
      %s114 = sphi 0, %s113
      %s130 = sphi 0, %s114
      %s136 = sphi 0, %s138
      %s139 = sphi 0, %s136
      %s140 = sphi 0, %s139
      %s156 = sphi 0, %s140
      %s162 = sphi 0, %s164
      %s165 = sphi 0, %s162
      %s166 = sphi 0, %s165
      %s182 = sphi 0, %s166
      %s188 = sphi 0, %s190
      %s191 = sphi 0, %s188
      %s192 = sphi 0, %s191
      %s208 = sphi 0, %s192
      %s214 = sphi 0, %s216
      %s217 = sphi 0, %s214
      %s218 = sphi 0, %s217
      %s234 = sphi 0, %s218
      %s240 = sphi 0, %s242
      %s243 = sphi 0, %s240
      %s244 = sphi 0, %s243
      %s260 = sphi 0, %s244
      %s266 = sphi 0, %s268
      %s269 = sphi 0, %s266
      %s270 = sphi 0, %s269
      %s286 = sphi 0, %s270
      %s292 = sphi 0, %s294
      %s295 = sphi 0, %s292
      %s296 = sphi 0, %s295
      %s312 = sphi 0, %s296
      %s318 = sphi 0, %s320
      %s321 = sphi 0, %s318
      %s322 = sphi 0, %s321
      %s338 = sphi 0, %s322
    $region4: #{tpu_custom_call.1} parent=1 // loop_header_branch
      %23 = sbr.rel (%p21) target = $region8
    $region5: #{tpu_custom_call.1} parent=1 // loop_body
      %s25 = ssub.s32 %s20, 1
      %s26 = ssub.s32 %s20, 2
      %s33 = sadd.s32 1, %s28
      %p34 = scmp.ge.s32.totalorder %s33, 2
      %s35 = scalar_select %p34, 0, %s33
      %s36 = sadd.s32 1, %s27
      %s37 = scalar_select %p34, %s36, %s27
      %p38 = scmp.ge.s32.totalorder %s37, 1
      %s39 = scalar_select %p38, 0, %s37
      %s40 = ssub.s32 %s27, %s39
      %p41 = scmp.eq.s32.totalorder %s40, 0
      %s43 = sadd.s32 %s42, 1
      %s44 = scalar_select %p41, %s42, %s43
      %p47 = pneg %p41
      %p48 = scmp.eq.s32.totalorder %s20, 1
      %p49 = por %p47, %p48
      %p50 = scmp.ne.s32.totalorder %s42, %s45
      %p51 = scmp.eq.s32.totalorder %s20, 0
      %p52 = por %p50, %p51
      %p53 = scmp.ne.s32.totalorder %s42, %s45
      %p54 = scmp.eq.s32.totalorder %s25, 1
      %p55 = por %p53, %p54
      %p56 = scmp.ne.s32.totalorder %s45, %s46
      %p57 = scmp.eq.s32.totalorder %s25, 0
      %p58 = por %p56, %p57
      %p59 = scmp.ne.s32.totalorder %s45, %s46
      %p60 = scmp.eq.s32.totalorder %s26, 1
      %p61 = por %p59, %p60
      %p63 = scmp.ne.s32.totalorder %s46, %s62
      %p64 = scmp.eq.s32.totalorder %s26, 0
      %p65 = por %p63, %p64
      %s67 = sadd.s32 %s66, 1
      %p70 = scmp.eq.s32.totalorder %s20, 1
      %p71 = scmp.ne.s32.totalorder %s66, %s68
      %p72 = scmp.eq.s32.totalorder %s20, 0
      %p73 = por %p71, %p72
      %p74 = scmp.ne.s32.totalorder %s66, %s68
      %p75 = scmp.eq.s32.totalorder %s25, 1
      %p76 = por %p74, %p75
      %p77 = scmp.ne.s32.totalorder %s68, %s69
      %p78 = scmp.eq.s32.totalorder %s25, 0
      %p79 = por %p77, %p78
      %p80 = scmp.ne.s32.totalorder %s68, %s69
      %p81 = scmp.eq.s32.totalorder %s26, 1
      %p82 = por %p80, %p81
      %p84 = scmp.ne.s32.totalorder %s69, %s83
      %p85 = scmp.eq.s32.totalorder %s26, 0
      %p86 = por %p84, %p85
      %s88 = sadd.s32 %s87, 1
      %p91 = scmp.eq.s32.totalorder %s20, 1
      %p92 = scmp.ne.s32.totalorder %s87, %s89
      %p93 = scmp.eq.s32.totalorder %s20, 0
      %p94 = por %p92, %p93
      %p95 = scmp.ne.s32.totalorder %s87, %s89
      %p96 = scmp.eq.s32.totalorder %s25, 1
      %p97 = por %p95, %p96
      %p98 = scmp.ne.s32.totalorder %s89, %s90
      %p99 = scmp.eq.s32.totalorder %s25, 0
      %p100 = por %p98, %p99
      %p101 = scmp.ne.s32.totalorder %s89, %s90
      %p102 = scmp.eq.s32.totalorder %s26, 1
      %p103 = por %p101, %p102
      %p105 = scmp.ne.s32.totalorder %s90, %s104
      %p106 = scmp.eq.s32.totalorder %s26, 0
      %p107 = por %p105, %p106
      %s108 = ssub.s32 %s28, %s35
      %p109 = scmp.eq.s32.totalorder %s108, 0
      %s111 = sadd.s32 %s110, 1
      %s112 = scalar_select %p109, %s110, %s111
      %p115 = pneg %p109
      %p116 = scmp.eq.s32.totalorder %s20, 1
      %p117 = por %p115, %p116
      %p118 = scmp.ne.s32.totalorder %s110, %s113
      %p119 = scmp.eq.s32.totalorder %s20, 0
      %p120 = por %p118, %p119
      %p121 = scmp.ne.s32.totalorder %s110, %s113
      %p122 = scmp.eq.s32.totalorder %s25, 1
      %p123 = por %p121, %p122
      %p124 = scmp.ne.s32.totalorder %s113, %s114
      %p125 = scmp.eq.s32.totalorder %s25, 0
      %p126 = por %p124, %p125
      %p127 = scmp.ne.s32.totalorder %s113, %s114
      %p128 = scmp.eq.s32.totalorder %s26, 1
      %p129 = por %p127, %p128
      %p131 = scmp.ne.s32.totalorder %s114, %s130
      %p132 = scmp.eq.s32.totalorder %s26, 0
      %p133 = por %p131, %p132
      %s134 = ssub.s32 %s28, %s35
      %p135 = scmp.eq.s32.totalorder %s134, 0
      %s137 = sadd.s32 %s136, 1
      %s138 = scalar_select %p135, %s136, %s137
      %p141 = pneg %p135
      %p142 = scmp.eq.s32.totalorder %s20, 1
      %p143 = por %p141, %p142
      %p144 = scmp.ne.s32.totalorder %s136, %s139
      %p145 = scmp.eq.s32.totalorder %s20, 0
      %p146 = por %p144, %p145
      %p147 = scmp.ne.s32.totalorder %s136, %s139
      %p148 = scmp.eq.s32.totalorder %s25, 1
      %p149 = por %p147, %p148
      %p150 = scmp.ne.s32.totalorder %s139, %s140
      %p151 = scmp.eq.s32.totalorder %s25, 0
      %p152 = por %p150, %p151
      %p153 = scmp.ne.s32.totalorder %s139, %s140
      %p154 = scmp.eq.s32.totalorder %s26, 1
      %p155 = por %p153, %p154
      %p157 = scmp.ne.s32.totalorder %s140, %s156
      %p158 = scmp.eq.s32.totalorder %s26, 0
      %p159 = por %p157, %p158
      %s160 = ssub.s32 %s28, %s35
      %p161 = scmp.eq.s32.totalorder %s160, 0
      %s163 = sadd.s32 %s162, 1
      %s164 = scalar_select %p161, %s162, %s163
      %p167 = pneg %p161
      %p168 = scmp.eq.s32.totalorder %s20, 1
      %p169 = por %p167, %p168
      %p170 = scmp.ne.s32.totalorder %s162, %s165
      %p171 = scmp.eq.s32.totalorder %s20, 0
      %p172 = por %p170, %p171
      %p173 = scmp.ne.s32.totalorder %s162, %s165
      %p174 = scmp.eq.s32.totalorder %s25, 1
      %p175 = por %p173, %p174
      %p176 = scmp.ne.s32.totalorder %s165, %s166
      %p177 = scmp.eq.s32.totalorder %s25, 0
      %p178 = por %p176, %p177
      %p179 = scmp.ne.s32.totalorder %s165, %s166
      %p180 = scmp.eq.s32.totalorder %s26, 1
      %p181 = por %p179, %p180
      %p183 = scmp.ne.s32.totalorder %s166, %s182
      %p184 = scmp.eq.s32.totalorder %s26, 0
      %p185 = por %p183, %p184
      %s186 = ssub.s32 %s28, %s35
      %p187 = scmp.eq.s32.totalorder %s186, 0
      %s189 = sadd.s32 %s188, 1
      %s190 = scalar_select %p187, %s188, %s189
      %p193 = pneg %p187
      %p194 = scmp.eq.s32.totalorder %s20, 1
      %p195 = por %p193, %p194
      %p196 = scmp.ne.s32.totalorder %s188, %s191
      %p197 = scmp.eq.s32.totalorder %s20, 0
      %p198 = por %p196, %p197
      %p199 = scmp.ne.s32.totalorder %s188, %s191
      %p200 = scmp.eq.s32.totalorder %s25, 1
      %p201 = por %p199, %p200
      %p202 = scmp.ne.s32.totalorder %s191, %s192
      %p203 = scmp.eq.s32.totalorder %s25, 0
      %p204 = por %p202, %p203
      %p205 = scmp.ne.s32.totalorder %s191, %s192
      %p206 = scmp.eq.s32.totalorder %s26, 1
      %p207 = por %p205, %p206
      %p209 = scmp.ne.s32.totalorder %s192, %s208
      %p210 = scmp.eq.s32.totalorder %s26, 0
      %p211 = por %p209, %p210
      %s212 = ssub.s32 %s28, %s35
      %p213 = scmp.eq.s32.totalorder %s212, 0
      %s215 = sadd.s32 %s214, 1
      %s216 = scalar_select %p213, %s214, %s215
      %p219 = pneg %p213
      %p220 = scmp.eq.s32.totalorder %s20, 1
      %p221 = por %p219, %p220
      %p222 = scmp.ne.s32.totalorder %s214, %s217
      %p223 = scmp.eq.s32.totalorder %s20, 0
      %p224 = por %p222, %p223
      %p225 = scmp.ne.s32.totalorder %s214, %s217
      %p226 = scmp.eq.s32.totalorder %s25, 1
      %p227 = por %p225, %p226
      %p228 = scmp.ne.s32.totalorder %s217, %s218
      %p229 = scmp.eq.s32.totalorder %s25, 0
      %p230 = por %p228, %p229
      %p231 = scmp.ne.s32.totalorder %s217, %s218
      %p232 = scmp.eq.s32.totalorder %s26, 1
      %p233 = por %p231, %p232
      %p235 = scmp.ne.s32.totalorder %s218, %s234
      %p236 = scmp.eq.s32.totalorder %s26, 0
      %p237 = por %p235, %p236
      %s238 = ssub.s32 %s28, %s35
      %p239 = scmp.eq.s32.totalorder %s238, 0
      %s241 = sadd.s32 %s240, 1
      %s242 = scalar_select %p239, %s240, %s241
      %p245 = pneg %p239
      %p246 = scmp.eq.s32.totalorder %s20, 1
      %p247 = por %p245, %p246
      %p248 = scmp.ne.s32.totalorder %s240, %s243
      %p249 = scmp.eq.s32.totalorder %s20, 0
      %p250 = por %p248, %p249
      %p251 = scmp.ne.s32.totalorder %s240, %s243
      %p252 = scmp.eq.s32.totalorder %s25, 1
      %p253 = por %p251, %p252
      %p254 = scmp.ne.s32.totalorder %s243, %s244
      %p255 = scmp.eq.s32.totalorder %s25, 0
      %p256 = por %p254, %p255
      %p257 = scmp.ne.s32.totalorder %s243, %s244
      %p258 = scmp.eq.s32.totalorder %s26, 1
      %p259 = por %p257, %p258
      %p261 = scmp.ne.s32.totalorder %s244, %s260
      %p262 = scmp.eq.s32.totalorder %s26, 0
      %p263 = por %p261, %p262
      %s264 = ssub.s32 %s28, %s35
      %p265 = scmp.eq.s32.totalorder %s264, 0
      %s267 = sadd.s32 %s266, 1
      %s268 = scalar_select %p265, %s266, %s267
      %p271 = pneg %p265
      %p272 = scmp.eq.s32.totalorder %s20, 1
      %p273 = por %p271, %p272
      %p274 = scmp.ne.s32.totalorder %s266, %s269
      %p275 = scmp.eq.s32.totalorder %s20, 0
      %p276 = por %p274, %p275
      %p277 = scmp.ne.s32.totalorder %s266, %s269
      %p278 = scmp.eq.s32.totalorder %s25, 1
      %p279 = por %p277, %p278
      %p280 = scmp.ne.s32.totalorder %s269, %s270
      %p281 = scmp.eq.s32.totalorder %s25, 0
      %p282 = por %p280, %p281
      %p283 = scmp.ne.s32.totalorder %s269, %s270
      %p284 = scmp.eq.s32.totalorder %s26, 1
      %p285 = por %p283, %p284
      %p287 = scmp.ne.s32.totalorder %s270, %s286
      %p288 = scmp.eq.s32.totalorder %s26, 0
      %p289 = por %p287, %p288
      %s290 = ssub.s32 %s28, %s35
      %p291 = scmp.eq.s32.totalorder %s290, 0
      %s293 = sadd.s32 %s292, 1
      %s294 = scalar_select %p291, %s292, %s293
      %p297 = pneg %p291
      %p298 = scmp.eq.s32.totalorder %s20, 1
      %p299 = por %p297, %p298
      %p300 = scmp.ne.s32.totalorder %s292, %s295
      %p301 = scmp.eq.s32.totalorder %s20, 0
      %p302 = por %p300, %p301
      %p303 = scmp.ne.s32.totalorder %s292, %s295
      %p304 = scmp.eq.s32.totalorder %s25, 1
      %p305 = por %p303, %p304
      %p306 = scmp.ne.s32.totalorder %s295, %s296
      %p307 = scmp.eq.s32.totalorder %s25, 0
      %p308 = por %p306, %p307
      %p309 = scmp.ne.s32.totalorder %s295, %s296
      %p310 = scmp.eq.s32.totalorder %s26, 1
      %p311 = por %p309, %p310
      %p313 = scmp.ne.s32.totalorder %s296, %s312
      %p314 = scmp.eq.s32.totalorder %s26, 0
      %p315 = por %p313, %p314
      %s316 = ssub.s32 %s27, %s39
      %p317 = scmp.eq.s32.totalorder %s316, 0
      %s319 = sadd.s32 %s318, 1
      %s320 = scalar_select %p317, %s318, %s319
      %p323 = pneg %p317
      %p324 = scmp.eq.s32.totalorder %s20, 1
      %p325 = por %p323, %p324
      %p326 = scmp.ne.s32.totalorder %s318, %s321
      %p327 = scmp.eq.s32.totalorder %s20, 0
      %p328 = por %p326, %p327
      %p329 = scmp.ne.s32.totalorder %s318, %s321
      %p330 = scmp.eq.s32.totalorder %s25, 1
      %p331 = por %p329, %p330
      %p332 = scmp.ne.s32.totalorder %s321, %s322
      %p333 = scmp.eq.s32.totalorder %s25, 0
      %p334 = por %p332, %p333
      %p335 = scmp.ne.s32.totalorder %s321, %s322
      %p336 = scmp.eq.s32.totalorder %s26, 1
      %p337 = por %p335, %p336
      %p339 = scmp.ne.s32.totalorder %s322, %s338
      %p340 = scmp.eq.s32.totalorder %s26, 0
      %p341 = por %p339, %p340
      %p342 = scmp.le.s32.totalorder 1, %s20
      %p343 = scmp.lt.s32.totalorder %s20, 3
      %p344 = pnand %p342, %p343
      %p345 = pneg %p344
      // Predicated region
      $region9: #{tpu_custom_call.1} parent=5 // pred_check
        _
      $region10: #{tpu_custom_call.1} parent=5 // pred_check_branch
        %347 = sbr.rel (%p344) target = $region12
      $region11: #{tpu_custom_call.1} parent=5 // pred_region
        %s348 = ssub.s32 %s20, 1
        // Predicated region
        $region13: #{tpu_custom_call.1} parent=11 // pred_check
          %p349 = pneg %p58
        $region14: #{tpu_custom_call.1} parent=11 // pred_check_branch
          %351 = sbr.rel (%p349) target = $region16
        $region15: #{tpu_custom_call.1} parent=11 // pred_region
          %p352 = scmp.lt.s32.totalorder %s29, 0
          %s353 = scalar_select %p352, %s29, 0
          %s354 = smul.addr %s353, 2
          %s355 = scalar_lea.vmem %s0, %s354
        $region16: #{tpu_custom_call.1} parent=11 // pred_fallthru
          _
        // Predicated region
        $region17: #{tpu_custom_call.1} parent=11 // pred_check
          %p356 = pneg %p79
        $region18: #{tpu_custom_call.1} parent=11 // pred_check_branch
          %358 = sbr.rel (%p356) target = $region20
        $region19: #{tpu_custom_call.1} parent=11 // pred_region
          %360 = vsyncadd [#allocation4], 0
          %s361 = sshll.u32 %s1, 4
          %s362 = int_to_ptr.hbm [resolvable:$true] %s361
          %s363 = sshll.u32 [#allocation3], 4
          %s364 = int_to_ptr.vmem [resolvable:$true] %s363
          %369 = dma.hbm_to_vmem [thread:$0]  %s362, 1024, %s364, [#allocation4], 512, 512, 32
        $region20: #{tpu_custom_call.1} parent=11 // pred_fallthru
          _
        // Predicated region
        $region21: #{tpu_custom_call.1} parent=11 // pred_check
          %p370 = pneg %p100
        $region22: #{tpu_custom_call.1} parent=11 // pred_check_branch
          %372 = sbr.rel (%p370) target = $region24
        $region23: #{tpu_custom_call.1} parent=11 // pred_region
          %374 = vsyncadd [#allocation7], 0
          %s376 = sshll.u32 %s2, 4
          %s377 = int_to_ptr.hbm [resolvable:$true] %s376
          %s378 = sshll.u32 [#allocation6], 4
          %s379 = int_to_ptr.vmem [resolvable:$true] %s378
          %381 = dma.hbm_to_vmem [thread:$0]  %s377, 128, %s379, [#allocation7]
        $region24: #{tpu_custom_call.1} parent=11 // pred_fallthru
          _
      $region12: #{tpu_custom_call.1} parent=5 // pred_fallthru
        _
      %p382 = scmp.lt.s32.totalorder %s20, 2
      // Predicated region
      $region25: #{tpu_custom_call.1} parent=5 // pred_check
        %p383 = pneg %p382
      $region26: #{tpu_custom_call.1} parent=5 // pred_check_branch
        %385 = sbr.rel (%p383) target = $region28
      $region27: #{tpu_custom_call.1} parent=5 // pred_region
        // Predicated region
        $region29: #{tpu_custom_call.1} parent=27 // pred_check
          %p386 = pneg %p120
        $region30: #{tpu_custom_call.1} parent=27 // pred_check_branch
          %388 = sbr.rel (%p386) target = $region32
        $region31: #{tpu_custom_call.1} parent=27 // pred_region
          %s389 = sand.u32 %s20, 1
          %s390 = scalar_lea.sflag [#allocation4], %s389
          %s391 = sand.u32 %s110, 1
          %s392 = smul.addr %s391, 1024
          %s393 = scalar_lea.vmem [#allocation8], %s392
          %395 = vsyncadd %s390, 0
          %s396 = smul.addr %s28, 256
          %s397 = smul.addr %s396, 4
          %s398 = scalar_lea.hbm %s3, %s397
          %s399 = sshll.u32 %s398, 4
          %s400 = int_to_ptr.hbm [resolvable:$true] %s399
          %s401 = sshll.u32 %s393, 4
          %s402 = int_to_ptr.vmem [resolvable:$true] %s401
          %407 = dma.hbm_to_vmem [thread:$0]  %s400, 16384, %s402, %s390, 256, 256, 16
        $region32: #{tpu_custom_call.1} parent=27 // pred_fallthru
          _
        // Predicated region
        $region33: #{tpu_custom_call.1} parent=27 // pred_check
          %p408 = pneg %p146
        $region34: #{tpu_custom_call.1} parent=27 // pred_check_branch
          %410 = sbr.rel (%p408) target = $region36
        $region35: #{tpu_custom_call.1} parent=27 // pred_region
          %s411 = sand.u32 %s20, 1
          %s412 = scalar_lea.sflag [#allocation4], %s411
          %s413 = sand.u32 %s136, 1
          %s414 = smul.addr %s413, 4
          %s415 = scalar_lea.vmem [#allocation9], %s414
          %417 = vsyncadd %s412, 0
          %s418 = smul.addr %s28, 4
          %s419 = scalar_lea.hbm %s4, %s418
          %s421 = sshll.u32 %s419, 4
          %s422 = int_to_ptr.hbm [resolvable:$true] %s421
          %s423 = sshll.u32 %s415, 4
          %s424 = int_to_ptr.vmem [resolvable:$true] %s423
          %426 = dma.hbm_to_vmem [thread:$0]  %s422, 64, %s424, %s412
        $region36: #{tpu_custom_call.1} parent=27 // pred_fallthru
          _
        // Predicated region
        $region37: #{tpu_custom_call.1} parent=27 // pred_check
          %p427 = pneg %p172
        $region38: #{tpu_custom_call.1} parent=27 // pred_check_branch
          %429 = sbr.rel (%p427) target = $region40
        $region39: #{tpu_custom_call.1} parent=27 // pred_region
          %s430 = sand.u32 %s20, 1
          %s431 = scalar_lea.sflag [#allocation4], %s430
          %s432 = sand.u32 %s162, 1
          %s433 = smul.addr %s432, 1024
          %s434 = scalar_lea.vmem [#allocation10], %s433
          %436 = vsyncadd %s431, 0
          %s437 = smul.addr %s28, 256
          %s438 = smul.addr %s437, 4
          %s439 = scalar_lea.hbm %s5, %s438
          %s440 = sshll.u32 %s439, 4
          %s441 = int_to_ptr.hbm [resolvable:$true] %s440
          %s442 = sshll.u32 %s434, 4
          %s443 = int_to_ptr.vmem [resolvable:$true] %s442
          %448 = dma.hbm_to_vmem [thread:$0]  %s441, 16384, %s443, %s431, 256, 256, 16
        $region40: #{tpu_custom_call.1} parent=27 // pred_fallthru
          _
        // Predicated region
        $region41: #{tpu_custom_call.1} parent=27 // pred_check
          %p449 = pneg %p198
        $region42: #{tpu_custom_call.1} parent=27 // pred_check_branch
          %451 = sbr.rel (%p449) target = $region44
        $region43: #{tpu_custom_call.1} parent=27 // pred_region
          %s452 = sand.u32 %s20, 1
          %s453 = scalar_lea.sflag [#allocation4], %s452
          %s454 = sand.u32 %s188, 1
          %s455 = smul.addr %s454, 4
          %s456 = scalar_lea.vmem [#allocation11], %s455
          %458 = vsyncadd %s453, 0
          %s459 = smul.addr %s28, 4
          %s460 = scalar_lea.hbm %s6, %s459
          %s462 = sshll.u32 %s460, 4
          %s463 = int_to_ptr.hbm [resolvable:$true] %s462
          %s464 = sshll.u32 %s456, 4
          %s465 = int_to_ptr.vmem [resolvable:$true] %s464
          %467 = dma.hbm_to_vmem [thread:$0]  %s463, 64, %s465, %s453
        $region44: #{tpu_custom_call.1} parent=27 // pred_fallthru
          _
        // Predicated region
        $region45: #{tpu_custom_call.1} parent=27 // pred_check
          %p468 = pneg %p224
        $region46: #{tpu_custom_call.1} parent=27 // pred_check_branch
          %470 = sbr.rel (%p468) target = $region48
        $region47: #{tpu_custom_call.1} parent=27 // pred_region
          %s471 = sand.u32 %s20, 1
          %s472 = scalar_lea.sflag [#allocation4], %s471
          %s473 = sand.u32 %s214, 1
          %s474 = smul.addr %s473, 512
          %s475 = scalar_lea.vmem [#allocation12], %s474
          %477 = vsyncadd %s472, 0
          %s478 = smul.addr %s28, 128
          %s479 = smul.addr %s478, 4
          %s480 = scalar_lea.hbm %s7, %s479
          %s481 = sshll.u32 %s480, 4
          %s482 = int_to_ptr.hbm [resolvable:$true] %s481
          %s483 = sshll.u32 %s475, 4
          %s484 = int_to_ptr.vmem [resolvable:$true] %s483
          %489 = dma.hbm_to_vmem [thread:$0]  %s482, 8192, %s484, %s472, 128, 128, 8
        $region48: #{tpu_custom_call.1} parent=27 // pred_fallthru
          _
        // Predicated region
        $region49: #{tpu_custom_call.1} parent=27 // pred_check
          %p490 = pneg %p250
        $region50: #{tpu_custom_call.1} parent=27 // pred_check_branch
          %492 = sbr.rel (%p490) target = $region52
        $region51: #{tpu_custom_call.1} parent=27 // pred_region
          %p493 = scmp.lt.s32.totalorder %s28, 1
          %s494 = scalar_select %p493, %s28, 1
          %s495 = smul.addr %s494, 2
          %s496 = scalar_lea.vmem %s8, %s495
        $region52: #{tpu_custom_call.1} parent=27 // pred_fallthru
          _
        // Predicated region
        $region53: #{tpu_custom_call.1} parent=27 // pred_check
          %p497 = pneg %p276
        $region54: #{tpu_custom_call.1} parent=27 // pred_check_branch
          %499 = sbr.rel (%p497) target = $region56
        $region55: #{tpu_custom_call.1} parent=27 // pred_region
          %p500 = scmp.lt.s32.totalorder %s28, 1
          %s501 = scalar_select %p500, %s28, 1
          %s502 = smul.addr %s501, 2
          %s503 = scalar_lea.vmem %s9, %s502
        $region56: #{tpu_custom_call.1} parent=27 // pred_fallthru
          _
        // Predicated region
        $region57: #{tpu_custom_call.1} parent=27 // pred_check
          %p504 = pneg %p302
        $region58: #{tpu_custom_call.1} parent=27 // pred_check_branch
          %506 = sbr.rel (%p504) target = $region60
        $region59: #{tpu_custom_call.1} parent=27 // pred_region
          %p507 = scmp.lt.s32.totalorder %s28, 1
          %s508 = scalar_select %p507, %s28, 1
          %s509 = scalar_lea.vmem %s10, %s508
        $region60: #{tpu_custom_call.1} parent=27 // pred_fallthru
          _
      $region28: #{tpu_custom_call.1} parent=5 // pred_fallthru
        _
      %p510 = scmp.le.s32.totalorder 1, %s20
      %p511 = scmp.lt.s32.totalorder %s20, 3
      %p512 = pnand %p510, %p511
      %p513 = pneg %p512
      // Predicated region
      $region61: #{tpu_custom_call.1} parent=5 // pred_check
        _
      $region62: #{tpu_custom_call.1} parent=5 // pred_check_branch
        %515 = sbr.rel (%p512) target = $region64
      $region63: #{tpu_custom_call.1} parent=5 // pred_region
        %s516 = ssub.s32 %s20, 1
        // Predicated region
        $region65: #{tpu_custom_call.1} parent=63 // pred_check
          %p517 = pneg %p79
        $region66: #{tpu_custom_call.1} parent=63 // pred_check_branch
          %519 = sbr.rel (%p517) target = $region68
        $region67: #{tpu_custom_call.1} parent=63 // pred_region
          %521 = dma.done [#allocation4], 1024
        $region68: #{tpu_custom_call.1} parent=63 // pred_fallthru
          _
        // Predicated region
        $region69: #{tpu_custom_call.1} parent=63 // pred_check
          %p522 = pneg %p100
        $region70: #{tpu_custom_call.1} parent=63 // pred_check_branch
          %524 = sbr.rel (%p522) target = $region72
        $region71: #{tpu_custom_call.1} parent=63 // pred_region
          %526 = dma.done [#allocation7], 128
        $region72: #{tpu_custom_call.1} parent=63 // pred_fallthru
          _
        %s527 = sand.u32 %s25, 1
        %s528 = scalar_lea.sflag [#allocation4], %s527
        %s529 = sand.u32 %s113, 1
        %s530 = smul.addr %s529, 1024
        %s531 = scalar_lea.vmem [#allocation8], %s530
        // Predicated region
        $region73: #{tpu_custom_call.1} parent=63 // pred_check
          %p532 = pneg %p126
        $region74: #{tpu_custom_call.1} parent=63 // pred_check_branch
          %534 = sbr.rel (%p532) target = $region76
        $region75: #{tpu_custom_call.1} parent=63 // pred_region
          %536 = dma.done %s528, 16384
        $region76: #{tpu_custom_call.1} parent=63 // pred_fallthru
          _
        %s537 = sand.u32 %s25, 1
        %s538 = scalar_lea.sflag [#allocation4], %s537
        %s539 = sand.u32 %s139, 1
        %s540 = smul.addr %s539, 4
        %s541 = scalar_lea.vmem [#allocation9], %s540
        // Predicated region
        $region77: #{tpu_custom_call.1} parent=63 // pred_check
          %p542 = pneg %p152
        $region78: #{tpu_custom_call.1} parent=63 // pred_check_branch
          %544 = sbr.rel (%p542) target = $region80
        $region79: #{tpu_custom_call.1} parent=63 // pred_region
          %546 = dma.done %s538, 64
        $region80: #{tpu_custom_call.1} parent=63 // pred_fallthru
          _
        %s547 = sand.u32 %s25, 1
        %s548 = scalar_lea.sflag [#allocation4], %s547
        %s549 = sand.u32 %s165, 1
        %s550 = smul.addr %s549, 1024
        %s551 = scalar_lea.vmem [#allocation10], %s550
        // Predicated region
        $region81: #{tpu_custom_call.1} parent=63 // pred_check
          %p552 = pneg %p178
        $region82: #{tpu_custom_call.1} parent=63 // pred_check_branch
          %554 = sbr.rel (%p552) target = $region84
        $region83: #{tpu_custom_call.1} parent=63 // pred_region
          %556 = dma.done %s548, 16384
        $region84: #{tpu_custom_call.1} parent=63 // pred_fallthru
          _
        %s557 = sand.u32 %s25, 1
        %s558 = scalar_lea.sflag [#allocation4], %s557
        %s559 = sand.u32 %s191, 1
        %s560 = smul.addr %s559, 4
        %s561 = scalar_lea.vmem [#allocation11], %s560
        // Predicated region
        $region85: #{tpu_custom_call.1} parent=63 // pred_check
          %p562 = pneg %p204
        $region86: #{tpu_custom_call.1} parent=63 // pred_check_branch
          %564 = sbr.rel (%p562) target = $region88
        $region87: #{tpu_custom_call.1} parent=63 // pred_region
          %566 = dma.done %s558, 64
        $region88: #{tpu_custom_call.1} parent=63 // pred_fallthru
          _
        %s567 = sand.u32 %s25, 1
        %s568 = scalar_lea.sflag [#allocation4], %s567
        %s569 = sand.u32 %s217, 1
        %s570 = smul.addr %s569, 512
        %s571 = scalar_lea.vmem [#allocation12], %s570
        // Predicated region
        $region89: #{tpu_custom_call.1} parent=63 // pred_check
          %p572 = pneg %p230
        $region90: #{tpu_custom_call.1} parent=63 // pred_check_branch
          %574 = sbr.rel (%p572) target = $region92
        $region91: #{tpu_custom_call.1} parent=63 // pred_region
          %576 = dma.done %s568, 8192
        $region92: #{tpu_custom_call.1} parent=63 // pred_fallthru
          _
        %p577 = scmp.lt.s32.totalorder %s29, 0
        %s578 = scalar_select %p577, %s29, 0
        %s579 = smul.addr %s578, 2
        %s580 = scalar_lea.vmem %s0, %s579
        %p581 = pneg %p58
        %p582 = pneg %p55
        %p583 = pneg %p79
        %p584 = pneg %p76
        %p585 = pneg %p100
        %p586 = pneg %p97
        %s587 = sand.u32 %s25, 1
        %s588 = scalar_lea.sflag [#allocation4], %s587
        %s589 = sand.u32 %s113, 1
        %s590 = smul.addr %s589, 1024
        %s591 = scalar_lea.vmem [#allocation8], %s590
        %p592 = pneg %p126
        %p593 = pneg %p123
        %s594 = sand.u32 %s25, 1
        %s595 = scalar_lea.sflag [#allocation4], %s594
        %s596 = sand.u32 %s139, 1
        %s597 = smul.addr %s596, 4
        %s598 = scalar_lea.vmem [#allocation9], %s597
        %p599 = pneg %p152
        %p600 = pneg %p149
        %s601 = sand.u32 %s25, 1
        %s602 = scalar_lea.sflag [#allocation4], %s601
        %s603 = sand.u32 %s165, 1
        %s604 = smul.addr %s603, 1024
        %s605 = scalar_lea.vmem [#allocation10], %s604
        %p606 = pneg %p178
        %p607 = pneg %p175
        %s608 = sand.u32 %s25, 1
        %s609 = scalar_lea.sflag [#allocation4], %s608
        %s610 = sand.u32 %s191, 1
        %s611 = smul.addr %s610, 4
        %s612 = scalar_lea.vmem [#allocation11], %s611
        %p613 = pneg %p204
        %p614 = pneg %p201
        %s615 = sand.u32 %s25, 1
        %s616 = scalar_lea.sflag [#allocation4], %s615
        %s617 = sand.u32 %s217, 1
        %s618 = smul.addr %s617, 512
        %s619 = scalar_lea.vmem [#allocation12], %s618
        %p620 = pneg %p230
        %p621 = pneg %p227
        %p622 = scmp.lt.s32.totalorder %s30, 1
        %s623 = scalar_select %p622, %s30, 1
        %s624 = smul.addr %s623, 2
        %s625 = scalar_lea.vmem %s8, %s624
        %p626 = pneg %p256
        %p627 = pneg %p253
        %p628 = scmp.lt.s32.totalorder %s30, 1
        %s629 = scalar_select %p628, %s30, 1
        %s630 = smul.addr %s629, 2
        %s631 = scalar_lea.vmem %s9, %s630
        %p632 = pneg %p282
        %p633 = pneg %p279
        %p634 = scmp.lt.s32.totalorder %s30, 1
        %s635 = scalar_select %p634, %s30, 1
        %s636 = scalar_lea.vmem %s10, %s635
        %p637 = pneg %p308
        %p638 = pneg %p305
        %p639 = pneg %p334
        %p640 = pneg %p331
        %p641 = scmp.lt.s32.totalorder %s29, 0
        %s642 = scalar_select %p641, %s29, 0
        %s643 = smul.addr %s642, 2
        %s644 = scalar_lea.vmem %s0, %s643
        %p645 = scmp.lt.s32.totalorder %s30, 1
        %s646 = scalar_select %p645, %s30, 1
        %s647 = smul.addr %s646, 2
        %s648 = scalar_lea.vmem %s8, %s647
        %p649 = scmp.lt.s32.totalorder %s30, 1
        %s650 = scalar_select %p649, %s30, 1
        %s651 = smul.addr %s650, 2
        %s652 = scalar_lea.vmem %s9, %s651
        %p653 = scmp.lt.s32.totalorder %s30, 1
        %s654 = scalar_select %p653, %s30, 1
        %s655 = scalar_lea.vmem %s10, %s654
        %p657 = scmp.eq.s32.totalorder %s30, 0
        // Predicated region
        $region93: #{tpu_custom_call.1} parent=63 // pred_check
          %p658 = pneg %p657
        $region94: #{tpu_custom_call.1} parent=63 // pred_check_branch
          %660 = sbr.rel (%p658) target = $region96
        $region95: #{tpu_custom_call.1} parent=63 // pred_region
          %v661 = vld [vmem:[%s644] sm:$0x3]
          %v662 = vpack.c.bf16 %v661, %v661
          %v663 = vld [vmem:[#allocation3] sm:$0xff]
          %v664 = vld [vmem:[#allocation3 + $0x8] sm:$0xff]
          %v665 = vld [vmem:[#allocation3 + $0x10] sm:$0xff]
          %v666 = vld [vmem:[#allocation3 + $0x18] sm:$0xff]
          %v667 = vld [vmem:[#allocation3 + $0x20] sm:$0x33]
          %v668 = vld [vmem:[#allocation3 + $0x28] sm:$0x33]
          %v669 = vld [vmem:[#allocation3 + $0x30] sm:$0x33]
          %v670 = vld [vmem:[#allocation3 + $0x38] sm:$0x33]
          %v671 = vld [vmem:[#allocation6] sm:$0xff]
          %v673 = vperm.slane %v671, 0
          %v674 = vperm.slane %v671, 1
          %v675 = vperm.slane %v671, 2
          %v676 = vperm.slane %v671, 3
          %v677 = vperm.slane %v671, 4
          %v678 = vperm.slane %v671, 5
          %v679 = vperm.slane %v671, 6
          %v680 = vperm.slane %v671, 7
          %v697 = vunpack.c.l.b16 %v663
          %v698 = vunpack.c.h.b16 %v663
          %v699 = vunpack.c.l.b16 %v664
          %v700 = vunpack.c.h.b16 %v664
          %v701 = vunpack.c.l.b16 %v665
          %v702 = vunpack.c.h.b16 %v665
          %v703 = vunpack.c.l.b16 %v666
          %v704 = vunpack.c.h.b16 %v666
          %v705 = vunpack.c.l.b16 %v667
          %v706 = vunpack.c.h.b16 %v667
          %v707 = vunpack.c.l.b16 %v668
          %v708 = vunpack.c.h.b16 %v668
          %v709 = vunpack.c.l.b16 %v669
          %v710 = vunpack.c.h.b16 %v669
          %v711 = vunpack.c.l.b16 %v670
          %v712 = vunpack.c.h.b16 %v670
          %v713 = vpack.c.b16 %v705, %v697
          %v714 = vpack.c.b16 %v706, %v698
          %v715 = vpack.c.b16 %v707, %v699
          %v716 = vpack.c.b16 %v708, %v700
          %v717 = vpack.c.b16 %v709, %v701
          %v718 = vpack.c.b16 %v710, %v702
          %v719 = vpack.c.b16 %v711, %v703
          %v720 = vpack.c.b16 %v712, %v704
          %vm721 = vcmask 97280
          %v723 = vsel %vm721, %v662, 0
          %vm725 = vcmask 1045504
          %v727 = vsel %vm725, %v713, 0
          %v730 = vsel %vm725, %v714, 0
          %v733 = vsel %vm725, %v715, 0
          %v736 = vsel %vm725, %v716, 0
          %v739 = vsel %vm725, %v717, 0
          %v742 = vsel %vm725, %v718, 0
          %v745 = vsel %vm725, %v719, 0
          %v748 = vsel %vm725, %v720, 0
          %750 = vmatpush.bf16.msra.mxu0 0
          %751 = vmatpush.bf16.msra.mxu0 0
          %752 = vmatpush.bf16.msra.mxu0 0
          %753 = vmatpush.bf16.msra.mxu0 0
          %754 = vmatpush.bf16.msra.mxu0 0
          %755 = vmatpush.bf16.msra.mxu0 0
          %756 = vmatpush.bf16.msra.mxu0 0
          %757 = vmatpush.bf16.msra.mxu0 %v727
          %758 = vmatmul.bf16.gmra.mxu0 %v723
          %v759 = vpop.f32.mrf.mxu0
          %v760 = vadd.f32 %v673, %v759
          %v761 = vpop.f32.mrf.mxu0
          %762 = vdwg.mxu0
          %763 = vmatpush.bf16.msra.mxu0 0
          %764 = vmatpush.bf16.msra.mxu0 0
          %765 = vmatpush.bf16.msra.mxu0 0
          %766 = vmatpush.bf16.msra.mxu0 0
          %767 = vmatpush.bf16.msra.mxu0 0
          %768 = vmatpush.bf16.msra.mxu0 0
          %769 = vmatpush.bf16.msra.mxu0 0
          %770 = vmatpush.bf16.msra.mxu0 %v730
          %771 = vmatmul.bf16.gmra.mxu0 %v723
          %v772 = vpop.f32.mrf.mxu0
          %v773 = vadd.f32 %v674, %v772
          %v774 = vpop.f32.mrf.mxu0
          %775 = vdwg.mxu0
          %776 = vmatpush.bf16.msra.mxu0 0
          %777 = vmatpush.bf16.msra.mxu0 0
          %778 = vmatpush.bf16.msra.mxu0 0
          %779 = vmatpush.bf16.msra.mxu0 0
          %780 = vmatpush.bf16.msra.mxu0 0
          %781 = vmatpush.bf16.msra.mxu0 0
          %782 = vmatpush.bf16.msra.mxu0 0
          %783 = vmatpush.bf16.msra.mxu0 %v733
          %784 = vmatmul.bf16.gmra.mxu0 %v723
          %v785 = vpop.f32.mrf.mxu0
          %v786 = vadd.f32 %v675, %v785
          %v787 = vpop.f32.mrf.mxu0
          %788 = vdwg.mxu0
          %789 = vmatpush.bf16.msra.mxu0 0
          %790 = vmatpush.bf16.msra.mxu0 0
          %791 = vmatpush.bf16.msra.mxu0 0
          %792 = vmatpush.bf16.msra.mxu0 0
          %793 = vmatpush.bf16.msra.mxu0 0
          %794 = vmatpush.bf16.msra.mxu0 0
          %795 = vmatpush.bf16.msra.mxu0 0
          %796 = vmatpush.bf16.msra.mxu0 %v736
          %797 = vmatmul.bf16.gmra.mxu0 %v723
          %v798 = vpop.f32.mrf.mxu0
          %v799 = vadd.f32 %v676, %v798
          %v800 = vpop.f32.mrf.mxu0
          %801 = vdwg.mxu0
          %802 = vmatpush.bf16.msra.mxu0 0
          %803 = vmatpush.bf16.msra.mxu0 0
          %804 = vmatpush.bf16.msra.mxu0 0
          %805 = vmatpush.bf16.msra.mxu0 0
          %806 = vmatpush.bf16.msra.mxu0 0
          %807 = vmatpush.bf16.msra.mxu0 0
          %808 = vmatpush.bf16.msra.mxu0 0
          %809 = vmatpush.bf16.msra.mxu0 %v739
          %810 = vmatmul.bf16.gmra.mxu0 %v723
          %v811 = vpop.f32.mrf.mxu0
          %v812 = vadd.f32 %v677, %v811
          %v813 = vpop.f32.mrf.mxu0
          %814 = vdwg.mxu0
          %815 = vmatpush.bf16.msra.mxu0 0
          %816 = vmatpush.bf16.msra.mxu0 0
          %817 = vmatpush.bf16.msra.mxu0 0
          %818 = vmatpush.bf16.msra.mxu0 0
          %819 = vmatpush.bf16.msra.mxu0 0
          %820 = vmatpush.bf16.msra.mxu0 0
          %821 = vmatpush.bf16.msra.mxu0 0
          %822 = vmatpush.bf16.msra.mxu0 %v742
          %823 = vmatmul.bf16.gmra.mxu0 %v723
          %v824 = vpop.f32.mrf.mxu0
          %v825 = vadd.f32 %v678, %v824
          %v826 = vpop.f32.mrf.mxu0
          %827 = vdwg.mxu0
          %828 = vmatpush.bf16.msra.mxu0 0
          %829 = vmatpush.bf16.msra.mxu0 0
          %830 = vmatpush.bf16.msra.mxu0 0
          %831 = vmatpush.bf16.msra.mxu0 0
          %832 = vmatpush.bf16.msra.mxu0 0
          %833 = vmatpush.bf16.msra.mxu0 0
          %834 = vmatpush.bf16.msra.mxu0 0
          %835 = vmatpush.bf16.msra.mxu0 %v745
          %836 = vmatmul.bf16.gmra.mxu0 %v723
          %v837 = vpop.f32.mrf.mxu0
          %v838 = vadd.f32 %v679, %v837
          %v839 = vpop.f32.mrf.mxu0
          %840 = vdwg.mxu0
          %841 = vmatpush.bf16.msra.mxu0 0
          %842 = vmatpush.bf16.msra.mxu0 0
          %843 = vmatpush.bf16.msra.mxu0 0
          %844 = vmatpush.bf16.msra.mxu0 0
          %845 = vmatpush.bf16.msra.mxu0 0
          %846 = vmatpush.bf16.msra.mxu0 0
          %847 = vmatpush.bf16.msra.mxu0 0
          %848 = vmatpush.bf16.msra.mxu0 %v748
          %849 = vmatmul.bf16.gmra.mxu0 %v723
          %v850 = vpop.f32.mrf.mxu0
          %v851 = vadd.f32 %v680, %v850
          %v852 = vpop.f32.mrf.mxu0
          %853 = vdwg.mxu0
          %vm854 = vcmp.gt.f32.partialorder %v760, 0.0
          %vm855 = vcmp.gt.f32.partialorder %v773, 0.0
          %vm856 = vcmp.gt.f32.partialorder %v786, 0.0
          %vm857 = vcmp.gt.f32.partialorder %v799, 0.0
          %vm858 = vcmp.gt.f32.partialorder %v812, 0.0
          %vm859 = vcmp.gt.f32.partialorder %v825, 0.0
          %vm860 = vcmp.gt.f32.partialorder %v838, 0.0
          %vm861 = vcmp.gt.f32.partialorder %v851, 0.0
          %v862 = vmul.f32 %v760, 0.01
          %v863 = vmul.f32 %v773, 0.01
          %v864 = vmul.f32 %v786, 0.01
          %v865 = vmul.f32 %v799, 0.01
          %v866 = vmul.f32 %v812, 0.01
          %v867 = vmul.f32 %v825, 0.01
          %v868 = vmul.f32 %v838, 0.01
          %v869 = vmul.f32 %v851, 0.01
          %v870 = vsel %vm854, %v760, %v862
          %v871 = vsel %vm855, %v773, %v863
          %v872 = vsel %vm856, %v786, %v864
          %v873 = vsel %vm857, %v799, %v865
          %v874 = vsel %vm858, %v812, %v866
          %v875 = vsel %vm859, %v825, %v867
          %v876 = vsel %vm860, %v838, %v868
          %v877 = vsel %vm861, %v851, %v869
          %v882 = vrot.slane %v871, 6
          %v883 = vrot.slane %v872, 4
          %v884 = vrot.slane %v873, 2
          %vm885 = vcmask 1041408
          %v886 = vsel %vm885, %v870, %v882
          %vm887 = vcmask 1045508
          %v888 = vsel %vm887, %v883, %v884
          %vm889 = vcmask 1043456
          %v890 = vsel %vm889, %v886, %v888
          %892 = vst [vmem:[#allocation2] sm:$0xff] %v890
          %v897 = vrot.slane %v875, 6
          %v898 = vrot.slane %v876, 4
          %v899 = vrot.slane %v877, 2
          %v900 = vsel %vm885, %v874, %v897
          %v901 = vsel %vm887, %v898, %v899
          %v902 = vsel %vm889, %v900, %v901
          %s904 = scalar_lea.vmem [#allocation2], 8
          %905 = vst [vmem:[%s904] sm:$0xff] %v902
        $region96: #{tpu_custom_call.1} parent=63 // pred_fallthru
          _
        %s906 = smul.u32 %s30, 4
        %s907 = smul.addr %s906, 2
        %s908 = scalar_lea.vmem [#allocation2], %s907
        %v909 = vld [vmem:[%s908] sm:$0xff]
        %911 = vst [vmem:[#allocation1] ss:$4 sm:$0xff] %v909
        %v912 = vld.sshfl [vmem:[#allocation1] sm:$0xff pattern:$0x73625140]
        %v913 = vld.sshfl [vmem:[#allocation1 + $0x8] sm:$0xff pattern:$0x73625140]
        %v914 = vld.sshfl [vmem:[#allocation1 + $0x10] sm:$0xff pattern:$0x73625140]
        %v915 = vld.sshfl [vmem:[#allocation1 + $0x18] sm:$0xff pattern:$0x73625140]
        %v920 = vpack.c.bf16 %v912, %v912
        %v921 = vpack.c.bf16 %v913, %v913
        %v922 = vpack.c.bf16 %v914, %v914
        %v923 = vpack.c.bf16 %v915, %v915
        %v924 = vld [vmem:[%s531] sm:$0xff]
        %v925 = vld [vmem:[%s531 + $0x8] sm:$0xff]
        %v926 = vld [vmem:[%s531 + $0x10] sm:$0xff]
        %v927 = vld [vmem:[%s531 + $0x18] sm:$0xff]
        %v928 = vld [vmem:[%s531 + $0x20] sm:$0xff]
        %v929 = vld [vmem:[%s531 + $0x28] sm:$0xff]
        %v930 = vld [vmem:[%s531 + $0x30] sm:$0xff]
        %v931 = vld [vmem:[%s531 + $0x38] sm:$0xff]
        %v932 = vld [vmem:[%s531 + $0x40] sm:$0xff]
        %v933 = vld [vmem:[%s531 + $0x48] sm:$0xff]
        %v934 = vld [vmem:[%s531 + $0x50] sm:$0xff]
        %v935 = vld [vmem:[%s531 + $0x58] sm:$0xff]
        %v936 = vld [vmem:[%s531 + $0x60] sm:$0xff]
        %v937 = vld [vmem:[%s531 + $0x68] sm:$0xff]
        %v938 = vld [vmem:[%s531 + $0x70] sm:$0xff]
        %v939 = vld [vmem:[%s531 + $0x78] sm:$0xff]
        %v940 = vld [vmem:[%s531 + $0x80] sm:$0xff]
        %v941 = vld [vmem:[%s531 + $0x88] sm:$0xff]
        %v942 = vld [vmem:[%s531 + $0x90] sm:$0xff]
        %v943 = vld [vmem:[%s531 + $0x98] sm:$0xff]
        %v944 = vld [vmem:[%s531 + $0xa0] sm:$0xff]
        %v945 = vld [vmem:[%s531 + $0xa8] sm:$0xff]
        %v946 = vld [vmem:[%s531 + $0xb0] sm:$0xff]
        %v947 = vld [vmem:[%s531 + $0xb8] sm:$0xff]
        %v948 = vld [vmem:[%s531 + $0xc0] sm:$0xff]
        %v949 = vld [vmem:[%s531 + $0xc8] sm:$0xff]
        %v950 = vld [vmem:[%s531 + $0xd0] sm:$0xff]
        %v951 = vld [vmem:[%s531 + $0xd8] sm:$0xff]
        %v952 = vld [vmem:[%s531 + $0xe0] sm:$0xff]
        %v953 = vld [vmem:[%s531 + $0xe8] sm:$0xff]
        %v954 = vld [vmem:[%s531 + $0xf0] sm:$0xff]
        %v955 = vld [vmem:[%s531 + $0xf8] sm:$0xff]
        %v956 = vld [vmem:[%s531 + $0x100] sm:$0xff]
        %v957 = vld [vmem:[%s531 + $0x108] sm:$0xff]
        %v958 = vld [vmem:[%s531 + $0x110] sm:$0xff]
        %v959 = vld [vmem:[%s531 + $0x118] sm:$0xff]
        %v960 = vld [vmem:[%s531 + $0x120] sm:$0xff]
        %v961 = vld [vmem:[%s531 + $0x128] sm:$0xff]
        %v962 = vld [vmem:[%s531 + $0x130] sm:$0xff]
        %v963 = vld [vmem:[%s531 + $0x138] sm:$0xff]
        %v964 = vld [vmem:[%s531 + $0x140] sm:$0xff]
        %v965 = vld [vmem:[%s531 + $0x148] sm:$0xff]
        %v966 = vld [vmem:[%s531 + $0x150] sm:$0xff]
        %v967 = vld [vmem:[%s531 + $0x158] sm:$0xff]
        %v968 = vld [vmem:[%s531 + $0x160] sm:$0xff]
        %v969 = vld [vmem:[%s531 + $0x168] sm:$0xff]
        %v970 = vld [vmem:[%s531 + $0x170] sm:$0xff]
        %v971 = vld [vmem:[%s531 + $0x178] sm:$0xff]
        %v972 = vld [vmem:[%s531 + $0x180] sm:$0xff]
        %v973 = vld [vmem:[%s531 + $0x188] sm:$0xff]
        %v974 = vld [vmem:[%s531 + $0x190] sm:$0xff]
        %v975 = vld [vmem:[%s531 + $0x198] sm:$0xff]
        %v976 = vld [vmem:[%s531 + $0x1a0] sm:$0xff]
        %v977 = vld [vmem:[%s531 + $0x1a8] sm:$0xff]
        %v978 = vld [vmem:[%s531 + $0x1b0] sm:$0xff]
        %v979 = vld [vmem:[%s531 + $0x1b8] sm:$0xff]
        %v980 = vld [vmem:[%s531 + $0x1c0] sm:$0xff]
        %v981 = vld [vmem:[%s531 + $0x1c8] sm:$0xff]
        %v982 = vld [vmem:[%s531 + $0x1d0] sm:$0xff]
        %v983 = vld [vmem:[%s531 + $0x1d8] sm:$0xff]
        %v984 = vld [vmem:[%s531 + $0x1e0] sm:$0xff]
        %v985 = vld [vmem:[%s531 + $0x1e8] sm:$0xff]
        %v986 = vld [vmem:[%s531 + $0x1f0] sm:$0xff]
        %v987 = vld [vmem:[%s531 + $0x1f8] sm:$0xff]
        %v988 = vld [vmem:[%s531 + $0x200] sm:$0xff]
        %v989 = vld [vmem:[%s531 + $0x208] sm:$0xff]
        %v990 = vld [vmem:[%s531 + $0x210] sm:$0xff]
        %v991 = vld [vmem:[%s531 + $0x218] sm:$0xff]
        %v992 = vld [vmem:[%s531 + $0x220] sm:$0xff]
        %v993 = vld [vmem:[%s531 + $0x228] sm:$0xff]
        %v994 = vld [vmem:[%s531 + $0x230] sm:$0xff]
        %v995 = vld [vmem:[%s531 + $0x238] sm:$0xff]
        %v996 = vld [vmem:[%s531 + $0x240] sm:$0xff]
        %v997 = vld [vmem:[%s531 + $0x248] sm:$0xff]
        %v998 = vld [vmem:[%s531 + $0x250] sm:$0xff]
        %v999 = vld [vmem:[%s531 + $0x258] sm:$0xff]
        %v1000 = vld [vmem:[%s531 + $0x260] sm:$0xff]
        %v1001 = vld [vmem:[%s531 + $0x268] sm:$0xff]
        %v1002 = vld [vmem:[%s531 + $0x270] sm:$0xff]
        %v1003 = vld [vmem:[%s531 + $0x278] sm:$0xff]
        %v1004 = vld [vmem:[%s531 + $0x280] sm:$0xff]
        %v1005 = vld [vmem:[%s531 + $0x288] sm:$0xff]
        %v1006 = vld [vmem:[%s531 + $0x290] sm:$0xff]
        %v1007 = vld [vmem:[%s531 + $0x298] sm:$0xff]
        %v1008 = vld [vmem:[%s531 + $0x2a0] sm:$0xff]
        %v1009 = vld [vmem:[%s531 + $0x2a8] sm:$0xff]
        %v1010 = vld [vmem:[%s531 + $0x2b0] sm:$0xff]
        %v1011 = vld [vmem:[%s531 + $0x2b8] sm:$0xff]
        %v1012 = vld [vmem:[%s531 + $0x2c0] sm:$0xff]
        %v1013 = vld [vmem:[%s531 + $0x2c8] sm:$0xff]
        %v1014 = vld [vmem:[%s531 + $0x2d0] sm:$0xff]
        %v1015 = vld [vmem:[%s531 + $0x2d8] sm:$0xff]
        %v1016 = vld [vmem:[%s531 + $0x2e0] sm:$0xff]
        %v1017 = vld [vmem:[%s531 + $0x2e8] sm:$0xff]
        %v1018 = vld [vmem:[%s531 + $0x2f0] sm:$0xff]
        %v1019 = vld [vmem:[%s531 + $0x2f8] sm:$0xff]
        %v1020 = vld [vmem:[%s531 + $0x300] sm:$0xff]
        %v1021 = vld [vmem:[%s531 + $0x308] sm:$0xff]
        %v1022 = vld [vmem:[%s531 + $0x310] sm:$0xff]
        %v1023 = vld [vmem:[%s531 + $0x318] sm:$0xff]
        %v1024 = vld [vmem:[%s531 + $0x320] sm:$0xff]
        %v1025 = vld [vmem:[%s531 + $0x328] sm:$0xff]
        %v1026 = vld [vmem:[%s531 + $0x330] sm:$0xff]
        %v1027 = vld [vmem:[%s531 + $0x338] sm:$0xff]
        %v1028 = vld [vmem:[%s531 + $0x340] sm:$0xff]
        %v1029 = vld [vmem:[%s531 + $0x348] sm:$0xff]
        %v1030 = vld [vmem:[%s531 + $0x350] sm:$0xff]
        %v1031 = vld [vmem:[%s531 + $0x358] sm:$0xff]
        %v1032 = vld [vmem:[%s531 + $0x360] sm:$0xff]
        %v1033 = vld [vmem:[%s531 + $0x368] sm:$0xff]
        %v1034 = vld [vmem:[%s531 + $0x370] sm:$0xff]
        %v1035 = vld [vmem:[%s531 + $0x378] sm:$0xff]
        %v1036 = vld [vmem:[%s531 + $0x380] sm:$0xff]
        %v1037 = vld [vmem:[%s531 + $0x388] sm:$0xff]
        %v1038 = vld [vmem:[%s531 + $0x390] sm:$0xff]
        %v1039 = vld [vmem:[%s531 + $0x398] sm:$0xff]
        %v1040 = vld [vmem:[%s531 + $0x3a0] sm:$0xff]
        %v1041 = vld [vmem:[%s531 + $0x3a8] sm:$0xff]
        %v1042 = vld [vmem:[%s531 + $0x3b0] sm:$0xff]
        %v1043 = vld [vmem:[%s531 + $0x3b8] sm:$0xff]
        %v1044 = vld [vmem:[%s531 + $0x3c0] sm:$0xff]
        %v1045 = vld [vmem:[%s531 + $0x3c8] sm:$0xff]
        %v1046 = vld [vmem:[%s531 + $0x3d0] sm:$0xff]
        %v1047 = vld [vmem:[%s531 + $0x3d8] sm:$0xff]
        %v1048 = vld [vmem:[%s531 + $0x3e0] sm:$0xff]
        %v1049 = vld [vmem:[%s531 + $0x3e8] sm:$0xff]
        %v1050 = vld [vmem:[%s531 + $0x3f0] sm:$0xff]
        %v1051 = vld [vmem:[%s531 + $0x3f8] sm:$0xff]
        %v1052 = vld [vmem:[%s541] sm:$0xf]
        %v1054 = vperm.slane %v1052, 0
        %v1055 = vperm.slane %v1052, 1
        %v1056 = vperm.slane %v1052, 2
        %v1057 = vperm.slane %v1052, 3
        %v1190 = vunpack.c.l.b16 %v924
        %v1191 = vunpack.c.h.b16 %v924
        %v1192 = vunpack.c.l.b16 %v925
        %v1193 = vunpack.c.h.b16 %v925
        %v1194 = vunpack.c.l.b16 %v926
        %v1195 = vunpack.c.h.b16 %v926
        %v1196 = vunpack.c.l.b16 %v927
        %v1197 = vunpack.c.h.b16 %v927
        %v1198 = vunpack.c.l.b16 %v928
        %v1199 = vunpack.c.h.b16 %v928
        %v1200 = vunpack.c.l.b16 %v929
        %v1201 = vunpack.c.h.b16 %v929
        %v1202 = vunpack.c.l.b16 %v930
        %v1203 = vunpack.c.h.b16 %v930
        %v1204 = vunpack.c.l.b16 %v931
        %v1205 = vunpack.c.h.b16 %v931
        %v1206 = vunpack.c.l.b16 %v932
        %v1207 = vunpack.c.h.b16 %v932
        %v1208 = vunpack.c.l.b16 %v933
        %v1209 = vunpack.c.h.b16 %v933
        %v1210 = vunpack.c.l.b16 %v934
        %v1211 = vunpack.c.h.b16 %v934
        %v1212 = vunpack.c.l.b16 %v935
        %v1213 = vunpack.c.h.b16 %v935
        %v1214 = vunpack.c.l.b16 %v936
        %v1215 = vunpack.c.h.b16 %v936
        %v1216 = vunpack.c.l.b16 %v937
        %v1217 = vunpack.c.h.b16 %v937
        %v1218 = vunpack.c.l.b16 %v938
        %v1219 = vunpack.c.h.b16 %v938
        %v1220 = vunpack.c.l.b16 %v939
        %v1221 = vunpack.c.h.b16 %v939
        %v1222 = vunpack.c.l.b16 %v940
        %v1223 = vunpack.c.h.b16 %v940
        %v1224 = vunpack.c.l.b16 %v941
        %v1225 = vunpack.c.h.b16 %v941
        %v1226 = vunpack.c.l.b16 %v942
        %v1227 = vunpack.c.h.b16 %v942
        %v1228 = vunpack.c.l.b16 %v943
        %v1229 = vunpack.c.h.b16 %v943
        %v1230 = vunpack.c.l.b16 %v944
        %v1231 = vunpack.c.h.b16 %v944
        %v1232 = vunpack.c.l.b16 %v945
        %v1233 = vunpack.c.h.b16 %v945
        %v1234 = vunpack.c.l.b16 %v946
        %v1235 = vunpack.c.h.b16 %v946
        %v1236 = vunpack.c.l.b16 %v947
        %v1237 = vunpack.c.h.b16 %v947
        %v1238 = vunpack.c.l.b16 %v948
        %v1239 = vunpack.c.h.b16 %v948
        %v1240 = vunpack.c.l.b16 %v949
        %v1241 = vunpack.c.h.b16 %v949
        %v1242 = vunpack.c.l.b16 %v950
        %v1243 = vunpack.c.h.b16 %v950
        %v1244 = vunpack.c.l.b16 %v951
        %v1245 = vunpack.c.h.b16 %v951
        %v1246 = vunpack.c.l.b16 %v952
        %v1247 = vunpack.c.h.b16 %v952
        %v1248 = vunpack.c.l.b16 %v953
        %v1249 = vunpack.c.h.b16 %v953
        %v1250 = vunpack.c.l.b16 %v954
        %v1251 = vunpack.c.h.b16 %v954
        %v1252 = vunpack.c.l.b16 %v955
        %v1253 = vunpack.c.h.b16 %v955
        %v1254 = vunpack.c.l.b16 %v956
        %v1255 = vunpack.c.h.b16 %v956
        %v1256 = vunpack.c.l.b16 %v957
        %v1257 = vunpack.c.h.b16 %v957
        %v1258 = vunpack.c.l.b16 %v958
        %v1259 = vunpack.c.h.b16 %v958
        %v1260 = vunpack.c.l.b16 %v959
        %v1261 = vunpack.c.h.b16 %v959
        %v1262 = vunpack.c.l.b16 %v960
        %v1263 = vunpack.c.h.b16 %v960
        %v1264 = vunpack.c.l.b16 %v961
        %v1265 = vunpack.c.h.b16 %v961
        %v1266 = vunpack.c.l.b16 %v962
        %v1267 = vunpack.c.h.b16 %v962
        %v1268 = vunpack.c.l.b16 %v963
        %v1269 = vunpack.c.h.b16 %v963
        %v1270 = vunpack.c.l.b16 %v964
        %v1271 = vunpack.c.h.b16 %v964
        %v1272 = vunpack.c.l.b16 %v965
        %v1273 = vunpack.c.h.b16 %v965
        %v1274 = vunpack.c.l.b16 %v966
        %v1275 = vunpack.c.h.b16 %v966
        %v1276 = vunpack.c.l.b16 %v967
        %v1277 = vunpack.c.h.b16 %v967
        %v1278 = vunpack.c.l.b16 %v968
        %v1279 = vunpack.c.h.b16 %v968
        %v1280 = vunpack.c.l.b16 %v969
        %v1281 = vunpack.c.h.b16 %v969
        %v1282 = vunpack.c.l.b16 %v970
        %v1283 = vunpack.c.h.b16 %v970
        %v1284 = vunpack.c.l.b16 %v971
        %v1285 = vunpack.c.h.b16 %v971
        %v1286 = vunpack.c.l.b16 %v972
        %v1287 = vunpack.c.h.b16 %v972
        %v1288 = vunpack.c.l.b16 %v973
        %v1289 = vunpack.c.h.b16 %v973
        %v1290 = vunpack.c.l.b16 %v974
        %v1291 = vunpack.c.h.b16 %v974
        %v1292 = vunpack.c.l.b16 %v975
        %v1293 = vunpack.c.h.b16 %v975
        %v1294 = vunpack.c.l.b16 %v976
        %v1295 = vunpack.c.h.b16 %v976
        %v1296 = vunpack.c.l.b16 %v977
        %v1297 = vunpack.c.h.b16 %v977
        %v1298 = vunpack.c.l.b16 %v978
        %v1299 = vunpack.c.h.b16 %v978
        %v1300 = vunpack.c.l.b16 %v979
        %v1301 = vunpack.c.h.b16 %v979
        %v1302 = vunpack.c.l.b16 %v980
        %v1303 = vunpack.c.h.b16 %v980
        %v1304 = vunpack.c.l.b16 %v981
        %v1305 = vunpack.c.h.b16 %v981
        %v1306 = vunpack.c.l.b16 %v982
        %v1307 = vunpack.c.h.b16 %v982
        %v1308 = vunpack.c.l.b16 %v983
        %v1309 = vunpack.c.h.b16 %v983
        %v1310 = vunpack.c.l.b16 %v984
        %v1311 = vunpack.c.h.b16 %v984
        %v1312 = vunpack.c.l.b16 %v985
        %v1313 = vunpack.c.h.b16 %v985
        %v1314 = vunpack.c.l.b16 %v986
        %v1315 = vunpack.c.h.b16 %v986
        %v1316 = vunpack.c.l.b16 %v987
        %v1317 = vunpack.c.h.b16 %v987
        %v1318 = vunpack.c.l.b16 %v988
        %v1319 = vunpack.c.h.b16 %v988
        %v1320 = vunpack.c.l.b16 %v989
        %v1321 = vunpack.c.h.b16 %v989
        %v1322 = vunpack.c.l.b16 %v990
        %v1323 = vunpack.c.h.b16 %v990
        %v1324 = vunpack.c.l.b16 %v991
        %v1325 = vunpack.c.h.b16 %v991
        %v1326 = vunpack.c.l.b16 %v992
        %v1327 = vunpack.c.h.b16 %v992
        %v1328 = vunpack.c.l.b16 %v993
        %v1329 = vunpack.c.h.b16 %v993
        %v1330 = vunpack.c.l.b16 %v994
        %v1331 = vunpack.c.h.b16 %v994
        %v1332 = vunpack.c.l.b16 %v995
        %v1333 = vunpack.c.h.b16 %v995
        %v1334 = vunpack.c.l.b16 %v996
        %v1335 = vunpack.c.h.b16 %v996
        %v1336 = vunpack.c.l.b16 %v997
        %v1337 = vunpack.c.h.b16 %v997
        %v1338 = vunpack.c.l.b16 %v998
        %v1339 = vunpack.c.h.b16 %v998
        %v1340 = vunpack.c.l.b16 %v999
        %v1341 = vunpack.c.h.b16 %v999
        %v1342 = vunpack.c.l.b16 %v1000
        %v1343 = vunpack.c.h.b16 %v1000
        %v1344 = vunpack.c.l.b16 %v1001
        %v1345 = vunpack.c.h.b16 %v1001
        %v1346 = vunpack.c.l.b16 %v1002
        %v1347 = vunpack.c.h.b16 %v1002
        %v1348 = vunpack.c.l.b16 %v1003
        %v1349 = vunpack.c.h.b16 %v1003
        %v1350 = vunpack.c.l.b16 %v1004
        %v1351 = vunpack.c.h.b16 %v1004
        %v1352 = vunpack.c.l.b16 %v1005
        %v1353 = vunpack.c.h.b16 %v1005
        %v1354 = vunpack.c.l.b16 %v1006
        %v1355 = vunpack.c.h.b16 %v1006
        %v1356 = vunpack.c.l.b16 %v1007
        %v1357 = vunpack.c.h.b16 %v1007
        %v1358 = vunpack.c.l.b16 %v1008
        %v1359 = vunpack.c.h.b16 %v1008
        %v1360 = vunpack.c.l.b16 %v1009
        %v1361 = vunpack.c.h.b16 %v1009
        %v1362 = vunpack.c.l.b16 %v1010
        %v1363 = vunpack.c.h.b16 %v1010
        %v1364 = vunpack.c.l.b16 %v1011
        %v1365 = vunpack.c.h.b16 %v1011
        %v1366 = vunpack.c.l.b16 %v1012
        %v1367 = vunpack.c.h.b16 %v1012
        %v1368 = vunpack.c.l.b16 %v1013
        %v1369 = vunpack.c.h.b16 %v1013
        %v1370 = vunpack.c.l.b16 %v1014
        %v1371 = vunpack.c.h.b16 %v1014
        %v1372 = vunpack.c.l.b16 %v1015
        %v1373 = vunpack.c.h.b16 %v1015
        %v1374 = vunpack.c.l.b16 %v1016
        %v1375 = vunpack.c.h.b16 %v1016
        %v1376 = vunpack.c.l.b16 %v1017
        %v1377 = vunpack.c.h.b16 %v1017
        %v1378 = vunpack.c.l.b16 %v1018
        %v1379 = vunpack.c.h.b16 %v1018
        %v1380 = vunpack.c.l.b16 %v1019
        %v1381 = vunpack.c.h.b16 %v1019
        %v1382 = vunpack.c.l.b16 %v1020
        %v1383 = vunpack.c.h.b16 %v1020
        %v1384 = vunpack.c.l.b16 %v1021
        %v1385 = vunpack.c.h.b16 %v1021
        %v1386 = vunpack.c.l.b16 %v1022
        %v1387 = vunpack.c.h.b16 %v1022
        %v1388 = vunpack.c.l.b16 %v1023
        %v1389 = vunpack.c.h.b16 %v1023
        %v1390 = vunpack.c.l.b16 %v1024
        %v1391 = vunpack.c.h.b16 %v1024
        %v1392 = vunpack.c.l.b16 %v1025
        %v1393 = vunpack.c.h.b16 %v1025
        %v1394 = vunpack.c.l.b16 %v1026
        %v1395 = vunpack.c.h.b16 %v1026
        %v1396 = vunpack.c.l.b16 %v1027
        %v1397 = vunpack.c.h.b16 %v1027
        %v1398 = vunpack.c.l.b16 %v1028
        %v1399 = vunpack.c.h.b16 %v1028
        %v1400 = vunpack.c.l.b16 %v1029
        %v1401 = vunpack.c.h.b16 %v1029
        %v1402 = vunpack.c.l.b16 %v1030
        %v1403 = vunpack.c.h.b16 %v1030
        %v1404 = vunpack.c.l.b16 %v1031
        %v1405 = vunpack.c.h.b16 %v1031
        %v1406 = vunpack.c.l.b16 %v1032
        %v1407 = vunpack.c.h.b16 %v1032
        %v1408 = vunpack.c.l.b16 %v1033
        %v1409 = vunpack.c.h.b16 %v1033
        %v1410 = vunpack.c.l.b16 %v1034
        %v1411 = vunpack.c.h.b16 %v1034
        %v1412 = vunpack.c.l.b16 %v1035
        %v1413 = vunpack.c.h.b16 %v1035
        %v1414 = vunpack.c.l.b16 %v1036
        %v1415 = vunpack.c.h.b16 %v1036
        %v1416 = vunpack.c.l.b16 %v1037
        %v1417 = vunpack.c.h.b16 %v1037
        %v1418 = vunpack.c.l.b16 %v1038
        %v1419 = vunpack.c.h.b16 %v1038
        %v1420 = vunpack.c.l.b16 %v1039
        %v1421 = vunpack.c.h.b16 %v1039
        %v1422 = vunpack.c.l.b16 %v1040
        %v1423 = vunpack.c.h.b16 %v1040
        %v1424 = vunpack.c.l.b16 %v1041
        %v1425 = vunpack.c.h.b16 %v1041
        %v1426 = vunpack.c.l.b16 %v1042
        %v1427 = vunpack.c.h.b16 %v1042
        %v1428 = vunpack.c.l.b16 %v1043
        %v1429 = vunpack.c.h.b16 %v1043
        %v1430 = vunpack.c.l.b16 %v1044
        %v1431 = vunpack.c.h.b16 %v1044
        %v1432 = vunpack.c.l.b16 %v1045
        %v1433 = vunpack.c.h.b16 %v1045
        %v1434 = vunpack.c.l.b16 %v1046
        %v1435 = vunpack.c.h.b16 %v1046
        %v1436 = vunpack.c.l.b16 %v1047
        %v1437 = vunpack.c.h.b16 %v1047
        %v1438 = vunpack.c.l.b16 %v1048
        %v1439 = vunpack.c.h.b16 %v1048
        %v1440 = vunpack.c.l.b16 %v1049
        %v1441 = vunpack.c.h.b16 %v1049
        %v1442 = vunpack.c.l.b16 %v1050
        %v1443 = vunpack.c.h.b16 %v1050
        %v1444 = vunpack.c.l.b16 %v1051
        %v1445 = vunpack.c.h.b16 %v1051
        %v1446 = vpack.c.b16 %v1194, %v1190
        %v1447 = vpack.c.b16 %v1195, %v1191
        %v1448 = vpack.c.b16 %v1196, %v1192
        %v1449 = vpack.c.b16 %v1197, %v1193
        %v1450 = vpack.c.b16 %v1202, %v1198
        %v1451 = vpack.c.b16 %v1203, %v1199
        %v1452 = vpack.c.b16 %v1204, %v1200
        %v1453 = vpack.c.b16 %v1205, %v1201
        %v1454 = vpack.c.b16 %v1210, %v1206
        %v1455 = vpack.c.b16 %v1211, %v1207
        %v1456 = vpack.c.b16 %v1212, %v1208
        %v1457 = vpack.c.b16 %v1213, %v1209
        %v1458 = vpack.c.b16 %v1218, %v1214
        %v1459 = vpack.c.b16 %v1219, %v1215
        %v1460 = vpack.c.b16 %v1220, %v1216
        %v1461 = vpack.c.b16 %v1221, %v1217
        %v1462 = vpack.c.b16 %v1226, %v1222
        %v1463 = vpack.c.b16 %v1227, %v1223
        %v1464 = vpack.c.b16 %v1228, %v1224
        %v1465 = vpack.c.b16 %v1229, %v1225
        %v1466 = vpack.c.b16 %v1234, %v1230
        %v1467 = vpack.c.b16 %v1235, %v1231
        %v1468 = vpack.c.b16 %v1236, %v1232
        %v1469 = vpack.c.b16 %v1237, %v1233
        %v1470 = vpack.c.b16 %v1242, %v1238
        %v1471 = vpack.c.b16 %v1243, %v1239
        %v1472 = vpack.c.b16 %v1244, %v1240
        %v1473 = vpack.c.b16 %v1245, %v1241
        %v1474 = vpack.c.b16 %v1250, %v1246
        %v1475 = vpack.c.b16 %v1251, %v1247
        %v1476 = vpack.c.b16 %v1252, %v1248
        %v1477 = vpack.c.b16 %v1253, %v1249
        %v1478 = vpack.c.b16 %v1258, %v1254
        %v1479 = vpack.c.b16 %v1259, %v1255
        %v1480 = vpack.c.b16 %v1260, %v1256
        %v1481 = vpack.c.b16 %v1261, %v1257
        %v1482 = vpack.c.b16 %v1266, %v1262
        %v1483 = vpack.c.b16 %v1267, %v1263
        %v1484 = vpack.c.b16 %v1268, %v1264
        %v1485 = vpack.c.b16 %v1269, %v1265
        %v1486 = vpack.c.b16 %v1274, %v1270
        %v1487 = vpack.c.b16 %v1275, %v1271
        %v1488 = vpack.c.b16 %v1276, %v1272
        %v1489 = vpack.c.b16 %v1277, %v1273
        %v1490 = vpack.c.b16 %v1282, %v1278
        %v1491 = vpack.c.b16 %v1283, %v1279
        %v1492 = vpack.c.b16 %v1284, %v1280
        %v1493 = vpack.c.b16 %v1285, %v1281
        %v1494 = vpack.c.b16 %v1290, %v1286
        %v1495 = vpack.c.b16 %v1291, %v1287
        %v1496 = vpack.c.b16 %v1292, %v1288
        %v1497 = vpack.c.b16 %v1293, %v1289
        %v1498 = vpack.c.b16 %v1298, %v1294
        %v1499 = vpack.c.b16 %v1299, %v1295
        %v1500 = vpack.c.b16 %v1300, %v1296
        %v1501 = vpack.c.b16 %v1301, %v1297
        %v1502 = vpack.c.b16 %v1306, %v1302
        %v1503 = vpack.c.b16 %v1307, %v1303
        %v1504 = vpack.c.b16 %v1308, %v1304
        %v1505 = vpack.c.b16 %v1309, %v1305
        %v1506 = vpack.c.b16 %v1314, %v1310
        %v1507 = vpack.c.b16 %v1315, %v1311
        %v1508 = vpack.c.b16 %v1316, %v1312
        %v1509 = vpack.c.b16 %v1317, %v1313
        %v1510 = vpack.c.b16 %v1322, %v1318
        %v1511 = vpack.c.b16 %v1323, %v1319
        %v1512 = vpack.c.b16 %v1324, %v1320
        %v1513 = vpack.c.b16 %v1325, %v1321
        %v1514 = vpack.c.b16 %v1330, %v1326
        %v1515 = vpack.c.b16 %v1331, %v1327
        %v1516 = vpack.c.b16 %v1332, %v1328
        %v1517 = vpack.c.b16 %v1333, %v1329
        %v1518 = vpack.c.b16 %v1338, %v1334
        %v1519 = vpack.c.b16 %v1339, %v1335
        %v1520 = vpack.c.b16 %v1340, %v1336
        %v1521 = vpack.c.b16 %v1341, %v1337
        %v1522 = vpack.c.b16 %v1346, %v1342
        %v1523 = vpack.c.b16 %v1347, %v1343
        %v1524 = vpack.c.b16 %v1348, %v1344
        %v1525 = vpack.c.b16 %v1349, %v1345
        %v1526 = vpack.c.b16 %v1354, %v1350
        %v1527 = vpack.c.b16 %v1355, %v1351
        %v1528 = vpack.c.b16 %v1356, %v1352
        %v1529 = vpack.c.b16 %v1357, %v1353
        %v1530 = vpack.c.b16 %v1362, %v1358
        %v1531 = vpack.c.b16 %v1363, %v1359
        %v1532 = vpack.c.b16 %v1364, %v1360
        %v1533 = vpack.c.b16 %v1365, %v1361
        %v1534 = vpack.c.b16 %v1370, %v1366
        %v1535 = vpack.c.b16 %v1371, %v1367
        %v1536 = vpack.c.b16 %v1372, %v1368
        %v1537 = vpack.c.b16 %v1373, %v1369
        %v1538 = vpack.c.b16 %v1378, %v1374
        %v1539 = vpack.c.b16 %v1379, %v1375
        %v1540 = vpack.c.b16 %v1380, %v1376
        %v1541 = vpack.c.b16 %v1381, %v1377
        %v1542 = vpack.c.b16 %v1386, %v1382
        %v1543 = vpack.c.b16 %v1387, %v1383
        %v1544 = vpack.c.b16 %v1388, %v1384
        %v1545 = vpack.c.b16 %v1389, %v1385
        %v1546 = vpack.c.b16 %v1394, %v1390
        %v1547 = vpack.c.b16 %v1395, %v1391
        %v1548 = vpack.c.b16 %v1396, %v1392
        %v1549 = vpack.c.b16 %v1397, %v1393
        %v1550 = vpack.c.b16 %v1402, %v1398
        %v1551 = vpack.c.b16 %v1403, %v1399
        %v1552 = vpack.c.b16 %v1404, %v1400
        %v1553 = vpack.c.b16 %v1405, %v1401
        %v1554 = vpack.c.b16 %v1410, %v1406
        %v1555 = vpack.c.b16 %v1411, %v1407
        %v1556 = vpack.c.b16 %v1412, %v1408
        %v1557 = vpack.c.b16 %v1413, %v1409
        %v1558 = vpack.c.b16 %v1418, %v1414
        %v1559 = vpack.c.b16 %v1419, %v1415
        %v1560 = vpack.c.b16 %v1420, %v1416
        %v1561 = vpack.c.b16 %v1421, %v1417
        %v1562 = vpack.c.b16 %v1426, %v1422
        %v1563 = vpack.c.b16 %v1427, %v1423
        %v1564 = vpack.c.b16 %v1428, %v1424
        %v1565 = vpack.c.b16 %v1429, %v1425
        %v1566 = vpack.c.b16 %v1434, %v1430
        %v1567 = vpack.c.b16 %v1435, %v1431
        %v1568 = vpack.c.b16 %v1436, %v1432
        %v1569 = vpack.c.b16 %v1437, %v1433
        %v1570 = vpack.c.b16 %v1442, %v1438
        %v1571 = vpack.c.b16 %v1443, %v1439
        %v1572 = vpack.c.b16 %v1444, %v1440
        %v1573 = vpack.c.b16 %v1445, %v1441
        %1702 = vmatpush.bf16.msra.mxu0 %v1474
        %1703 = vmatpush.bf16.msra.mxu0 %v1470
        %1704 = vmatpush.bf16.msra.mxu0 %v1466
        %1705 = vmatpush.bf16.msra.mxu0 %v1462
        %1706 = vmatpush.bf16.msra.mxu0 %v1458
        %1707 = vmatpush.bf16.msra.mxu0 %v1454
        %1708 = vmatpush.bf16.msra.mxu0 %v1450
        %1709 = vmatpush.bf16.msra.mxu0 %v1446
        %1710 = vmatmul.bf16.gmra.mxu0 %v920
        %v1711 = vpop.f32.mrf.mxu0
        %v1712 = vadd.f32 %v1054, %v1711
        %v1713 = vpop.f32.mrf.mxu0
        %1714 = vdwg.mxu0
        %1715 = vmatpush.bf16.msra.mxu0 %v1506
        %1716 = vmatpush.bf16.msra.mxu0 %v1502
        %1717 = vmatpush.bf16.msra.mxu0 %v1498
        %1718 = vmatpush.bf16.msra.mxu0 %v1494
        %1719 = vmatpush.bf16.msra.mxu0 %v1490
        %1720 = vmatpush.bf16.msra.mxu0 %v1486
        %1721 = vmatpush.bf16.msra.mxu0 %v1482
        %1722 = vmatpush.bf16.msra.mxu0 %v1478
        %1723 = vmatmul.bf16.gmra.mxu0 %v921
        %v1724 = vpop.f32.mrf.mxu0
        %v1725 = vadd.f32 %v1712, %v1724
        %v1726 = vpop.f32.mrf.mxu0
        %1727 = vdwg.mxu0
        %1728 = vmatpush.bf16.msra.mxu0 %v1538
        %1729 = vmatpush.bf16.msra.mxu0 %v1534
        %1730 = vmatpush.bf16.msra.mxu0 %v1530
        %1731 = vmatpush.bf16.msra.mxu0 %v1526
        %1732 = vmatpush.bf16.msra.mxu0 %v1522
        %1733 = vmatpush.bf16.msra.mxu0 %v1518
        %1734 = vmatpush.bf16.msra.mxu0 %v1514
        %1735 = vmatpush.bf16.msra.mxu0 %v1510
        %1736 = vmatmul.bf16.gmra.mxu0 %v922
        %v1737 = vpop.f32.mrf.mxu0
        %v1738 = vadd.f32 %v1725, %v1737
        %v1739 = vpop.f32.mrf.mxu0
        %1740 = vdwg.mxu0
        %1741 = vmatpush.bf16.msra.mxu0 %v1570
        %1742 = vmatpush.bf16.msra.mxu0 %v1566
        %1743 = vmatpush.bf16.msra.mxu0 %v1562
        %1744 = vmatpush.bf16.msra.mxu0 %v1558
        %1745 = vmatpush.bf16.msra.mxu0 %v1554
        %1746 = vmatpush.bf16.msra.mxu0 %v1550
        %1747 = vmatpush.bf16.msra.mxu0 %v1546
        %1748 = vmatpush.bf16.msra.mxu0 %v1542
        %1749 = vmatmul.bf16.gmra.mxu0 %v923
        %v1750 = vpop.f32.mrf.mxu0
        %v1751 = vadd.f32 %v1738, %v1750
        %v1752 = vpop.f32.mrf.mxu0
        %1753 = vdwg.mxu0
        %1754 = vmatpush.bf16.msra.mxu0 %v1475
        %1755 = vmatpush.bf16.msra.mxu0 %v1471
        %1756 = vmatpush.bf16.msra.mxu0 %v1467
        %1757 = vmatpush.bf16.msra.mxu0 %v1463
        %1758 = vmatpush.bf16.msra.mxu0 %v1459
        %1759 = vmatpush.bf16.msra.mxu0 %v1455
        %1760 = vmatpush.bf16.msra.mxu0 %v1451
        %1761 = vmatpush.bf16.msra.mxu0 %v1447
        %1762 = vmatmul.bf16.gmra.mxu0 %v920
        %v1763 = vpop.f32.mrf.mxu0
        %v1764 = vadd.f32 %v1055, %v1763
        %v1765 = vpop.f32.mrf.mxu0
        %1766 = vdwg.mxu0
        %1767 = vmatpush.bf16.msra.mxu0 %v1507
        %1768 = vmatpush.bf16.msra.mxu0 %v1503
        %1769 = vmatpush.bf16.msra.mxu0 %v1499
        %1770 = vmatpush.bf16.msra.mxu0 %v1495
        %1771 = vmatpush.bf16.msra.mxu0 %v1491
        %1772 = vmatpush.bf16.msra.mxu0 %v1487
        %1773 = vmatpush.bf16.msra.mxu0 %v1483
        %1774 = vmatpush.bf16.msra.mxu0 %v1479
        %1775 = vmatmul.bf16.gmra.mxu0 %v921
        %v1776 = vpop.f32.mrf.mxu0
        %v1777 = vadd.f32 %v1764, %v1776
        %v1778 = vpop.f32.mrf.mxu0
        %1779 = vdwg.mxu0
        %1780 = vmatpush.bf16.msra.mxu0 %v1539
        %1781 = vmatpush.bf16.msra.mxu0 %v1535
        %1782 = vmatpush.bf16.msra.mxu0 %v1531
        %1783 = vmatpush.bf16.msra.mxu0 %v1527
        %1784 = vmatpush.bf16.msra.mxu0 %v1523
        %1785 = vmatpush.bf16.msra.mxu0 %v1519
        %1786 = vmatpush.bf16.msra.mxu0 %v1515
        %1787 = vmatpush.bf16.msra.mxu0 %v1511
        %1788 = vmatmul.bf16.gmra.mxu0 %v922
        %v1789 = vpop.f32.mrf.mxu0
        %v1790 = vadd.f32 %v1777, %v1789
        %v1791 = vpop.f32.mrf.mxu0
        %1792 = vdwg.mxu0
        %1793 = vmatpush.bf16.msra.mxu0 %v1571
        %1794 = vmatpush.bf16.msra.mxu0 %v1567
        %1795 = vmatpush.bf16.msra.mxu0 %v1563
        %1796 = vmatpush.bf16.msra.mxu0 %v1559
        %1797 = vmatpush.bf16.msra.mxu0 %v1555
        %1798 = vmatpush.bf16.msra.mxu0 %v1551
        %1799 = vmatpush.bf16.msra.mxu0 %v1547
        %1800 = vmatpush.bf16.msra.mxu0 %v1543
        %1801 = vmatmul.bf16.gmra.mxu0 %v923
        %v1802 = vpop.f32.mrf.mxu0
        %v1803 = vadd.f32 %v1790, %v1802
        %v1804 = vpop.f32.mrf.mxu0
        %1805 = vdwg.mxu0
        %1806 = vmatpush.bf16.msra.mxu0 %v1476
        %1807 = vmatpush.bf16.msra.mxu0 %v1472
        %1808 = vmatpush.bf16.msra.mxu0 %v1468
        %1809 = vmatpush.bf16.msra.mxu0 %v1464
        %1810 = vmatpush.bf16.msra.mxu0 %v1460
        %1811 = vmatpush.bf16.msra.mxu0 %v1456
        %1812 = vmatpush.bf16.msra.mxu0 %v1452
        %1813 = vmatpush.bf16.msra.mxu0 %v1448
        %1814 = vmatmul.bf16.gmra.mxu0 %v920
        %v1815 = vpop.f32.mrf.mxu0
        %v1816 = vadd.f32 %v1056, %v1815
        %v1817 = vpop.f32.mrf.mxu0
        %1818 = vdwg.mxu0
        %1819 = vmatpush.bf16.msra.mxu0 %v1508
        %1820 = vmatpush.bf16.msra.mxu0 %v1504
        %1821 = vmatpush.bf16.msra.mxu0 %v1500
        %1822 = vmatpush.bf16.msra.mxu0 %v1496
        %1823 = vmatpush.bf16.msra.mxu0 %v1492
        %1824 = vmatpush.bf16.msra.mxu0 %v1488
        %1825 = vmatpush.bf16.msra.mxu0 %v1484
        %1826 = vmatpush.bf16.msra.mxu0 %v1480
        %1827 = vmatmul.bf16.gmra.mxu0 %v921
        %v1828 = vpop.f32.mrf.mxu0
        %v1829 = vadd.f32 %v1816, %v1828
        %v1830 = vpop.f32.mrf.mxu0
        %1831 = vdwg.mxu0
        %1832 = vmatpush.bf16.msra.mxu0 %v1540
        %1833 = vmatpush.bf16.msra.mxu0 %v1536
        %1834 = vmatpush.bf16.msra.mxu0 %v1532
        %1835 = vmatpush.bf16.msra.mxu0 %v1528
        %1836 = vmatpush.bf16.msra.mxu0 %v1524
        %1837 = vmatpush.bf16.msra.mxu0 %v1520
        %1838 = vmatpush.bf16.msra.mxu0 %v1516
        %1839 = vmatpush.bf16.msra.mxu0 %v1512
        %1840 = vmatmul.bf16.gmra.mxu0 %v922
        %v1841 = vpop.f32.mrf.mxu0
        %v1842 = vadd.f32 %v1829, %v1841
        %v1843 = vpop.f32.mrf.mxu0
        %1844 = vdwg.mxu0
        %1845 = vmatpush.bf16.msra.mxu0 %v1572
        %1846 = vmatpush.bf16.msra.mxu0 %v1568
        %1847 = vmatpush.bf16.msra.mxu0 %v1564
        %1848 = vmatpush.bf16.msra.mxu0 %v1560
        %1849 = vmatpush.bf16.msra.mxu0 %v1556
        %1850 = vmatpush.bf16.msra.mxu0 %v1552
        %1851 = vmatpush.bf16.msra.mxu0 %v1548
        %1852 = vmatpush.bf16.msra.mxu0 %v1544
        %1853 = vmatmul.bf16.gmra.mxu0 %v923
        %v1854 = vpop.f32.mrf.mxu0
        %v1855 = vadd.f32 %v1842, %v1854
        %v1856 = vpop.f32.mrf.mxu0
        %1857 = vdwg.mxu0
        %1858 = vmatpush.bf16.msra.mxu0 %v1477
        %1859 = vmatpush.bf16.msra.mxu0 %v1473
        %1860 = vmatpush.bf16.msra.mxu0 %v1469
        %1861 = vmatpush.bf16.msra.mxu0 %v1465
        %1862 = vmatpush.bf16.msra.mxu0 %v1461
        %1863 = vmatpush.bf16.msra.mxu0 %v1457
        %1864 = vmatpush.bf16.msra.mxu0 %v1453
        %1865 = vmatpush.bf16.msra.mxu0 %v1449
        %1866 = vmatmul.bf16.gmra.mxu0 %v920
        %v1867 = vpop.f32.mrf.mxu0
        %v1868 = vadd.f32 %v1057, %v1867
        %v1869 = vpop.f32.mrf.mxu0
        %1870 = vdwg.mxu0
        %1871 = vmatpush.bf16.msra.mxu0 %v1509
        %1872 = vmatpush.bf16.msra.mxu0 %v1505
        %1873 = vmatpush.bf16.msra.mxu0 %v1501
        %1874 = vmatpush.bf16.msra.mxu0 %v1497
        %1875 = vmatpush.bf16.msra.mxu0 %v1493
        %1876 = vmatpush.bf16.msra.mxu0 %v1489
        %1877 = vmatpush.bf16.msra.mxu0 %v1485
        %1878 = vmatpush.bf16.msra.mxu0 %v1481
        %1879 = vmatmul.bf16.gmra.mxu0 %v921
        %v1880 = vpop.f32.mrf.mxu0
        %v1881 = vadd.f32 %v1868, %v1880
        %v1882 = vpop.f32.mrf.mxu0
        %1883 = vdwg.mxu0
        %1884 = vmatpush.bf16.msra.mxu0 %v1541
        %1885 = vmatpush.bf16.msra.mxu0 %v1537
        %1886 = vmatpush.bf16.msra.mxu0 %v1533
        %1887 = vmatpush.bf16.msra.mxu0 %v1529
        %1888 = vmatpush.bf16.msra.mxu0 %v1525
        %1889 = vmatpush.bf16.msra.mxu0 %v1521
        %1890 = vmatpush.bf16.msra.mxu0 %v1517
        %1891 = vmatpush.bf16.msra.mxu0 %v1513
        %1892 = vmatmul.bf16.gmra.mxu0 %v922
        %v1893 = vpop.f32.mrf.mxu0
        %v1894 = vadd.f32 %v1881, %v1893
        %v1895 = vpop.f32.mrf.mxu0
        %1896 = vdwg.mxu0
        %1897 = vmatpush.bf16.msra.mxu0 %v1573
        %1898 = vmatpush.bf16.msra.mxu0 %v1569
        %1899 = vmatpush.bf16.msra.mxu0 %v1565
        %1900 = vmatpush.bf16.msra.mxu0 %v1561
        %1901 = vmatpush.bf16.msra.mxu0 %v1557
        %1902 = vmatpush.bf16.msra.mxu0 %v1553
        %1903 = vmatpush.bf16.msra.mxu0 %v1549
        %1904 = vmatpush.bf16.msra.mxu0 %v1545
        %1905 = vmatmul.bf16.gmra.mxu0 %v923
        %v1906 = vpop.f32.mrf.mxu0
        %v1907 = vadd.f32 %v1894, %v1906
        %v1908 = vpop.f32.mrf.mxu0
        %1909 = vdwg.mxu0
        %vm1910 = vcmp.gt.f32.partialorder %v1751, 0.0
        %vm1911 = vcmp.gt.f32.partialorder %v1803, 0.0
        %vm1912 = vcmp.gt.f32.partialorder %v1855, 0.0
        %vm1913 = vcmp.gt.f32.partialorder %v1907, 0.0
        %v1914 = vmul.f32 %v1751, 0.01
        %v1915 = vmul.f32 %v1803, 0.01
        %v1916 = vmul.f32 %v1855, 0.01
        %v1917 = vmul.f32 %v1907, 0.01
        %v1918 = vsel %vm1910, %v1751, %v1914
        %v1919 = vsel %vm1911, %v1803, %v1915
        %v1920 = vsel %vm1912, %v1855, %v1916
        %v1921 = vsel %vm1913, %v1907, %v1917
        %v1922 = vpack.c.bf16 %v1918, %v1918
        %v1923 = vpack.c.bf16 %v1919, %v1919
        %v1924 = vpack.c.bf16 %v1920, %v1920
        %v1925 = vpack.c.bf16 %v1921, %v1921
        %v1926 = vld [vmem:[%s551] sm:$0xff]
        %v1927 = vld [vmem:[%s551 + $0x8] sm:$0xff]
        %v1928 = vld [vmem:[%s551 + $0x10] sm:$0xff]
        %v1929 = vld [vmem:[%s551 + $0x18] sm:$0xff]
        %v1930 = vld [vmem:[%s551 + $0x20] sm:$0xff]
        %v1931 = vld [vmem:[%s551 + $0x28] sm:$0xff]
        %v1932 = vld [vmem:[%s551 + $0x30] sm:$0xff]
        %v1933 = vld [vmem:[%s551 + $0x38] sm:$0xff]
        %v1934 = vld [vmem:[%s551 + $0x40] sm:$0xff]
        %v1935 = vld [vmem:[%s551 + $0x48] sm:$0xff]
        %v1936 = vld [vmem:[%s551 + $0x50] sm:$0xff]
        %v1937 = vld [vmem:[%s551 + $0x58] sm:$0xff]
        %v1938 = vld [vmem:[%s551 + $0x60] sm:$0xff]
        %v1939 = vld [vmem:[%s551 + $0x68] sm:$0xff]
        %v1940 = vld [vmem:[%s551 + $0x70] sm:$0xff]
        %v1941 = vld [vmem:[%s551 + $0x78] sm:$0xff]
        %v1942 = vld [vmem:[%s551 + $0x80] sm:$0xff]
        %v1943 = vld [vmem:[%s551 + $0x88] sm:$0xff]
        %v1944 = vld [vmem:[%s551 + $0x90] sm:$0xff]
        %v1945 = vld [vmem:[%s551 + $0x98] sm:$0xff]
        %v1946 = vld [vmem:[%s551 + $0xa0] sm:$0xff]
        %v1947 = vld [vmem:[%s551 + $0xa8] sm:$0xff]
        %v1948 = vld [vmem:[%s551 + $0xb0] sm:$0xff]
        %v1949 = vld [vmem:[%s551 + $0xb8] sm:$0xff]
        %v1950 = vld [vmem:[%s551 + $0xc0] sm:$0xff]
        %v1951 = vld [vmem:[%s551 + $0xc8] sm:$0xff]
        %v1952 = vld [vmem:[%s551 + $0xd0] sm:$0xff]
        %v1953 = vld [vmem:[%s551 + $0xd8] sm:$0xff]
        %v1954 = vld [vmem:[%s551 + $0xe0] sm:$0xff]
        %v1955 = vld [vmem:[%s551 + $0xe8] sm:$0xff]
        %v1956 = vld [vmem:[%s551 + $0xf0] sm:$0xff]
        %v1957 = vld [vmem:[%s551 + $0xf8] sm:$0xff]
        %v1958 = vld [vmem:[%s551 + $0x100] sm:$0xff]
        %v1959 = vld [vmem:[%s551 + $0x108] sm:$0xff]
        %v1960 = vld [vmem:[%s551 + $0x110] sm:$0xff]
        %v1961 = vld [vmem:[%s551 + $0x118] sm:$0xff]
        %v1962 = vld [vmem:[%s551 + $0x120] sm:$0xff]
        %v1963 = vld [vmem:[%s551 + $0x128] sm:$0xff]
        %v1964 = vld [vmem:[%s551 + $0x130] sm:$0xff]
        %v1965 = vld [vmem:[%s551 + $0x138] sm:$0xff]
        %v1966 = vld [vmem:[%s551 + $0x140] sm:$0xff]
        %v1967 = vld [vmem:[%s551 + $0x148] sm:$0xff]
        %v1968 = vld [vmem:[%s551 + $0x150] sm:$0xff]
        %v1969 = vld [vmem:[%s551 + $0x158] sm:$0xff]
        %v1970 = vld [vmem:[%s551 + $0x160] sm:$0xff]
        %v1971 = vld [vmem:[%s551 + $0x168] sm:$0xff]
        %v1972 = vld [vmem:[%s551 + $0x170] sm:$0xff]
        %v1973 = vld [vmem:[%s551 + $0x178] sm:$0xff]
        %v1974 = vld [vmem:[%s551 + $0x180] sm:$0xff]
        %v1975 = vld [vmem:[%s551 + $0x188] sm:$0xff]
        %v1976 = vld [vmem:[%s551 + $0x190] sm:$0xff]
        %v1977 = vld [vmem:[%s551 + $0x198] sm:$0xff]
        %v1978 = vld [vmem:[%s551 + $0x1a0] sm:$0xff]
        %v1979 = vld [vmem:[%s551 + $0x1a8] sm:$0xff]
        %v1980 = vld [vmem:[%s551 + $0x1b0] sm:$0xff]
        %v1981 = vld [vmem:[%s551 + $0x1b8] sm:$0xff]
        %v1982 = vld [vmem:[%s551 + $0x1c0] sm:$0xff]
        %v1983 = vld [vmem:[%s551 + $0x1c8] sm:$0xff]
        %v1984 = vld [vmem:[%s551 + $0x1d0] sm:$0xff]
        %v1985 = vld [vmem:[%s551 + $0x1d8] sm:$0xff]
        %v1986 = vld [vmem:[%s551 + $0x1e0] sm:$0xff]
        %v1987 = vld [vmem:[%s551 + $0x1e8] sm:$0xff]
        %v1988 = vld [vmem:[%s551 + $0x1f0] sm:$0xff]
        %v1989 = vld [vmem:[%s551 + $0x1f8] sm:$0xff]
        %v1990 = vld [vmem:[%s551 + $0x200] sm:$0xff]
        %v1991 = vld [vmem:[%s551 + $0x208] sm:$0xff]
        %v1992 = vld [vmem:[%s551 + $0x210] sm:$0xff]
        %v1993 = vld [vmem:[%s551 + $0x218] sm:$0xff]
        %v1994 = vld [vmem:[%s551 + $0x220] sm:$0xff]
        %v1995 = vld [vmem:[%s551 + $0x228] sm:$0xff]
        %v1996 = vld [vmem:[%s551 + $0x230] sm:$0xff]
        %v1997 = vld [vmem:[%s551 + $0x238] sm:$0xff]
        %v1998 = vld [vmem:[%s551 + $0x240] sm:$0xff]
        %v1999 = vld [vmem:[%s551 + $0x248] sm:$0xff]
        %v2000 = vld [vmem:[%s551 + $0x250] sm:$0xff]
        %v2001 = vld [vmem:[%s551 + $0x258] sm:$0xff]
        %v2002 = vld [vmem:[%s551 + $0x260] sm:$0xff]
        %v2003 = vld [vmem:[%s551 + $0x268] sm:$0xff]
        %v2004 = vld [vmem:[%s551 + $0x270] sm:$0xff]
        %v2005 = vld [vmem:[%s551 + $0x278] sm:$0xff]
        %v2006 = vld [vmem:[%s551 + $0x280] sm:$0xff]
        %v2007 = vld [vmem:[%s551 + $0x288] sm:$0xff]
        %v2008 = vld [vmem:[%s551 + $0x290] sm:$0xff]
        %v2009 = vld [vmem:[%s551 + $0x298] sm:$0xff]
        %v2010 = vld [vmem:[%s551 + $0x2a0] sm:$0xff]
        %v2011 = vld [vmem:[%s551 + $0x2a8] sm:$0xff]
        %v2012 = vld [vmem:[%s551 + $0x2b0] sm:$0xff]
        %v2013 = vld [vmem:[%s551 + $0x2b8] sm:$0xff]
        %v2014 = vld [vmem:[%s551 + $0x2c0] sm:$0xff]
        %v2015 = vld [vmem:[%s551 + $0x2c8] sm:$0xff]
        %v2016 = vld [vmem:[%s551 + $0x2d0] sm:$0xff]
        %v2017 = vld [vmem:[%s551 + $0x2d8] sm:$0xff]
        %v2018 = vld [vmem:[%s551 + $0x2e0] sm:$0xff]
        %v2019 = vld [vmem:[%s551 + $0x2e8] sm:$0xff]
        %v2020 = vld [vmem:[%s551 + $0x2f0] sm:$0xff]
        %v2021 = vld [vmem:[%s551 + $0x2f8] sm:$0xff]
        %v2022 = vld [vmem:[%s551 + $0x300] sm:$0xff]
        %v2023 = vld [vmem:[%s551 + $0x308] sm:$0xff]
        %v2024 = vld [vmem:[%s551 + $0x310] sm:$0xff]
        %v2025 = vld [vmem:[%s551 + $0x318] sm:$0xff]
        %v2026 = vld [vmem:[%s551 + $0x320] sm:$0xff]
        %v2027 = vld [vmem:[%s551 + $0x328] sm:$0xff]
        %v2028 = vld [vmem:[%s551 + $0x330] sm:$0xff]
        %v2029 = vld [vmem:[%s551 + $0x338] sm:$0xff]
        %v2030 = vld [vmem:[%s551 + $0x340] sm:$0xff]
        %v2031 = vld [vmem:[%s551 + $0x348] sm:$0xff]
        %v2032 = vld [vmem:[%s551 + $0x350] sm:$0xff]
        %v2033 = vld [vmem:[%s551 + $0x358] sm:$0xff]
        %v2034 = vld [vmem:[%s551 + $0x360] sm:$0xff]
        %v2035 = vld [vmem:[%s551 + $0x368] sm:$0xff]
        %v2036 = vld [vmem:[%s551 + $0x370] sm:$0xff]
        %v2037 = vld [vmem:[%s551 + $0x378] sm:$0xff]
        %v2038 = vld [vmem:[%s551 + $0x380] sm:$0xff]
        %v2039 = vld [vmem:[%s551 + $0x388] sm:$0xff]
        %v2040 = vld [vmem:[%s551 + $0x390] sm:$0xff]
        %v2041 = vld [vmem:[%s551 + $0x398] sm:$0xff]
        %v2042 = vld [vmem:[%s551 + $0x3a0] sm:$0xff]
        %v2043 = vld [vmem:[%s551 + $0x3a8] sm:$0xff]
        %v2044 = vld [vmem:[%s551 + $0x3b0] sm:$0xff]
        %v2045 = vld [vmem:[%s551 + $0x3b8] sm:$0xff]
        %v2046 = vld [vmem:[%s551 + $0x3c0] sm:$0xff]
        %v2047 = vld [vmem:[%s551 + $0x3c8] sm:$0xff]
        %v2048 = vld [vmem:[%s551 + $0x3d0] sm:$0xff]
        %v2049 = vld [vmem:[%s551 + $0x3d8] sm:$0xff]
        %v2050 = vld [vmem:[%s551 + $0x3e0] sm:$0xff]
        %v2051 = vld [vmem:[%s551 + $0x3e8] sm:$0xff]
        %v2052 = vld [vmem:[%s551 + $0x3f0] sm:$0xff]
        %v2053 = vld [vmem:[%s551 + $0x3f8] sm:$0xff]
        %v2054 = vld [vmem:[%s561] sm:$0xf]
        %v2056 = vperm.slane %v2054, 0
        %v2057 = vperm.slane %v2054, 1
        %v2058 = vperm.slane %v2054, 2
        %v2059 = vperm.slane %v2054, 3
        %v2192 = vunpack.c.l.b16 %v1926
        %v2193 = vunpack.c.h.b16 %v1926
        %v2194 = vunpack.c.l.b16 %v1927
        %v2195 = vunpack.c.h.b16 %v1927
        %v2196 = vunpack.c.l.b16 %v1928
        %v2197 = vunpack.c.h.b16 %v1928
        %v2198 = vunpack.c.l.b16 %v1929
        %v2199 = vunpack.c.h.b16 %v1929
        %v2200 = vunpack.c.l.b16 %v1930
        %v2201 = vunpack.c.h.b16 %v1930
        %v2202 = vunpack.c.l.b16 %v1931
        %v2203 = vunpack.c.h.b16 %v1931
        %v2204 = vunpack.c.l.b16 %v1932
        %v2205 = vunpack.c.h.b16 %v1932
        %v2206 = vunpack.c.l.b16 %v1933
        %v2207 = vunpack.c.h.b16 %v1933
        %v2208 = vunpack.c.l.b16 %v1934
        %v2209 = vunpack.c.h.b16 %v1934
        %v2210 = vunpack.c.l.b16 %v1935
        %v2211 = vunpack.c.h.b16 %v1935
        %v2212 = vunpack.c.l.b16 %v1936
        %v2213 = vunpack.c.h.b16 %v1936
        %v2214 = vunpack.c.l.b16 %v1937
        %v2215 = vunpack.c.h.b16 %v1937
        %v2216 = vunpack.c.l.b16 %v1938
        %v2217 = vunpack.c.h.b16 %v1938
        %v2218 = vunpack.c.l.b16 %v1939
        %v2219 = vunpack.c.h.b16 %v1939
        %v2220 = vunpack.c.l.b16 %v1940
        %v2221 = vunpack.c.h.b16 %v1940
        %v2222 = vunpack.c.l.b16 %v1941
        %v2223 = vunpack.c.h.b16 %v1941
        %v2224 = vunpack.c.l.b16 %v1942
        %v2225 = vunpack.c.h.b16 %v1942
        %v2226 = vunpack.c.l.b16 %v1943
        %v2227 = vunpack.c.h.b16 %v1943
        %v2228 = vunpack.c.l.b16 %v1944
        %v2229 = vunpack.c.h.b16 %v1944
        %v2230 = vunpack.c.l.b16 %v1945
        %v2231 = vunpack.c.h.b16 %v1945
        %v2232 = vunpack.c.l.b16 %v1946
        %v2233 = vunpack.c.h.b16 %v1946
        %v2234 = vunpack.c.l.b16 %v1947
        %v2235 = vunpack.c.h.b16 %v1947
        %v2236 = vunpack.c.l.b16 %v1948
        %v2237 = vunpack.c.h.b16 %v1948
        %v2238 = vunpack.c.l.b16 %v1949
        %v2239 = vunpack.c.h.b16 %v1949
        %v2240 = vunpack.c.l.b16 %v1950
        %v2241 = vunpack.c.h.b16 %v1950
        %v2242 = vunpack.c.l.b16 %v1951
        %v2243 = vunpack.c.h.b16 %v1951
        %v2244 = vunpack.c.l.b16 %v1952
        %v2245 = vunpack.c.h.b16 %v1952
        %v2246 = vunpack.c.l.b16 %v1953
        %v2247 = vunpack.c.h.b16 %v1953
        %v2248 = vunpack.c.l.b16 %v1954
        %v2249 = vunpack.c.h.b16 %v1954
        %v2250 = vunpack.c.l.b16 %v1955
        %v2251 = vunpack.c.h.b16 %v1955
        %v2252 = vunpack.c.l.b16 %v1956
        %v2253 = vunpack.c.h.b16 %v1956
        %v2254 = vunpack.c.l.b16 %v1957
        %v2255 = vunpack.c.h.b16 %v1957
        %v2256 = vunpack.c.l.b16 %v1958
        %v2257 = vunpack.c.h.b16 %v1958
        %v2258 = vunpack.c.l.b16 %v1959
        %v2259 = vunpack.c.h.b16 %v1959
        %v2260 = vunpack.c.l.b16 %v1960
        %v2261 = vunpack.c.h.b16 %v1960
        %v2262 = vunpack.c.l.b16 %v1961
        %v2263 = vunpack.c.h.b16 %v1961
        %v2264 = vunpack.c.l.b16 %v1962
        %v2265 = vunpack.c.h.b16 %v1962
        %v2266 = vunpack.c.l.b16 %v1963
        %v2267 = vunpack.c.h.b16 %v1963
        %v2268 = vunpack.c.l.b16 %v1964
        %v2269 = vunpack.c.h.b16 %v1964
        %v2270 = vunpack.c.l.b16 %v1965
        %v2271 = vunpack.c.h.b16 %v1965
        %v2272 = vunpack.c.l.b16 %v1966
        %v2273 = vunpack.c.h.b16 %v1966
        %v2274 = vunpack.c.l.b16 %v1967
        %v2275 = vunpack.c.h.b16 %v1967
        %v2276 = vunpack.c.l.b16 %v1968
        %v2277 = vunpack.c.h.b16 %v1968
        %v2278 = vunpack.c.l.b16 %v1969
        %v2279 = vunpack.c.h.b16 %v1969
        %v2280 = vunpack.c.l.b16 %v1970
        %v2281 = vunpack.c.h.b16 %v1970
        %v2282 = vunpack.c.l.b16 %v1971
        %v2283 = vunpack.c.h.b16 %v1971
        %v2284 = vunpack.c.l.b16 %v1972
        %v2285 = vunpack.c.h.b16 %v1972
        %v2286 = vunpack.c.l.b16 %v1973
        %v2287 = vunpack.c.h.b16 %v1973
        %v2288 = vunpack.c.l.b16 %v1974
        %v2289 = vunpack.c.h.b16 %v1974
        %v2290 = vunpack.c.l.b16 %v1975
        %v2291 = vunpack.c.h.b16 %v1975
        %v2292 = vunpack.c.l.b16 %v1976
        %v2293 = vunpack.c.h.b16 %v1976
        %v2294 = vunpack.c.l.b16 %v1977
        %v2295 = vunpack.c.h.b16 %v1977
        %v2296 = vunpack.c.l.b16 %v1978
        %v2297 = vunpack.c.h.b16 %v1978
        %v2298 = vunpack.c.l.b16 %v1979
        %v2299 = vunpack.c.h.b16 %v1979
        %v2300 = vunpack.c.l.b16 %v1980
        %v2301 = vunpack.c.h.b16 %v1980
        %v2302 = vunpack.c.l.b16 %v1981
        %v2303 = vunpack.c.h.b16 %v1981
        %v2304 = vunpack.c.l.b16 %v1982
        %v2305 = vunpack.c.h.b16 %v1982
        %v2306 = vunpack.c.l.b16 %v1983
        %v2307 = vunpack.c.h.b16 %v1983
        %v2308 = vunpack.c.l.b16 %v1984
        %v2309 = vunpack.c.h.b16 %v1984
        %v2310 = vunpack.c.l.b16 %v1985
        %v2311 = vunpack.c.h.b16 %v1985
        %v2312 = vunpack.c.l.b16 %v1986
        %v2313 = vunpack.c.h.b16 %v1986
        %v2314 = vunpack.c.l.b16 %v1987
        %v2315 = vunpack.c.h.b16 %v1987
        %v2316 = vunpack.c.l.b16 %v1988
        %v2317 = vunpack.c.h.b16 %v1988
        %v2318 = vunpack.c.l.b16 %v1989
        %v2319 = vunpack.c.h.b16 %v1989
        %v2320 = vunpack.c.l.b16 %v1990
        %v2321 = vunpack.c.h.b16 %v1990
        %v2322 = vunpack.c.l.b16 %v1991
        %v2323 = vunpack.c.h.b16 %v1991
        %v2324 = vunpack.c.l.b16 %v1992
        %v2325 = vunpack.c.h.b16 %v1992
        %v2326 = vunpack.c.l.b16 %v1993
        %v2327 = vunpack.c.h.b16 %v1993
        %v2328 = vunpack.c.l.b16 %v1994
        %v2329 = vunpack.c.h.b16 %v1994
        %v2330 = vunpack.c.l.b16 %v1995
        %v2331 = vunpack.c.h.b16 %v1995
        %v2332 = vunpack.c.l.b16 %v1996
        %v2333 = vunpack.c.h.b16 %v1996
        %v2334 = vunpack.c.l.b16 %v1997
        %v2335 = vunpack.c.h.b16 %v1997
        %v2336 = vunpack.c.l.b16 %v1998
        %v2337 = vunpack.c.h.b16 %v1998
        %v2338 = vunpack.c.l.b16 %v1999
        %v2339 = vunpack.c.h.b16 %v1999
        %v2340 = vunpack.c.l.b16 %v2000
        %v2341 = vunpack.c.h.b16 %v2000
        %v2342 = vunpack.c.l.b16 %v2001
        %v2343 = vunpack.c.h.b16 %v2001
        %v2344 = vunpack.c.l.b16 %v2002
        %v2345 = vunpack.c.h.b16 %v2002
        %v2346 = vunpack.c.l.b16 %v2003
        %v2347 = vunpack.c.h.b16 %v2003
        %v2348 = vunpack.c.l.b16 %v2004
        %v2349 = vunpack.c.h.b16 %v2004
        %v2350 = vunpack.c.l.b16 %v2005
        %v2351 = vunpack.c.h.b16 %v2005
        %v2352 = vunpack.c.l.b16 %v2006
        %v2353 = vunpack.c.h.b16 %v2006
        %v2354 = vunpack.c.l.b16 %v2007
        %v2355 = vunpack.c.h.b16 %v2007
        %v2356 = vunpack.c.l.b16 %v2008
        %v2357 = vunpack.c.h.b16 %v2008
        %v2358 = vunpack.c.l.b16 %v2009
        %v2359 = vunpack.c.h.b16 %v2009
        %v2360 = vunpack.c.l.b16 %v2010
        %v2361 = vunpack.c.h.b16 %v2010
        %v2362 = vunpack.c.l.b16 %v2011
        %v2363 = vunpack.c.h.b16 %v2011
        %v2364 = vunpack.c.l.b16 %v2012
        %v2365 = vunpack.c.h.b16 %v2012
        %v2366 = vunpack.c.l.b16 %v2013
        %v2367 = vunpack.c.h.b16 %v2013
        %v2368 = vunpack.c.l.b16 %v2014
        %v2369 = vunpack.c.h.b16 %v2014
        %v2370 = vunpack.c.l.b16 %v2015
        %v2371 = vunpack.c.h.b16 %v2015
        %v2372 = vunpack.c.l.b16 %v2016
        %v2373 = vunpack.c.h.b16 %v2016
        %v2374 = vunpack.c.l.b16 %v2017
        %v2375 = vunpack.c.h.b16 %v2017
        %v2376 = vunpack.c.l.b16 %v2018
        %v2377 = vunpack.c.h.b16 %v2018
        %v2378 = vunpack.c.l.b16 %v2019
        %v2379 = vunpack.c.h.b16 %v2019
        %v2380 = vunpack.c.l.b16 %v2020
        %v2381 = vunpack.c.h.b16 %v2020
        %v2382 = vunpack.c.l.b16 %v2021
        %v2383 = vunpack.c.h.b16 %v2021
        %v2384 = vunpack.c.l.b16 %v2022
        %v2385 = vunpack.c.h.b16 %v2022
        %v2386 = vunpack.c.l.b16 %v2023
        %v2387 = vunpack.c.h.b16 %v2023
        %v2388 = vunpack.c.l.b16 %v2024
        %v2389 = vunpack.c.h.b16 %v2024
        %v2390 = vunpack.c.l.b16 %v2025
        %v2391 = vunpack.c.h.b16 %v2025
        %v2392 = vunpack.c.l.b16 %v2026
        %v2393 = vunpack.c.h.b16 %v2026
        %v2394 = vunpack.c.l.b16 %v2027
        %v2395 = vunpack.c.h.b16 %v2027
        %v2396 = vunpack.c.l.b16 %v2028
        %v2397 = vunpack.c.h.b16 %v2028
        %v2398 = vunpack.c.l.b16 %v2029
        %v2399 = vunpack.c.h.b16 %v2029
        %v2400 = vunpack.c.l.b16 %v2030
        %v2401 = vunpack.c.h.b16 %v2030
        %v2402 = vunpack.c.l.b16 %v2031
        %v2403 = vunpack.c.h.b16 %v2031
        %v2404 = vunpack.c.l.b16 %v2032
        %v2405 = vunpack.c.h.b16 %v2032
        %v2406 = vunpack.c.l.b16 %v2033
        %v2407 = vunpack.c.h.b16 %v2033
        %v2408 = vunpack.c.l.b16 %v2034
        %v2409 = vunpack.c.h.b16 %v2034
        %v2410 = vunpack.c.l.b16 %v2035
        %v2411 = vunpack.c.h.b16 %v2035
        %v2412 = vunpack.c.l.b16 %v2036
        %v2413 = vunpack.c.h.b16 %v2036
        %v2414 = vunpack.c.l.b16 %v2037
        %v2415 = vunpack.c.h.b16 %v2037
        %v2416 = vunpack.c.l.b16 %v2038
        %v2417 = vunpack.c.h.b16 %v2038
        %v2418 = vunpack.c.l.b16 %v2039
        %v2419 = vunpack.c.h.b16 %v2039
        %v2420 = vunpack.c.l.b16 %v2040
        %v2421 = vunpack.c.h.b16 %v2040
        %v2422 = vunpack.c.l.b16 %v2041
        %v2423 = vunpack.c.h.b16 %v2041
        %v2424 = vunpack.c.l.b16 %v2042
        %v2425 = vunpack.c.h.b16 %v2042
        %v2426 = vunpack.c.l.b16 %v2043
        %v2427 = vunpack.c.h.b16 %v2043
        %v2428 = vunpack.c.l.b16 %v2044
        %v2429 = vunpack.c.h.b16 %v2044
        %v2430 = vunpack.c.l.b16 %v2045
        %v2431 = vunpack.c.h.b16 %v2045
        %v2432 = vunpack.c.l.b16 %v2046
        %v2433 = vunpack.c.h.b16 %v2046
        %v2434 = vunpack.c.l.b16 %v2047
        %v2435 = vunpack.c.h.b16 %v2047
        %v2436 = vunpack.c.l.b16 %v2048
        %v2437 = vunpack.c.h.b16 %v2048
        %v2438 = vunpack.c.l.b16 %v2049
        %v2439 = vunpack.c.h.b16 %v2049
        %v2440 = vunpack.c.l.b16 %v2050
        %v2441 = vunpack.c.h.b16 %v2050
        %v2442 = vunpack.c.l.b16 %v2051
        %v2443 = vunpack.c.h.b16 %v2051
        %v2444 = vunpack.c.l.b16 %v2052
        %v2445 = vunpack.c.h.b16 %v2052
        %v2446 = vunpack.c.l.b16 %v2053
        %v2447 = vunpack.c.h.b16 %v2053
        %v2448 = vpack.c.b16 %v2196, %v2192
        %v2449 = vpack.c.b16 %v2197, %v2193
        %v2450 = vpack.c.b16 %v2198, %v2194
        %v2451 = vpack.c.b16 %v2199, %v2195
        %v2452 = vpack.c.b16 %v2204, %v2200
        %v2453 = vpack.c.b16 %v2205, %v2201
        %v2454 = vpack.c.b16 %v2206, %v2202
        %v2455 = vpack.c.b16 %v2207, %v2203
        %v2456 = vpack.c.b16 %v2212, %v2208
        %v2457 = vpack.c.b16 %v2213, %v2209
        %v2458 = vpack.c.b16 %v2214, %v2210
        %v2459 = vpack.c.b16 %v2215, %v2211
        %v2460 = vpack.c.b16 %v2220, %v2216
        %v2461 = vpack.c.b16 %v2221, %v2217
        %v2462 = vpack.c.b16 %v2222, %v2218
        %v2463 = vpack.c.b16 %v2223, %v2219
        %v2464 = vpack.c.b16 %v2228, %v2224
        %v2465 = vpack.c.b16 %v2229, %v2225
        %v2466 = vpack.c.b16 %v2230, %v2226
        %v2467 = vpack.c.b16 %v2231, %v2227
        %v2468 = vpack.c.b16 %v2236, %v2232
        %v2469 = vpack.c.b16 %v2237, %v2233
        %v2470 = vpack.c.b16 %v2238, %v2234
        %v2471 = vpack.c.b16 %v2239, %v2235
        %v2472 = vpack.c.b16 %v2244, %v2240
        %v2473 = vpack.c.b16 %v2245, %v2241
        %v2474 = vpack.c.b16 %v2246, %v2242
        %v2475 = vpack.c.b16 %v2247, %v2243
        %v2476 = vpack.c.b16 %v2252, %v2248
        %v2477 = vpack.c.b16 %v2253, %v2249
        %v2478 = vpack.c.b16 %v2254, %v2250
        %v2479 = vpack.c.b16 %v2255, %v2251
        %v2480 = vpack.c.b16 %v2260, %v2256
        %v2481 = vpack.c.b16 %v2261, %v2257
        %v2482 = vpack.c.b16 %v2262, %v2258
        %v2483 = vpack.c.b16 %v2263, %v2259
        %v2484 = vpack.c.b16 %v2268, %v2264
        %v2485 = vpack.c.b16 %v2269, %v2265
        %v2486 = vpack.c.b16 %v2270, %v2266
        %v2487 = vpack.c.b16 %v2271, %v2267
        %v2488 = vpack.c.b16 %v2276, %v2272
        %v2489 = vpack.c.b16 %v2277, %v2273
        %v2490 = vpack.c.b16 %v2278, %v2274
        %v2491 = vpack.c.b16 %v2279, %v2275
        %v2492 = vpack.c.b16 %v2284, %v2280
        %v2493 = vpack.c.b16 %v2285, %v2281
        %v2494 = vpack.c.b16 %v2286, %v2282
        %v2495 = vpack.c.b16 %v2287, %v2283
        %v2496 = vpack.c.b16 %v2292, %v2288
        %v2497 = vpack.c.b16 %v2293, %v2289
        %v2498 = vpack.c.b16 %v2294, %v2290
        %v2499 = vpack.c.b16 %v2295, %v2291
        %v2500 = vpack.c.b16 %v2300, %v2296
        %v2501 = vpack.c.b16 %v2301, %v2297
        %v2502 = vpack.c.b16 %v2302, %v2298
        %v2503 = vpack.c.b16 %v2303, %v2299
        %v2504 = vpack.c.b16 %v2308, %v2304
        %v2505 = vpack.c.b16 %v2309, %v2305
        %v2506 = vpack.c.b16 %v2310, %v2306
        %v2507 = vpack.c.b16 %v2311, %v2307
        %v2508 = vpack.c.b16 %v2316, %v2312
        %v2509 = vpack.c.b16 %v2317, %v2313
        %v2510 = vpack.c.b16 %v2318, %v2314
        %v2511 = vpack.c.b16 %v2319, %v2315
        %v2512 = vpack.c.b16 %v2324, %v2320
        %v2513 = vpack.c.b16 %v2325, %v2321
        %v2514 = vpack.c.b16 %v2326, %v2322
        %v2515 = vpack.c.b16 %v2327, %v2323
        %v2516 = vpack.c.b16 %v2332, %v2328
        %v2517 = vpack.c.b16 %v2333, %v2329
        %v2518 = vpack.c.b16 %v2334, %v2330
        %v2519 = vpack.c.b16 %v2335, %v2331
        %v2520 = vpack.c.b16 %v2340, %v2336
        %v2521 = vpack.c.b16 %v2341, %v2337
        %v2522 = vpack.c.b16 %v2342, %v2338
        %v2523 = vpack.c.b16 %v2343, %v2339
        %v2524 = vpack.c.b16 %v2348, %v2344
        %v2525 = vpack.c.b16 %v2349, %v2345
        %v2526 = vpack.c.b16 %v2350, %v2346
        %v2527 = vpack.c.b16 %v2351, %v2347
        %v2528 = vpack.c.b16 %v2356, %v2352
        %v2529 = vpack.c.b16 %v2357, %v2353
        %v2530 = vpack.c.b16 %v2358, %v2354
        %v2531 = vpack.c.b16 %v2359, %v2355
        %v2532 = vpack.c.b16 %v2364, %v2360
        %v2533 = vpack.c.b16 %v2365, %v2361
        %v2534 = vpack.c.b16 %v2366, %v2362
        %v2535 = vpack.c.b16 %v2367, %v2363
        %v2536 = vpack.c.b16 %v2372, %v2368
        %v2537 = vpack.c.b16 %v2373, %v2369
        %v2538 = vpack.c.b16 %v2374, %v2370
        %v2539 = vpack.c.b16 %v2375, %v2371
        %v2540 = vpack.c.b16 %v2380, %v2376
        %v2541 = vpack.c.b16 %v2381, %v2377
        %v2542 = vpack.c.b16 %v2382, %v2378
        %v2543 = vpack.c.b16 %v2383, %v2379
        %v2544 = vpack.c.b16 %v2388, %v2384
        %v2545 = vpack.c.b16 %v2389, %v2385
        %v2546 = vpack.c.b16 %v2390, %v2386
        %v2547 = vpack.c.b16 %v2391, %v2387
        %v2548 = vpack.c.b16 %v2396, %v2392
        %v2549 = vpack.c.b16 %v2397, %v2393
        %v2550 = vpack.c.b16 %v2398, %v2394
        %v2551 = vpack.c.b16 %v2399, %v2395
        %v2552 = vpack.c.b16 %v2404, %v2400
        %v2553 = vpack.c.b16 %v2405, %v2401
        %v2554 = vpack.c.b16 %v2406, %v2402
        %v2555 = vpack.c.b16 %v2407, %v2403
        %v2556 = vpack.c.b16 %v2412, %v2408
        %v2557 = vpack.c.b16 %v2413, %v2409
        %v2558 = vpack.c.b16 %v2414, %v2410
        %v2559 = vpack.c.b16 %v2415, %v2411
        %v2560 = vpack.c.b16 %v2420, %v2416
        %v2561 = vpack.c.b16 %v2421, %v2417
        %v2562 = vpack.c.b16 %v2422, %v2418
        %v2563 = vpack.c.b16 %v2423, %v2419
        %v2564 = vpack.c.b16 %v2428, %v2424
        %v2565 = vpack.c.b16 %v2429, %v2425
        %v2566 = vpack.c.b16 %v2430, %v2426
        %v2567 = vpack.c.b16 %v2431, %v2427
        %v2568 = vpack.c.b16 %v2436, %v2432
        %v2569 = vpack.c.b16 %v2437, %v2433
        %v2570 = vpack.c.b16 %v2438, %v2434
        %v2571 = vpack.c.b16 %v2439, %v2435
        %v2572 = vpack.c.b16 %v2444, %v2440
        %v2573 = vpack.c.b16 %v2445, %v2441
        %v2574 = vpack.c.b16 %v2446, %v2442
        %v2575 = vpack.c.b16 %v2447, %v2443
        %2704 = vmatpush.bf16.msra.mxu0 %v2476
        %2705 = vmatpush.bf16.msra.mxu0 %v2472
        %2706 = vmatpush.bf16.msra.mxu0 %v2468
        %2707 = vmatpush.bf16.msra.mxu0 %v2464
        %2708 = vmatpush.bf16.msra.mxu0 %v2460
        %2709 = vmatpush.bf16.msra.mxu0 %v2456
        %2710 = vmatpush.bf16.msra.mxu0 %v2452
        %2711 = vmatpush.bf16.msra.mxu0 %v2448
        %2712 = vmatmul.bf16.gmra.mxu0 %v1922
        %v2713 = vpop.f32.mrf.mxu0
        %v2714 = vadd.f32 %v2056, %v2713
        %v2715 = vpop.f32.mrf.mxu0
        %2716 = vdwg.mxu0
        %2717 = vmatpush.bf16.msra.mxu0 %v2508
        %2718 = vmatpush.bf16.msra.mxu0 %v2504
        %2719 = vmatpush.bf16.msra.mxu0 %v2500
        %2720 = vmatpush.bf16.msra.mxu0 %v2496
        %2721 = vmatpush.bf16.msra.mxu0 %v2492
        %2722 = vmatpush.bf16.msra.mxu0 %v2488
        %2723 = vmatpush.bf16.msra.mxu0 %v2484
        %2724 = vmatpush.bf16.msra.mxu0 %v2480
        %2725 = vmatmul.bf16.gmra.mxu0 %v1923
        %v2726 = vpop.f32.mrf.mxu0
        %v2727 = vadd.f32 %v2714, %v2726
        %v2728 = vpop.f32.mrf.mxu0
        %2729 = vdwg.mxu0
        %2730 = vmatpush.bf16.msra.mxu0 %v2540
        %2731 = vmatpush.bf16.msra.mxu0 %v2536
        %2732 = vmatpush.bf16.msra.mxu0 %v2532
        %2733 = vmatpush.bf16.msra.mxu0 %v2528
        %2734 = vmatpush.bf16.msra.mxu0 %v2524
        %2735 = vmatpush.bf16.msra.mxu0 %v2520
        %2736 = vmatpush.bf16.msra.mxu0 %v2516
        %2737 = vmatpush.bf16.msra.mxu0 %v2512
        %2738 = vmatmul.bf16.gmra.mxu0 %v1924
        %v2739 = vpop.f32.mrf.mxu0
        %v2740 = vadd.f32 %v2727, %v2739
        %v2741 = vpop.f32.mrf.mxu0
        %2742 = vdwg.mxu0
        %2743 = vmatpush.bf16.msra.mxu0 %v2572
        %2744 = vmatpush.bf16.msra.mxu0 %v2568
        %2745 = vmatpush.bf16.msra.mxu0 %v2564
        %2746 = vmatpush.bf16.msra.mxu0 %v2560
        %2747 = vmatpush.bf16.msra.mxu0 %v2556
        %2748 = vmatpush.bf16.msra.mxu0 %v2552
        %2749 = vmatpush.bf16.msra.mxu0 %v2548
        %2750 = vmatpush.bf16.msra.mxu0 %v2544
        %2751 = vmatmul.bf16.gmra.mxu0 %v1925
        %v2752 = vpop.f32.mrf.mxu0
        %v2753 = vadd.f32 %v2740, %v2752
        %v2754 = vpop.f32.mrf.mxu0
        %2755 = vdwg.mxu0
        %2756 = vmatpush.bf16.msra.mxu0 %v2477
        %2757 = vmatpush.bf16.msra.mxu0 %v2473
        %2758 = vmatpush.bf16.msra.mxu0 %v2469
        %2759 = vmatpush.bf16.msra.mxu0 %v2465
        %2760 = vmatpush.bf16.msra.mxu0 %v2461
        %2761 = vmatpush.bf16.msra.mxu0 %v2457
        %2762 = vmatpush.bf16.msra.mxu0 %v2453
        %2763 = vmatpush.bf16.msra.mxu0 %v2449
        %2764 = vmatmul.bf16.gmra.mxu0 %v1922
        %v2765 = vpop.f32.mrf.mxu0
        %v2766 = vadd.f32 %v2057, %v2765
        %v2767 = vpop.f32.mrf.mxu0
        %2768 = vdwg.mxu0
        %2769 = vmatpush.bf16.msra.mxu0 %v2509
        %2770 = vmatpush.bf16.msra.mxu0 %v2505
        %2771 = vmatpush.bf16.msra.mxu0 %v2501
        %2772 = vmatpush.bf16.msra.mxu0 %v2497
        %2773 = vmatpush.bf16.msra.mxu0 %v2493
        %2774 = vmatpush.bf16.msra.mxu0 %v2489
        %2775 = vmatpush.bf16.msra.mxu0 %v2485
        %2776 = vmatpush.bf16.msra.mxu0 %v2481
        %2777 = vmatmul.bf16.gmra.mxu0 %v1923
        %v2778 = vpop.f32.mrf.mxu0
        %v2779 = vadd.f32 %v2766, %v2778
        %v2780 = vpop.f32.mrf.mxu0
        %2781 = vdwg.mxu0
        %2782 = vmatpush.bf16.msra.mxu0 %v2541
        %2783 = vmatpush.bf16.msra.mxu0 %v2537
        %2784 = vmatpush.bf16.msra.mxu0 %v2533
        %2785 = vmatpush.bf16.msra.mxu0 %v2529
        %2786 = vmatpush.bf16.msra.mxu0 %v2525
        %2787 = vmatpush.bf16.msra.mxu0 %v2521
        %2788 = vmatpush.bf16.msra.mxu0 %v2517
        %2789 = vmatpush.bf16.msra.mxu0 %v2513
        %2790 = vmatmul.bf16.gmra.mxu0 %v1924
        %v2791 = vpop.f32.mrf.mxu0
        %v2792 = vadd.f32 %v2779, %v2791
        %v2793 = vpop.f32.mrf.mxu0
        %2794 = vdwg.mxu0
        %2795 = vmatpush.bf16.msra.mxu0 %v2573
        %2796 = vmatpush.bf16.msra.mxu0 %v2569
        %2797 = vmatpush.bf16.msra.mxu0 %v2565
        %2798 = vmatpush.bf16.msra.mxu0 %v2561
        %2799 = vmatpush.bf16.msra.mxu0 %v2557
        %2800 = vmatpush.bf16.msra.mxu0 %v2553
        %2801 = vmatpush.bf16.msra.mxu0 %v2549
        %2802 = vmatpush.bf16.msra.mxu0 %v2545
        %2803 = vmatmul.bf16.gmra.mxu0 %v1925
        %v2804 = vpop.f32.mrf.mxu0
        %v2805 = vadd.f32 %v2792, %v2804
        %v2806 = vpop.f32.mrf.mxu0
        %2807 = vdwg.mxu0
        %2808 = vmatpush.bf16.msra.mxu0 %v2478
        %2809 = vmatpush.bf16.msra.mxu0 %v2474
        %2810 = vmatpush.bf16.msra.mxu0 %v2470
        %2811 = vmatpush.bf16.msra.mxu0 %v2466
        %2812 = vmatpush.bf16.msra.mxu0 %v2462
        %2813 = vmatpush.bf16.msra.mxu0 %v2458
        %2814 = vmatpush.bf16.msra.mxu0 %v2454
        %2815 = vmatpush.bf16.msra.mxu0 %v2450
        %2816 = vmatmul.bf16.gmra.mxu0 %v1922
        %v2817 = vpop.f32.mrf.mxu0
        %v2818 = vadd.f32 %v2058, %v2817
        %v2819 = vpop.f32.mrf.mxu0
        %2820 = vdwg.mxu0
        %2821 = vmatpush.bf16.msra.mxu0 %v2510
        %2822 = vmatpush.bf16.msra.mxu0 %v2506
        %2823 = vmatpush.bf16.msra.mxu0 %v2502
        %2824 = vmatpush.bf16.msra.mxu0 %v2498
        %2825 = vmatpush.bf16.msra.mxu0 %v2494
        %2826 = vmatpush.bf16.msra.mxu0 %v2490
        %2827 = vmatpush.bf16.msra.mxu0 %v2486
        %2828 = vmatpush.bf16.msra.mxu0 %v2482
        %2829 = vmatmul.bf16.gmra.mxu0 %v1923
        %v2830 = vpop.f32.mrf.mxu0
        %v2831 = vadd.f32 %v2818, %v2830
        %v2832 = vpop.f32.mrf.mxu0
        %2833 = vdwg.mxu0
        %2834 = vmatpush.bf16.msra.mxu0 %v2542
        %2835 = vmatpush.bf16.msra.mxu0 %v2538
        %2836 = vmatpush.bf16.msra.mxu0 %v2534
        %2837 = vmatpush.bf16.msra.mxu0 %v2530
        %2838 = vmatpush.bf16.msra.mxu0 %v2526
        %2839 = vmatpush.bf16.msra.mxu0 %v2522
        %2840 = vmatpush.bf16.msra.mxu0 %v2518
        %2841 = vmatpush.bf16.msra.mxu0 %v2514
        %2842 = vmatmul.bf16.gmra.mxu0 %v1924
        %v2843 = vpop.f32.mrf.mxu0
        %v2844 = vadd.f32 %v2831, %v2843
        %v2845 = vpop.f32.mrf.mxu0
        %2846 = vdwg.mxu0
        %2847 = vmatpush.bf16.msra.mxu0 %v2574
        %2848 = vmatpush.bf16.msra.mxu0 %v2570
        %2849 = vmatpush.bf16.msra.mxu0 %v2566
        %2850 = vmatpush.bf16.msra.mxu0 %v2562
        %2851 = vmatpush.bf16.msra.mxu0 %v2558
        %2852 = vmatpush.bf16.msra.mxu0 %v2554
        %2853 = vmatpush.bf16.msra.mxu0 %v2550
        %2854 = vmatpush.bf16.msra.mxu0 %v2546
        %2855 = vmatmul.bf16.gmra.mxu0 %v1925
        %v2856 = vpop.f32.mrf.mxu0
        %v2857 = vadd.f32 %v2844, %v2856
        %v2858 = vpop.f32.mrf.mxu0
        %2859 = vdwg.mxu0
        %2860 = vmatpush.bf16.msra.mxu0 %v2479
        %2861 = vmatpush.bf16.msra.mxu0 %v2475
        %2862 = vmatpush.bf16.msra.mxu0 %v2471
        %2863 = vmatpush.bf16.msra.mxu0 %v2467
        %2864 = vmatpush.bf16.msra.mxu0 %v2463
        %2865 = vmatpush.bf16.msra.mxu0 %v2459
        %2866 = vmatpush.bf16.msra.mxu0 %v2455
        %2867 = vmatpush.bf16.msra.mxu0 %v2451
        %2868 = vmatmul.bf16.gmra.mxu0 %v1922
        %v2869 = vpop.f32.mrf.mxu0
        %v2870 = vadd.f32 %v2059, %v2869
        %v2871 = vpop.f32.mrf.mxu0
        %2872 = vdwg.mxu0
        %2873 = vmatpush.bf16.msra.mxu0 %v2511
        %2874 = vmatpush.bf16.msra.mxu0 %v2507
        %2875 = vmatpush.bf16.msra.mxu0 %v2503
        %2876 = vmatpush.bf16.msra.mxu0 %v2499
        %2877 = vmatpush.bf16.msra.mxu0 %v2495
        %2878 = vmatpush.bf16.msra.mxu0 %v2491
        %2879 = vmatpush.bf16.msra.mxu0 %v2487
        %2880 = vmatpush.bf16.msra.mxu0 %v2483
        %2881 = vmatmul.bf16.gmra.mxu0 %v1923
        %v2882 = vpop.f32.mrf.mxu0
        %v2883 = vadd.f32 %v2870, %v2882
        %v2884 = vpop.f32.mrf.mxu0
        %2885 = vdwg.mxu0
        %2886 = vmatpush.bf16.msra.mxu0 %v2543
        %2887 = vmatpush.bf16.msra.mxu0 %v2539
        %2888 = vmatpush.bf16.msra.mxu0 %v2535
        %2889 = vmatpush.bf16.msra.mxu0 %v2531
        %2890 = vmatpush.bf16.msra.mxu0 %v2527
        %2891 = vmatpush.bf16.msra.mxu0 %v2523
        %2892 = vmatpush.bf16.msra.mxu0 %v2519
        %2893 = vmatpush.bf16.msra.mxu0 %v2515
        %2894 = vmatmul.bf16.gmra.mxu0 %v1924
        %v2895 = vpop.f32.mrf.mxu0
        %v2896 = vadd.f32 %v2883, %v2895
        %v2897 = vpop.f32.mrf.mxu0
        %2898 = vdwg.mxu0
        %2899 = vmatpush.bf16.msra.mxu0 %v2575
        %2900 = vmatpush.bf16.msra.mxu0 %v2571
        %2901 = vmatpush.bf16.msra.mxu0 %v2567
        %2902 = vmatpush.bf16.msra.mxu0 %v2563
        %2903 = vmatpush.bf16.msra.mxu0 %v2559
        %2904 = vmatpush.bf16.msra.mxu0 %v2555
        %2905 = vmatpush.bf16.msra.mxu0 %v2551
        %2906 = vmatpush.bf16.msra.mxu0 %v2547
        %2907 = vmatmul.bf16.gmra.mxu0 %v1925
        %v2908 = vpop.f32.mrf.mxu0
        %v2909 = vadd.f32 %v2896, %v2908
        %v2910 = vpop.f32.mrf.mxu0
        %2911 = vdwg.mxu0
        %vm2912 = vcmp.gt.f32.partialorder %v2753, 0.0
        %vm2913 = vcmp.gt.f32.partialorder %v2805, 0.0
        %vm2914 = vcmp.gt.f32.partialorder %v2857, 0.0
        %vm2915 = vcmp.gt.f32.partialorder %v2909, 0.0
        %v2916 = vmul.f32 %v2753, 0.01
        %v2917 = vmul.f32 %v2805, 0.01
        %v2918 = vmul.f32 %v2857, 0.01
        %v2919 = vmul.f32 %v2909, 0.01
        %v2920 = vsel %vm2912, %v2753, %v2916
        %v2921 = vsel %vm2913, %v2805, %v2917
        %v2922 = vsel %vm2914, %v2857, %v2918
        %v2923 = vsel %vm2915, %v2909, %v2919
        %v2924 = vpack.c.bf16 %v2920, %v2920
        %v2925 = vpack.c.bf16 %v2921, %v2921
        %v2926 = vpack.c.bf16 %v2922, %v2922
        %v2927 = vpack.c.bf16 %v2923, %v2923
        %v2928 = vld [vmem:[%s571] sm:$0xff]
        %v2929 = vld [vmem:[%s571 + $0x8] sm:$0xff]
        %v2930 = vld [vmem:[%s571 + $0x10] sm:$0xff]
        %v2931 = vld [vmem:[%s571 + $0x18] sm:$0xff]
        %v2932 = vld [vmem:[%s571 + $0x20] sm:$0xff]
        %v2933 = vld [vmem:[%s571 + $0x28] sm:$0xff]
        %v2934 = vld [vmem:[%s571 + $0x30] sm:$0xff]
        %v2935 = vld [vmem:[%s571 + $0x38] sm:$0xff]
        %v2936 = vld [vmem:[%s571 + $0x40] sm:$0xff]
        %v2937 = vld [vmem:[%s571 + $0x48] sm:$0xff]
        %v2938 = vld [vmem:[%s571 + $0x50] sm:$0xff]
        %v2939 = vld [vmem:[%s571 + $0x58] sm:$0xff]
        %v2940 = vld [vmem:[%s571 + $0x60] sm:$0xff]
        %v2941 = vld [vmem:[%s571 + $0x68] sm:$0xff]
        %v2942 = vld [vmem:[%s571 + $0x70] sm:$0xff]
        %v2943 = vld [vmem:[%s571 + $0x78] sm:$0xff]
        %v2944 = vld [vmem:[%s571 + $0x80] sm:$0xff]
        %v2945 = vld [vmem:[%s571 + $0x88] sm:$0xff]
        %v2946 = vld [vmem:[%s571 + $0x90] sm:$0xff]
        %v2947 = vld [vmem:[%s571 + $0x98] sm:$0xff]
        %v2948 = vld [vmem:[%s571 + $0xa0] sm:$0xff]
        %v2949 = vld [vmem:[%s571 + $0xa8] sm:$0xff]
        %v2950 = vld [vmem:[%s571 + $0xb0] sm:$0xff]
        %v2951 = vld [vmem:[%s571 + $0xb8] sm:$0xff]
        %v2952 = vld [vmem:[%s571 + $0xc0] sm:$0xff]
        %v2953 = vld [vmem:[%s571 + $0xc8] sm:$0xff]
        %v2954 = vld [vmem:[%s571 + $0xd0] sm:$0xff]
        %v2955 = vld [vmem:[%s571 + $0xd8] sm:$0xff]
        %v2956 = vld [vmem:[%s571 + $0xe0] sm:$0xff]
        %v2957 = vld [vmem:[%s571 + $0xe8] sm:$0xff]
        %v2958 = vld [vmem:[%s571 + $0xf0] sm:$0xff]
        %v2959 = vld [vmem:[%s571 + $0xf8] sm:$0xff]
        %v2960 = vld [vmem:[%s571 + $0x100] sm:$0xff]
        %v2961 = vld [vmem:[%s571 + $0x108] sm:$0xff]
        %v2962 = vld [vmem:[%s571 + $0x110] sm:$0xff]
        %v2963 = vld [vmem:[%s571 + $0x118] sm:$0xff]
        %v2964 = vld [vmem:[%s571 + $0x120] sm:$0xff]
        %v2965 = vld [vmem:[%s571 + $0x128] sm:$0xff]
        %v2966 = vld [vmem:[%s571 + $0x130] sm:$0xff]
        %v2967 = vld [vmem:[%s571 + $0x138] sm:$0xff]
        %v2968 = vld [vmem:[%s571 + $0x140] sm:$0xff]
        %v2969 = vld [vmem:[%s571 + $0x148] sm:$0xff]
        %v2970 = vld [vmem:[%s571 + $0x150] sm:$0xff]
        %v2971 = vld [vmem:[%s571 + $0x158] sm:$0xff]
        %v2972 = vld [vmem:[%s571 + $0x160] sm:$0xff]
        %v2973 = vld [vmem:[%s571 + $0x168] sm:$0xff]
        %v2974 = vld [vmem:[%s571 + $0x170] sm:$0xff]
        %v2975 = vld [vmem:[%s571 + $0x178] sm:$0xff]
        %v2976 = vld [vmem:[%s571 + $0x180] sm:$0xff]
        %v2977 = vld [vmem:[%s571 + $0x188] sm:$0xff]
        %v2978 = vld [vmem:[%s571 + $0x190] sm:$0xff]
        %v2979 = vld [vmem:[%s571 + $0x198] sm:$0xff]
        %v2980 = vld [vmem:[%s571 + $0x1a0] sm:$0xff]
        %v2981 = vld [vmem:[%s571 + $0x1a8] sm:$0xff]
        %v2982 = vld [vmem:[%s571 + $0x1b0] sm:$0xff]
        %v2983 = vld [vmem:[%s571 + $0x1b8] sm:$0xff]
        %v2984 = vld [vmem:[%s571 + $0x1c0] sm:$0xff]
        %v2985 = vld [vmem:[%s571 + $0x1c8] sm:$0xff]
        %v2986 = vld [vmem:[%s571 + $0x1d0] sm:$0xff]
        %v2987 = vld [vmem:[%s571 + $0x1d8] sm:$0xff]
        %v2988 = vld [vmem:[%s571 + $0x1e0] sm:$0xff]
        %v2989 = vld [vmem:[%s571 + $0x1e8] sm:$0xff]
        %v2990 = vld [vmem:[%s571 + $0x1f0] sm:$0xff]
        %v2991 = vld [vmem:[%s571 + $0x1f8] sm:$0xff]
        %v2992 = vld [vmem:[%s648] sm:$0x3]
        %v2994 = vperm.slane %v2992, 0
        %v2995 = vperm.slane %v2992, 1
        %v3062 = vunpack.c.l.b16 %v2928
        %v3063 = vunpack.c.h.b16 %v2928
        %v3064 = vunpack.c.l.b16 %v2929
        %v3065 = vunpack.c.h.b16 %v2929
        %v3066 = vunpack.c.l.b16 %v2930
        %v3067 = vunpack.c.h.b16 %v2930
        %v3068 = vunpack.c.l.b16 %v2931
        %v3069 = vunpack.c.h.b16 %v2931
        %v3070 = vunpack.c.l.b16 %v2932
        %v3071 = vunpack.c.h.b16 %v2932
        %v3072 = vunpack.c.l.b16 %v2933
        %v3073 = vunpack.c.h.b16 %v2933
        %v3074 = vunpack.c.l.b16 %v2934
        %v3075 = vunpack.c.h.b16 %v2934
        %v3076 = vunpack.c.l.b16 %v2935
        %v3077 = vunpack.c.h.b16 %v2935
        %v3078 = vunpack.c.l.b16 %v2936
        %v3079 = vunpack.c.h.b16 %v2936
        %v3080 = vunpack.c.l.b16 %v2937
        %v3081 = vunpack.c.h.b16 %v2937
        %v3082 = vunpack.c.l.b16 %v2938
        %v3083 = vunpack.c.h.b16 %v2938
        %v3084 = vunpack.c.l.b16 %v2939
        %v3085 = vunpack.c.h.b16 %v2939
        %v3086 = vunpack.c.l.b16 %v2940
        %v3087 = vunpack.c.h.b16 %v2940
        %v3088 = vunpack.c.l.b16 %v2941
        %v3089 = vunpack.c.h.b16 %v2941
        %v3090 = vunpack.c.l.b16 %v2942
        %v3091 = vunpack.c.h.b16 %v2942
        %v3092 = vunpack.c.l.b16 %v2943
        %v3093 = vunpack.c.h.b16 %v2943
        %v3094 = vunpack.c.l.b16 %v2944
        %v3095 = vunpack.c.h.b16 %v2944
        %v3096 = vunpack.c.l.b16 %v2945
        %v3097 = vunpack.c.h.b16 %v2945
        %v3098 = vunpack.c.l.b16 %v2946
        %v3099 = vunpack.c.h.b16 %v2946
        %v3100 = vunpack.c.l.b16 %v2947
        %v3101 = vunpack.c.h.b16 %v2947
        %v3102 = vunpack.c.l.b16 %v2948
        %v3103 = vunpack.c.h.b16 %v2948
        %v3104 = vunpack.c.l.b16 %v2949
        %v3105 = vunpack.c.h.b16 %v2949
        %v3106 = vunpack.c.l.b16 %v2950
        %v3107 = vunpack.c.h.b16 %v2950
        %v3108 = vunpack.c.l.b16 %v2951
        %v3109 = vunpack.c.h.b16 %v2951
        %v3110 = vunpack.c.l.b16 %v2952
        %v3111 = vunpack.c.h.b16 %v2952
        %v3112 = vunpack.c.l.b16 %v2953
        %v3113 = vunpack.c.h.b16 %v2953
        %v3114 = vunpack.c.l.b16 %v2954
        %v3115 = vunpack.c.h.b16 %v2954
        %v3116 = vunpack.c.l.b16 %v2955
        %v3117 = vunpack.c.h.b16 %v2955
        %v3118 = vunpack.c.l.b16 %v2956
        %v3119 = vunpack.c.h.b16 %v2956
        %v3120 = vunpack.c.l.b16 %v2957
        %v3121 = vunpack.c.h.b16 %v2957
        %v3122 = vunpack.c.l.b16 %v2958
        %v3123 = vunpack.c.h.b16 %v2958
        %v3124 = vunpack.c.l.b16 %v2959
        %v3125 = vunpack.c.h.b16 %v2959
        %v3126 = vunpack.c.l.b16 %v2960
        %v3127 = vunpack.c.h.b16 %v2960
        %v3128 = vunpack.c.l.b16 %v2961
        %v3129 = vunpack.c.h.b16 %v2961
        %v3130 = vunpack.c.l.b16 %v2962
        %v3131 = vunpack.c.h.b16 %v2962
        %v3132 = vunpack.c.l.b16 %v2963
        %v3133 = vunpack.c.h.b16 %v2963
        %v3134 = vunpack.c.l.b16 %v2964
        %v3135 = vunpack.c.h.b16 %v2964
        %v3136 = vunpack.c.l.b16 %v2965
        %v3137 = vunpack.c.h.b16 %v2965
        %v3138 = vunpack.c.l.b16 %v2966
        %v3139 = vunpack.c.h.b16 %v2966
        %v3140 = vunpack.c.l.b16 %v2967
        %v3141 = vunpack.c.h.b16 %v2967
        %v3142 = vunpack.c.l.b16 %v2968
        %v3143 = vunpack.c.h.b16 %v2968
        %v3144 = vunpack.c.l.b16 %v2969
        %v3145 = vunpack.c.h.b16 %v2969
        %v3146 = vunpack.c.l.b16 %v2970
        %v3147 = vunpack.c.h.b16 %v2970
        %v3148 = vunpack.c.l.b16 %v2971
        %v3149 = vunpack.c.h.b16 %v2971
        %v3150 = vunpack.c.l.b16 %v2972
        %v3151 = vunpack.c.h.b16 %v2972
        %v3152 = vunpack.c.l.b16 %v2973
        %v3153 = vunpack.c.h.b16 %v2973
        %v3154 = vunpack.c.l.b16 %v2974
        %v3155 = vunpack.c.h.b16 %v2974
        %v3156 = vunpack.c.l.b16 %v2975
        %v3157 = vunpack.c.h.b16 %v2975
        %v3158 = vunpack.c.l.b16 %v2976
        %v3159 = vunpack.c.h.b16 %v2976
        %v3160 = vunpack.c.l.b16 %v2977
        %v3161 = vunpack.c.h.b16 %v2977
        %v3162 = vunpack.c.l.b16 %v2978
        %v3163 = vunpack.c.h.b16 %v2978
        %v3164 = vunpack.c.l.b16 %v2979
        %v3165 = vunpack.c.h.b16 %v2979
        %v3166 = vunpack.c.l.b16 %v2980
        %v3167 = vunpack.c.h.b16 %v2980
        %v3168 = vunpack.c.l.b16 %v2981
        %v3169 = vunpack.c.h.b16 %v2981
        %v3170 = vunpack.c.l.b16 %v2982
        %v3171 = vunpack.c.h.b16 %v2982
        %v3172 = vunpack.c.l.b16 %v2983
        %v3173 = vunpack.c.h.b16 %v2983
        %v3174 = vunpack.c.l.b16 %v2984
        %v3175 = vunpack.c.h.b16 %v2984
        %v3176 = vunpack.c.l.b16 %v2985
        %v3177 = vunpack.c.h.b16 %v2985
        %v3178 = vunpack.c.l.b16 %v2986
        %v3179 = vunpack.c.h.b16 %v2986
        %v3180 = vunpack.c.l.b16 %v2987
        %v3181 = vunpack.c.h.b16 %v2987
        %v3182 = vunpack.c.l.b16 %v2988
        %v3183 = vunpack.c.h.b16 %v2988
        %v3184 = vunpack.c.l.b16 %v2989
        %v3185 = vunpack.c.h.b16 %v2989
        %v3186 = vunpack.c.l.b16 %v2990
        %v3187 = vunpack.c.h.b16 %v2990
        %v3188 = vunpack.c.l.b16 %v2991
        %v3189 = vunpack.c.h.b16 %v2991
        %v3190 = vpack.c.b16 %v3064, %v3062
        %v3191 = vpack.c.b16 %v3065, %v3063
        %v3192 = vpack.c.b16 %v3068, %v3066
        %v3193 = vpack.c.b16 %v3069, %v3067
        %v3194 = vpack.c.b16 %v3072, %v3070
        %v3195 = vpack.c.b16 %v3073, %v3071
        %v3196 = vpack.c.b16 %v3076, %v3074
        %v3197 = vpack.c.b16 %v3077, %v3075
        %v3198 = vpack.c.b16 %v3080, %v3078
        %v3199 = vpack.c.b16 %v3081, %v3079
        %v3200 = vpack.c.b16 %v3084, %v3082
        %v3201 = vpack.c.b16 %v3085, %v3083
        %v3202 = vpack.c.b16 %v3088, %v3086
        %v3203 = vpack.c.b16 %v3089, %v3087
        %v3204 = vpack.c.b16 %v3092, %v3090
        %v3205 = vpack.c.b16 %v3093, %v3091
        %v3206 = vpack.c.b16 %v3096, %v3094
        %v3207 = vpack.c.b16 %v3097, %v3095
        %v3208 = vpack.c.b16 %v3100, %v3098
        %v3209 = vpack.c.b16 %v3101, %v3099
        %v3210 = vpack.c.b16 %v3104, %v3102
        %v3211 = vpack.c.b16 %v3105, %v3103
        %v3212 = vpack.c.b16 %v3108, %v3106
        %v3213 = vpack.c.b16 %v3109, %v3107
        %v3214 = vpack.c.b16 %v3112, %v3110
        %v3215 = vpack.c.b16 %v3113, %v3111
        %v3216 = vpack.c.b16 %v3116, %v3114
        %v3217 = vpack.c.b16 %v3117, %v3115
        %v3218 = vpack.c.b16 %v3120, %v3118
        %v3219 = vpack.c.b16 %v3121, %v3119
        %v3220 = vpack.c.b16 %v3124, %v3122
        %v3221 = vpack.c.b16 %v3125, %v3123
        %v3222 = vpack.c.b16 %v3128, %v3126
        %v3223 = vpack.c.b16 %v3129, %v3127
        %v3224 = vpack.c.b16 %v3132, %v3130
        %v3225 = vpack.c.b16 %v3133, %v3131
        %v3226 = vpack.c.b16 %v3136, %v3134
        %v3227 = vpack.c.b16 %v3137, %v3135
        %v3228 = vpack.c.b16 %v3140, %v3138
        %v3229 = vpack.c.b16 %v3141, %v3139
        %v3230 = vpack.c.b16 %v3144, %v3142
        %v3231 = vpack.c.b16 %v3145, %v3143
        %v3232 = vpack.c.b16 %v3148, %v3146
        %v3233 = vpack.c.b16 %v3149, %v3147
        %v3234 = vpack.c.b16 %v3152, %v3150
        %v3235 = vpack.c.b16 %v3153, %v3151
        %v3236 = vpack.c.b16 %v3156, %v3154
        %v3237 = vpack.c.b16 %v3157, %v3155
        %v3238 = vpack.c.b16 %v3160, %v3158
        %v3239 = vpack.c.b16 %v3161, %v3159
        %v3240 = vpack.c.b16 %v3164, %v3162
        %v3241 = vpack.c.b16 %v3165, %v3163
        %v3242 = vpack.c.b16 %v3168, %v3166
        %v3243 = vpack.c.b16 %v3169, %v3167
        %v3244 = vpack.c.b16 %v3172, %v3170
        %v3245 = vpack.c.b16 %v3173, %v3171
        %v3246 = vpack.c.b16 %v3176, %v3174
        %v3247 = vpack.c.b16 %v3177, %v3175
        %v3248 = vpack.c.b16 %v3180, %v3178
        %v3249 = vpack.c.b16 %v3181, %v3179
        %v3250 = vpack.c.b16 %v3184, %v3182
        %v3251 = vpack.c.b16 %v3185, %v3183
        %v3252 = vpack.c.b16 %v3188, %v3186
        %v3253 = vpack.c.b16 %v3189, %v3187
        %3318 = vmatpush.bf16.msra.mxu0 %v3204
        %3319 = vmatpush.bf16.msra.mxu0 %v3202
        %3320 = vmatpush.bf16.msra.mxu0 %v3200
        %3321 = vmatpush.bf16.msra.mxu0 %v3198
        %3322 = vmatpush.bf16.msra.mxu0 %v3196
        %3323 = vmatpush.bf16.msra.mxu0 %v3194
        %3324 = vmatpush.bf16.msra.mxu0 %v3192
        %3325 = vmatpush.bf16.msra.mxu0 %v3190
        %3326 = vmatmul.bf16.gmra.mxu0 %v2924
        %v3327 = vpop.f32.mrf.mxu0
        %v3328 = vadd.f32 %v2994, %v3327
        %v3329 = vpop.f32.mrf.mxu0
        %3330 = vdwg.mxu0
        %3331 = vmatpush.bf16.msra.mxu0 %v3220
        %3332 = vmatpush.bf16.msra.mxu0 %v3218
        %3333 = vmatpush.bf16.msra.mxu0 %v3216
        %3334 = vmatpush.bf16.msra.mxu0 %v3214
        %3335 = vmatpush.bf16.msra.mxu0 %v3212
        %3336 = vmatpush.bf16.msra.mxu0 %v3210
        %3337 = vmatpush.bf16.msra.mxu0 %v3208
        %3338 = vmatpush.bf16.msra.mxu0 %v3206
        %3339 = vmatmul.bf16.gmra.mxu0 %v2925
        %v3340 = vpop.f32.mrf.mxu0
        %v3341 = vadd.f32 %v3328, %v3340
        %v3342 = vpop.f32.mrf.mxu0
        %3343 = vdwg.mxu0
        %3344 = vmatpush.bf16.msra.mxu0 %v3236
        %3345 = vmatpush.bf16.msra.mxu0 %v3234
        %3346 = vmatpush.bf16.msra.mxu0 %v3232
        %3347 = vmatpush.bf16.msra.mxu0 %v3230
        %3348 = vmatpush.bf16.msra.mxu0 %v3228
        %3349 = vmatpush.bf16.msra.mxu0 %v3226
        %3350 = vmatpush.bf16.msra.mxu0 %v3224
        %3351 = vmatpush.bf16.msra.mxu0 %v3222
        %3352 = vmatmul.bf16.gmra.mxu0 %v2926
        %v3353 = vpop.f32.mrf.mxu0
        %v3354 = vadd.f32 %v3341, %v3353
        %v3355 = vpop.f32.mrf.mxu0
        %3356 = vdwg.mxu0
        %3357 = vmatpush.bf16.msra.mxu0 %v3252
        %3358 = vmatpush.bf16.msra.mxu0 %v3250
        %3359 = vmatpush.bf16.msra.mxu0 %v3248
        %3360 = vmatpush.bf16.msra.mxu0 %v3246
        %3361 = vmatpush.bf16.msra.mxu0 %v3244
        %3362 = vmatpush.bf16.msra.mxu0 %v3242
        %3363 = vmatpush.bf16.msra.mxu0 %v3240
        %3364 = vmatpush.bf16.msra.mxu0 %v3238
        %3365 = vmatmul.bf16.gmra.mxu0 %v2927
        %v3366 = vpop.f32.mrf.mxu0
        %v3367 = vadd.f32 %v3354, %v3366
        %v3368 = vpop.f32.mrf.mxu0
        %3369 = vdwg.mxu0
        %3370 = vmatpush.bf16.msra.mxu0 %v3205
        %3371 = vmatpush.bf16.msra.mxu0 %v3203
        %3372 = vmatpush.bf16.msra.mxu0 %v3201
        %3373 = vmatpush.bf16.msra.mxu0 %v3199
        %3374 = vmatpush.bf16.msra.mxu0 %v3197
        %3375 = vmatpush.bf16.msra.mxu0 %v3195
        %3376 = vmatpush.bf16.msra.mxu0 %v3193
        %3377 = vmatpush.bf16.msra.mxu0 %v3191
        %3378 = vmatmul.bf16.gmra.mxu0 %v2924
        %v3379 = vpop.f32.mrf.mxu0
        %v3380 = vadd.f32 %v2995, %v3379
        %v3381 = vpop.f32.mrf.mxu0
        %3382 = vdwg.mxu0
        %3383 = vmatpush.bf16.msra.mxu0 %v3221
        %3384 = vmatpush.bf16.msra.mxu0 %v3219
        %3385 = vmatpush.bf16.msra.mxu0 %v3217
        %3386 = vmatpush.bf16.msra.mxu0 %v3215
        %3387 = vmatpush.bf16.msra.mxu0 %v3213
        %3388 = vmatpush.bf16.msra.mxu0 %v3211
        %3389 = vmatpush.bf16.msra.mxu0 %v3209
        %3390 = vmatpush.bf16.msra.mxu0 %v3207
        %3391 = vmatmul.bf16.gmra.mxu0 %v2925
        %v3392 = vpop.f32.mrf.mxu0
        %v3393 = vadd.f32 %v3380, %v3392
        %v3394 = vpop.f32.mrf.mxu0
        %3395 = vdwg.mxu0
        %3396 = vmatpush.bf16.msra.mxu0 %v3237
        %3397 = vmatpush.bf16.msra.mxu0 %v3235
        %3398 = vmatpush.bf16.msra.mxu0 %v3233
        %3399 = vmatpush.bf16.msra.mxu0 %v3231
        %3400 = vmatpush.bf16.msra.mxu0 %v3229
        %3401 = vmatpush.bf16.msra.mxu0 %v3227
        %3402 = vmatpush.bf16.msra.mxu0 %v3225
        %3403 = vmatpush.bf16.msra.mxu0 %v3223
        %3404 = vmatmul.bf16.gmra.mxu0 %v2926
        %v3405 = vpop.f32.mrf.mxu0
        %v3406 = vadd.f32 %v3393, %v3405
        %v3407 = vpop.f32.mrf.mxu0
        %3408 = vdwg.mxu0
        %3409 = vmatpush.bf16.msra.mxu0 %v3253
        %3410 = vmatpush.bf16.msra.mxu0 %v3251
        %3411 = vmatpush.bf16.msra.mxu0 %v3249
        %3412 = vmatpush.bf16.msra.mxu0 %v3247
        %3413 = vmatpush.bf16.msra.mxu0 %v3245
        %3414 = vmatpush.bf16.msra.mxu0 %v3243
        %3415 = vmatpush.bf16.msra.mxu0 %v3241
        %3416 = vmatpush.bf16.msra.mxu0 %v3239
        %3417 = vmatmul.bf16.gmra.mxu0 %v2927
        %v3418 = vpop.f32.mrf.mxu0
        %v3419 = vadd.f32 %v3406, %v3418
        %v3420 = vpop.f32.mrf.mxu0
        %3421 = vdwg.mxu0
        %vm3422 = vcmp.gt.f32.partialorder %v3367, 0.0
        %vm3423 = vcmp.gt.f32.partialorder %v3419, 0.0
        %v3424 = vmul.f32 %v3367, 0.01
        %v3425 = vmul.f32 %v3419, 0.01
        %v3426 = vsel %vm3422, %v3367, %v3424
        %v3427 = vsel %vm3423, %v3419, %v3425
        %v3428 = vld [vmem:[%s652] sm:$0x3]
        %v3429 = vunpack.c.l.bf16 %v3428
        %v3431 = vperm.slane %v3429, 0
        %v3432 = vperm.slane %v3429, 2
        %v3435 = vperm.slane %v3431, 0
        %v3436 = vperm.slane %v3432, 0
        %v3437 = vmul.f32 %v3426, %v3435
        %v3438 = vmul.f32 %v3427, %v3436
        %vm3439 = vcmask 1041408
        %v3440 = vsel %vm3439, %v3437, 0.0
        %v3441 = vsel %vm3439, %v3438, 0.0
        %v3442 = vadd.f32 %v3440, %v3441
        %3443 = vadd.xlane.f32.xlu0 %v3442
        %v3444 = vpop.xlane.xlu0 %3443
        %v3445 = vld [vmem:[%s655] sm:$0x1]
        %v3447 = vperm.slane %v3445, 0
        %v3449 = vadd.f32 %v3444, %v3447
        // Predicated region
        $region97: #{tpu_custom_call.1} parent=63 // pred_check
          %p3450 = pneg %p657
        $region98: #{tpu_custom_call.1} parent=63 // pred_check_branch
          %3452 = sbr.rel (%p3450) target = $region100
        $region99: #{tpu_custom_call.1} parent=63 // pred_region
          %vm3453 = vcmask 1024
          %3454 = vst.msk [vmem:[#allocation13] sm:$0x3] %vm3453, %v3449
        $region100: #{tpu_custom_call.1} parent=63 // pred_fallthru
          _
        %p3455 = scmp.eq.s32.totalorder %s30, 1
        // Predicated region
        $region101: #{tpu_custom_call.1} parent=63 // pred_check
          %p3456 = pneg %p3455
        $region102: #{tpu_custom_call.1} parent=63 // pred_check_branch
          %3458 = sbr.rel (%p3456) target = $region104
        $region103: #{tpu_custom_call.1} parent=63 // pred_region
          %3460 = vrot.lane.b32.xlu0 %v3449, 1
          %v3461 = vpop.permute.xlu0 %3460
          %vm3463 = vcmask 9224
          %3464 = vst.msk [vmem:[#allocation13] sm:$0x3] %vm3463, %v3461
        $region104: #{tpu_custom_call.1} parent=63 // pred_fallthru
          _
        // Predicated region
        $region105: #{tpu_custom_call.1} parent=63 // pred_check
          %p3465 = pneg %p331
        $region106: #{tpu_custom_call.1} parent=63 // pred_check_branch
          %3467 = sbr.rel (%p3465) target = $region108
        $region107: #{tpu_custom_call.1} parent=63 // pred_region
          %3469 = vsyncadd [#allocation5], 0
          %s3470 = smul.addr %s29, 2
          %s3471 = scalar_lea.hbm %s11, %s3470
          %s3473 = sshll.u32 [#allocation13], 4
          %s3474 = int_to_ptr.vmem [resolvable:$true] %s3473
          %s3475 = sshll.u32 %s3471, 4
          %s3476 = int_to_ptr.hbm [resolvable:$true] %s3475
          %3478 = dma.vmem_to_hbm [thread:$0]  %s3474, 32, %s3476, [#allocation5]
        $region108: #{tpu_custom_call.1} parent=63 // pred_fallthru
          _
        // Predicated region
        $region109: #{tpu_custom_call.1} parent=63 // pred_check
          %p3479 = pneg %p331
        $region110: #{tpu_custom_call.1} parent=63 // pred_check_branch
          %3481 = sbr.rel (%p3479) target = $region112
        $region111: #{tpu_custom_call.1} parent=63 // pred_region
          %3483 = dma.done [#allocation5], 32
        $region112: #{tpu_custom_call.1} parent=63 // pred_fallthru
          _
      $region64: #{tpu_custom_call.1} parent=5 // pred_fallthru
        _
      %p3484 = scmp.le.s32.totalorder 2, %s20
      // Predicated region
      $region113: #{tpu_custom_call.1} parent=5 // pred_check
        %p3485 = pneg %p3484
      $region114: #{tpu_custom_call.1} parent=5 // pred_check_branch
        %3487 = sbr.rel (%p3485) target = $region116
      $region115: #{tpu_custom_call.1} parent=5 // pred_region
        %s3488 = ssub.s32 %s20, 2
      $region116: #{tpu_custom_call.1} parent=5 // pred_fallthru
        _
    $region6: #{tpu_custom_call.1} parent=1 // loop_footer
      %s24 = sadd.s32 1, %s20
    $region7: #{tpu_custom_call.1} parent=1 // loop_footer_branch
      %19 = sbr.rel target = $region3
    $region8: #{tpu_custom_call.1} parent=1 // loop_exit
      _
    %3489 = vsyncpa [#allocation4], 1
    %s3490 = scalar_lea.sflag [#allocation4], 1
    %3491 = vsyncpa %s3490, 1
    %3492 = vsyncpa [#allocation7], 1
    %3493 = vsyncpa [#allocation5], 1
    %s3494 = scalar_lea.sflag [#allocation5], 1
    %3495 = vsyncpa %s3494, 1

</llo_original>
